<compile_context>
chip_gen: v6e
topology: v6e:2x2x1
jax: 0.10.0
libtpu: 0.0.40
codegen_flags: <defaults>
</compile_context>

<pallas_src>
import functools

import jax
import jax.numpy as jnp
from jax.experimental import pallas as pl
from jax.experimental.pallas import tpu as pltpu

LN_EPS = 1e-5   # PyTorch nn.LayerNorm default eps
NEG = -1e32     # same sentinel the PyTorch code uses in masked_fill


# ----------------------------------------------------------------------------
# In-kernel helpers (all statistics in f32)
# ----------------------------------------------------------------------------
def _layer_norm(x, w, b):
    mean = jnp.mean(x, axis=-1, keepdims=True)
    var = jnp.mean((x - mean) ** 2, axis=-1, keepdims=True)
    return (x - mean) * jax.lax.rsqrt(var + LN_EPS) * w + b


def _make_mask(sq, sk, mode):
    """Reproduce the PyTorch masked_fill masks, generated in-kernel."""
    i = jax.lax.broadcasted_iota(jnp.int32, (sq, sk), 0)
    j = jax.lax.broadcasted_iota(jnp.int32, (sq, sk), 1)
    if mode == "enc":
        # triu(ones,1).T: strict-lower True -> 0.0, diag+upper -> -1e32
        return jnp.where(j < i, 0.0, NEG).astype(jnp.float32)
    # "dec": triu(ones,0).T: lower-incl-diag True -> +1.0 (sic), upper -> -1e32
    return jnp.where(j <= i, 1.0, NEG).astype(jnp.float32)


def _mha(q, k, v, wo_ref, bo_ref, n_heads, mask_mode):
    """Multi-head attention on a batch tile.
    q: (bt, sq, d) f32 with 1/sqrt(hd) already folded in; k, v: (bt, sk, d).
    Per-head scores/PV are batched over bt (einsum, no explicit transpose);
    heads are concatenated once and hit a single bf16 Wo matmul."""
    bt, sq, d = q.shape
    sk = k.shape[1]
    hd = d // n_heads
    mask = _make_mask(sq, sk, mask_mode) if mask_mode is not None else None

    qb = q.astype(jnp.bfloat16)
    kb = k.astype(jnp.bfloat16)
    vb = v.astype(jnp.bfloat16)

    heads = []
    for h in range(n_heads):                      # static unroll (n_heads small)
        lo = h * hd
        qh = qb[:, :, lo:lo + hd]
        kh = kb[:, :, lo:lo + hd]
        vh = vb[:, :, lo:lo + hd]
        s = jnp.einsum("bqd,bkd->bqk", qh, kh,
                       preferred_element_type=jnp.float32)
        if mask is not None:
            s = s + mask[None, :, :]
        s = s - jnp.max(s, axis=-1, keepdims=True)
        p = jnp.exp(s)
        p = p * pl.reciprocal(jnp.sum(p, axis=-1, keepdims=True), approx=True)
        heads.append(jnp.einsum("bqk,bkd->bqd", p.astype(jnp.bfloat16), vh,
                                preferred_element_type=jnp.float32))

    o = jnp.concatenate(heads, axis=-1)           # (bt, sq, d)
    o2 = o.reshape(bt * sq, d).astype(jnp.bfloat16)
    return jnp.dot(o2, wo_ref[...], preferred_element_type=jnp.float32) + bo_ref[...]


# ----------------------------------------------------------------------------
# Fused block kernels (one pallas_call per transformer block)
# ----------------------------------------------------------------------------
def encoder_block_kernel(y_ref,
                         sa_wqkv_ref, sa_bqkv_ref, sa_wo_ref, sa_bo_ref,
                         ln1w_ref, ln1b_ref,
                         w1_ref, b1_ref, w2_ref, b2_ref,
                         ln2w_ref, ln2b_ref,
                         out_ref, *, n_heads):
    """Post-norm TransformerEncoderLayer: LN(y + SA(y)) -> LN(. + FFN(.))."""
    bt, s, d = y_ref.shape
    hd = d // n_heads
    scale = 1.0 / float(hd) ** 0.5

    y = y_ref[...].astype(jnp.float32).reshape(bt * s, d)   # rows (b-major)

    # fused QKV projection: one bf16 (Bt*S, D) x (D, 3D) MXU op; scale into q
    qkv = jnp.dot(y.astype(jnp.bfloat16), sa_wqkv_ref[...],
                  preferred_element_type=jnp.float32) + sa_bqkv_ref[...]
    q = (qkv[:, :d] * scale).reshape(bt, s, d)
    k = qkv[:, d:2 * d].reshape(bt, s, d)
    v = qkv[:, 2 * d:].reshape(bt, s, d)
    attn = _mha(q, k, v, sa_wo_ref, sa_bo_ref, n_heads, "enc")   # (bt*s, d)
    y = _layer_norm(y + attn, ln1w_ref[...], ln1b_ref[...])

    h = jnp.dot(y.astype(jnp.bfloat16), w1_ref[...],
                preferred_element_type=jnp.float32) + b1_ref[...]
    h = jnp.maximum(h, 0.0)                       # ReLU (PyTorch default)
    f = jnp.dot(h.astype(jnp.bfloat16), w2_ref[...],
                preferred_element_type=jnp.float32) + b2_ref[...]
    y = _layer_norm(y + f, ln2w_ref[...], ln2b_ref[...])
    out_ref[...] = y.reshape(bt, s, d).astype(out_ref.dtype)


def decoder_block_kernel(x_ref, mem_ref,
                         sa_wqkv_ref, sa_bqkv_ref, sa_wo_ref, sa_bo_ref,
                         ln1w_ref, ln1b_ref,
                         ca_wq_ref, ca_bq_ref, ca_wkv_ref, ca_bkv_ref,
                         ca_wo_ref, ca_bo_ref,
                         ln2w_ref, ln2b_ref,
                         w1_ref, b1_ref, w2_ref, b2_ref,
                         ln3w_ref, ln3b_ref,
                         out_ref, *, n_heads):
    """Post-norm TransformerDecoderLayer:
       LN(x + SA(x, mask)) -> LN(. + CA(., mem)) -> LN(. + FFN(.))."""
    bt, sx, d = x_ref.shape
    sm = mem_ref.shape[1]
    hd = d // n_heads
    scale = 1.0 / float(hd) ** 0.5

    x = x_ref[...].astype(jnp.float32).reshape(bt * sx, d)
    m = mem_ref[...].astype(jnp.float32).reshape(bt * sm, d)

    # --- masked self-attention (fused QKV) ---
    qkv = jnp.dot(x.astype(jnp.bfloat16), sa_wqkv_ref[...],
                  preferred_element_type=jnp.float32) + sa_bqkv_ref[...]
    q = (qkv[:, :d] * scale).reshape(bt, sx, d)
    k = qkv[:, d:2 * d].reshape(bt, sx, d)
    v = qkv[:, 2 * d:].reshape(bt, sx, d)
    attn = _mha(q, k, v, sa_wo_ref, sa_bo_ref, n_heads, "dec")
    x = _layer_norm(x + attn, ln1w_ref[...], ln1b_ref[...])

    # --- cross-attention over memory (no mask; fused KV) ---
    q = ((jnp.dot(x.astype(jnp.bfloat16), ca_wq_ref[...],
                  preferred_element_type=jnp.float32) + ca_bq_ref[...]) * scale
         ).reshape(bt, sx, d)
    kv = jnp.dot(m.astype(jnp.bfloat16), ca_wkv_ref[...],
                 preferred_element_type=jnp.float32) + ca_bkv_ref[...]
    k = kv[:, :d].reshape(bt, sm, d)
    v = kv[:, d:].reshape(bt, sm, d)
    attn = _mha(q, k, v, ca_wo_ref, ca_bo_ref, n_heads, None)
    x = _layer_norm(x + attn, ln2w_ref[...], ln2b_ref[...])

    # --- FFN ---
    h = jnp.dot(x.astype(jnp.bfloat16), w1_ref[...],
                preferred_element_type=jnp.float32) + b1_ref[...]
    h = jnp.maximum(h, 0.0)
    f = jnp.dot(h.astype(jnp.bfloat16), w2_ref[...],
                preferred_element_type=jnp.float32) + b2_ref[...]
    x = _layer_norm(x + f, ln3w_ref[...], ln3b_ref[...])
    out_ref[...] = x.reshape(bt, sx, d).astype(out_ref.dtype)


# ----------------------------------------------------------------------------
# pallas_call wrappers
# ----------------------------------------------------------------------------
@functools.lru_cache(maxsize=1)
def _vmem_limit_bytes():
    """Generation-aware scoped-VMEM limit: ~80% of physical, capped at 100 MiB."""
    try:
        cap = pltpu.get_tpu_info().vmem_capacity_bytes
        return max(32 * 1024 * 1024, min(int(cap * 0.8), 100 * 1024 * 1024))
    except Exception:
        return None


def _compiler_params():
    kwargs = dict(dimension_semantics=("parallel",))
    limit = _vmem_limit_bytes()
    if limit is not None:
        kwargs["vmem_limit_bytes"] = limit
    return pltpu.CompilerParams(**kwargs)


def _pick_bt(B):
    """Largest batch-tile that divides B while keeping >= 2 grid steps
    whenever B >= 2 (so v7x's 2nd TensorCore gets work)."""
    if B <= 1:
        return max(B, 1)
    for bt in range(B // 2, 0, -1):
        if B % bt == 0:
            return bt
    return 1


# whole (small) parameter tensors resident in VMEM, single-buffered
_WSPEC = pl.BlockSpec(memory_space=pltpu.MemorySpace.VMEM)


def encoder_block(y, p, n_heads, bt):
    B, S, D = y.shape
    kernel = functools.partial(encoder_block_kernel, n_heads=n_heads)
    act_spec = pl.BlockSpec((bt, S, D), lambda b: (b, 0, 0))
    return pl.pallas_call(
        kernel,
        out_shape=jax.ShapeDtypeStruct((B, S, D), y.dtype),
        grid=(B // bt,),
        in_specs=[act_spec] + [_WSPEC] * 12,
        out_specs=pl.BlockSpec((bt, S, D), lambda b: (b, 0, 0)),
        compiler_params=_compiler_params(),
    )(y,
      p["sa_wqkv"], p["sa_bqkv"], p["sa_wo"], p["sa_bo"],
      p["ln1_w"], p["ln1_b"],
      p["ffn_w1"], p["ffn_b1"], p["ffn_w2"], p["ffn_b2"],
      p["ln2_w"], p["ln2_b"])


def decoder_block(x, mem, p, n_heads, bt):
    B, Sx, D = x.shape
    Sm = mem.shape[1]
    kernel = functools.partial(decoder_block_kernel, n_heads=n_heads)
    x_spec = pl.BlockSpec((bt, Sx, D), lambda b: (b, 0, 0))
    m_spec = pl.BlockSpec((bt, Sm, D), lambda b: (b, 0, 0))
    return pl.pallas_call(
        kernel,
        out_shape=jax.ShapeDtypeStruct((B, Sx, D), x.dtype),
        grid=(B // bt,),
        in_specs=[x_spec, m_spec] + [_WSPEC] * 20,
        out_specs=pl.BlockSpec((bt, Sx, D), lambda b: (b, 0, 0)),
        compiler_params=_compiler_params(),
    )(x, mem,
      p["sa_wqkv"], p["sa_bqkv"], p["sa_wo"], p["sa_bo"],
      p["ln1_w"], p["ln1_b"],
      p["ca_wq"], p["ca_bq"], p["ca_wkv"], p["ca_bkv"], p["ca_wo"], p["ca_bo"],
      p["ln2_w"], p["ln2_b"],
      p["ffn_w1"], p["ffn_b1"], p["ffn_w2"], p["ffn_b2"],
      p["ln3_w"], p["ln3_b"])


# ----------------------------------------------------------------------------
# Parameter init (deterministic, synthetic — not a checkpoint load).
# Linear weights stored pre-transposed (kernels compute x @ W) in bf16, with
# QKV (and cross-attn KV) pre-concatenated for a single fused matmul.
# Biases / LayerNorm params stay f32 (added / applied after f32 accumulation).
# ----------------------------------------------------------------------------
def _w(key, shape, scale=0.08):
    return (jax.random.uniform(key, shape, jnp.float32, -1.0, 1.0)
            * scale).astype(jnp.bfloat16)


def _b(key, shape, scale=0.08):
    return jax.random.uniform(key, shape, jnp.float32, -1.0, 1.0) * scale


def _ln(d):
    return jnp.ones((1, d), jnp.float32), jnp.zeros((1, d), jnp.float32)


def _encoder_block_params(key, d, f):
    ks = jax.random.split(key, 8)
    ln1w, ln1b = _ln(d)
    ln2w, ln2b = _ln(d)
    return dict(
        sa_wqkv=_w(ks[0], (d, 3 * d)), sa_bqkv=_b(ks[1], (1, 3 * d)),
        sa_wo=_w(ks[2], (d, d)), sa_bo=_b(ks[3], (1, d)),
        ln1_w=ln1w, ln1_b=ln1b,
        ffn_w1=_w(ks[4], (d, f)), ffn_b1=_b(ks[5], (1, f)),
        ffn_w2=_w(ks[6], (f, d)), ffn_b2=_b(ks[7], (1, d)),
        ln2_w=ln2w, ln2_b=ln2b)


def _decoder_block_params(key, d, f):
    ks = jax.random.split(key, 14)
    ln1w, ln1b = _ln(d)
    ln2w, ln2b = _ln(d)
    ln3w, ln3b = _ln(d)
    return dict(
        sa_wqkv=_w(ks[0], (d, 3 * d)), sa_bqkv=_b(ks[1], (1, 3 * d)),
        sa_wo=_w(ks[2], (d, d)), sa_bo=_b(ks[3], (1, d)),
        ln1_w=ln1w, ln1_b=ln1b,
        ca_wq=_w(ks[4], (d, d)), ca_bq=_b(ks[5], (1, d)),
        ca_wkv=_w(ks[6], (d, 2 * d)), ca_bkv=_b(ks[7], (1, 2 * d)),
        ca_wo=_w(ks[8], (d, d)), ca_bo=_b(ks[9], (1, d)),
        ln2_w=ln2w, ln2_b=ln2b,
        ffn_w1=_w(ks[10], (d, f)), ffn_b1=_b(ks[11], (1, f)),
        ffn_w2=_w(ks[12], (f, d)), ffn_b2=_b(ks[13], (1, d)),
        ln3_w=ln3w, ln3_b=ln3b)


def init_params(key, n_blocks, d_model, d_ff):
    keys = jax.random.split(key, 3 * n_blocks)
    return dict(
        blocks_1=[_encoder_block_params(keys[i], d_model, d_ff)
                  for i in range(n_blocks)],
        blocks_2=[_decoder_block_params(keys[n_blocks + i], d_model, d_ff)
                  for i in range(2 * n_blocks)])


# ----------------------------------------------------------------------------
# Full forward (mirrors TransformerBlock.forward)
# ----------------------------------------------------------------------------
def transformer_block_forward(q_embed_data, qa_embed_data, params, n_heads):
    # inputs: (seq, batch, d_model) — PyTorch batch_first=False convention
    x = jnp.transpose(q_embed_data, (1, 0, 2))    # (B, Sx, D)
    y = jnp.transpose(qa_embed_data, (1, 0, 2))   # (B, Sy, D)
    bt = _pick_bt(x.shape[0])

    # encoder stack over y (post-norm TransformerEncoderLayer, dropout=identity)
    for p in params["blocks_1"]:
        y = encoder_block(y, p, n_heads, bt)

    # decoder stack over x; memory alternates: current x, then y, then x, ...
    flg = True
    for p in params["blocks_2"]:
        mem = x if flg else y                     # memory = block INPUT x (or y)
        x = decoder_block(x, mem, p, n_heads, bt)
        flg = not flg

    return jnp.transpose(x, (1, 0, 2))            # back to (seq, batch, d_model)


# ----------------------------------------------------------------------------
if __name__ == "__main__":
    n_blocks, d_model, d_ff, n_heads, dropout = 1, 32, 64, 4, 0.0
    S, B = 8, 2

    root = jax.random.PRNGKey(0)
    k_params, k_q, k_qa = jax.random.split(root, 3)

    params = init_params(k_params, n_blocks, d_model, d_ff)
    q_embed_data = jax.random.normal(k_q, (S, B, d_model), jnp.float32)
    qa_embed_data = jax.random.normal(k_qa, (S, B, d_model), jnp.float32)

    fwd = jax.jit(transformer_block_forward, static_argnames=("n_heads",))
    out = fwd(q_embed_data, qa_embed_data, params, n_heads=n_heads)
    out = jax.block_until_ready(out)

    assert out.shape == (S, B, d_model), out.shape
    assert bool(jnp.all(jnp.isfinite(out)))
    print("KERNEL_OK")
</pallas_src>

<mosaic_0001>
module attributes {stable_mosaic.version = 11 : i64} {
  func.func @encoder_block_kernel(%arg0: i32, %arg1: memref<1x8x32xf32, #tpu.memory_space<vmem>>, %arg2: memref<32x96xbf16, #tpu.memory_space<vmem>>, %arg3: memref<1x96xf32, #tpu.memory_space<vmem>>, %arg4: memref<32x32xbf16, #tpu.memory_space<vmem>>, %arg5: memref<1x32xf32, #tpu.memory_space<vmem>>, %arg6: memref<1x32xf32, #tpu.memory_space<vmem>>, %arg7: memref<1x32xf32, #tpu.memory_space<vmem>>, %arg8: memref<32x64xbf16, #tpu.memory_space<vmem>>, %arg9: memref<1x64xf32, #tpu.memory_space<vmem>>, %arg10: memref<64x32xbf16, #tpu.memory_space<vmem>>, %arg11: memref<1x32xf32, #tpu.memory_space<vmem>>, %arg12: memref<1x32xf32, #tpu.memory_space<vmem>>, %arg13: memref<1x32xf32, #tpu.memory_space<vmem>>, %arg14: memref<1x8x32xf32, #tpu.memory_space<vmem>>) attributes {dimension_semantics = [#tpu.dimension_semantics<parallel>], iteration_bounds = array<i64: 2>, scalar_prefetch = 0 : i64, scratch_operands = 0 : i64, tpu.core_type = #tpu.core_type<tc>, window_params = [{transform_indices = @transform_0, window_bounds = array<i64: 1, 8, 32>}, {pipeline_mode = #tpu.pipeline_mode<synchronous>, transform_indices = @transform_1, window_bounds = array<i64: 32, 96>}, {pipeline_mode = #tpu.pipeline_mode<synchronous>, transform_indices = @transform_2, window_bounds = array<i64: 1, 96>}, {pipeline_mode = #tpu.pipeline_mode<synchronous>, transform_indices = @transform_3, window_bounds = array<i64: 32, 32>}, {pipeline_mode = #tpu.pipeline_mode<synchronous>, transform_indices = @transform_4, window_bounds = array<i64: 1, 32>}, {pipeline_mode = #tpu.pipeline_mode<synchronous>, transform_indices = @transform_5, window_bounds = array<i64: 1, 32>}, {pipeline_mode = #tpu.pipeline_mode<synchronous>, transform_indices = @transform_6, window_bounds = array<i64: 1, 32>}, {pipeline_mode = #tpu.pipeline_mode<synchronous>, transform_indices = @transform_7, window_bounds = array<i64: 32, 64>}, {pipeline_mode = #tpu.pipeline_mode<synchronous>, transform_indices = @transform_8, window_bounds = array<i64: 1, 64>}, {pipeline_mode = #tpu.pipeline_mode<synchronous>, transform_indices = @transform_9, window_bounds = array<i64: 64, 32>}, {pipeline_mode = #tpu.pipeline_mode<synchronous>, transform_indices = @transform_10, window_bounds = array<i64: 1, 32>}, {pipeline_mode = #tpu.pipeline_mode<synchronous>, transform_indices = @transform_11, window_bounds = array<i64: 1, 32>}, {pipeline_mode = #tpu.pipeline_mode<synchronous>, transform_indices = @transform_12, window_bounds = array<i64: 1, 32>}, {transform_indices = @transform_13, window_bounds = array<i64: 1, 8, 32>}]} {
    %c0 = arith.constant 0 : index
    %c0_0 = arith.constant 0 : index
    %c0_1 = arith.constant 0 : index
    %0 = vector.load %arg1[%c0, %c0_0, %c0_1] : memref<1x8x32xf32, #tpu.memory_space<vmem>>, vector<1x8x32xf32>
    %1 = vector.shape_cast %0 : vector<1x8x32xf32> to vector<8x32xf32>
    %2 = arith.truncf %1 : vector<8x32xf32> to vector<8x32xbf16>
    %c0_2 = arith.constant 0 : index
    %c0_3 = arith.constant 0 : index
    %3 = vector.load %arg2[%c0_2, %c0_3] : memref<32x96xbf16, #tpu.memory_space<vmem>>, vector<32x96xbf16>
    %cst = arith.constant dense<0.000000e+00> : vector<8x96xf32>
    %4 = tpu.matmul %2, %3, %cst {dimension_numbers = #tpu.dot_dimension_numbers<[1], [0], [0], [1], [0, 0, 1, 1], [], []>} : vector<8x32xbf16>, vector<32x96xbf16>, vector<8x96xf32> -> vector<8x96xf32>
    %c0_4 = arith.constant 0 : index
    %c0_5 = arith.constant 0 : index
    %5 = vector.load %arg3[%c0_4, %c0_5] : memref<1x96xf32, #tpu.memory_space<vmem>>, vector<1x96xf32>
    %6 = vector.broadcast %5 : vector<1x96xf32> to vector<8x96xf32>
    %7 = arith.addf %4, %6 : vector<8x96xf32>
    %8 = vector.extract_strided_slice %7 {offsets = [0, 0], sizes = [8, 32], strides = [1, 1]} : vector<8x96xf32> to vector<8x32xf32>
    %cst_6 = arith.constant 0.353553385 : f32
    %9 = vector.broadcast %cst_6 : f32 to vector<8x32xf32>
    %10 = arith.mulf %8, %9 : vector<8x32xf32>
    %11 = vector.shape_cast %10 : vector<8x32xf32> to vector<1x8x32xf32>
    %12 = vector.extract_strided_slice %7 {offsets = [0, 32], sizes = [8, 32], strides = [1, 1]} : vector<8x96xf32> to vector<8x32xf32>
    %13 = vector.shape_cast %12 : vector<8x32xf32> to vector<1x8x32xf32>
    %14 = vector.extract_strided_slice %7 {offsets = [0, 64], sizes = [8, 32], strides = [1, 1]} : vector<8x96xf32> to vector<8x32xf32>
    %15 = vector.shape_cast %14 : vector<8x32xf32> to vector<1x8x32xf32>
    %16 = tpu.iota {dimensions = array<i32: 0>} : vector<8x8xi32>
    %17 = tpu.iota {dimensions = array<i32: 1>} : vector<8x8xi32>
    %18 = arith.cmpi slt, %17, %16 : vector<8x8xi32>
    %cst_7 = arith.constant 0.000000e+00 : f32
    %cst_8 = arith.constant -1.000000e+32 : f32
    %19 = vector.broadcast %cst_7 : f32 to vector<8x8xf32>
    %20 = vector.broadcast %cst_8 : f32 to vector<8x8xf32>
    %21 = arith.select %18, %19, %20 : vector<8x8xi1>, vector<8x8xf32>
    %22 = arith.truncf %11 : vector<1x8x32xf32> to vector<1x8x32xbf16>
    %23 = arith.truncf %13 : vector<1x8x32xf32> to vector<1x8x32xbf16>
    %24 = arith.truncf %15 : vector<1x8x32xf32> to vector<1x8x32xbf16>
    %25 = vector.extract_strided_slice %22 {offsets = [0, 0, 0], sizes = [1, 8, 8], strides = [1, 1, 1]} : vector<1x8x32xbf16> to vector<1x8x8xbf16>
    %26 = vector.extract_strided_slice %23 {offsets = [0, 0, 0], sizes = [1, 8, 8], strides = [1, 1, 1]} : vector<1x8x32xbf16> to vector<1x8x8xbf16>
    %27 = vector.extract_strided_slice %24 {offsets = [0, 0, 0], sizes = [1, 8, 8], strides = [1, 1, 1]} : vector<1x8x32xbf16> to vector<1x8x8xbf16>
    "tpu.trace_start"() <{level = 10 : i32, message = "bqd,bkd->bqk"}> : () -> ()
    %cst_9 = arith.constant dense<0.000000e+00> : vector<1x8x8xf32>
    %28 = tpu.matmul %25, %26, %cst_9 {dimension_numbers = #tpu.dot_dimension_numbers<[2], [2], [1], [1], [0, 0, 0, 1, 1, 1], [0], [0]>} : vector<1x8x8xbf16>, vector<1x8x8xbf16>, vector<1x8x8xf32> -> vector<1x8x8xf32>
    "tpu.trace_stop"() : () -> ()
    %29 = vector.shape_cast %21 : vector<8x8xf32> to vector<1x8x8xf32>
    %30 = arith.addf %28, %29 : vector<1x8x8xf32>
    %cst_10 = arith.constant dense<0xFF800000> : vector<1x8xf32>
    %31 = vector.multi_reduction <maximumf>, %30, %cst_10 [2] : vector<1x8x8xf32> to vector<1x8xf32>
    %32 = vector.shape_cast %31 : vector<1x8xf32> to vector<1x8x1xf32>
    %33 = vector.broadcast %32 : vector<1x8x1xf32> to vector<1x8x8xf32>
    %34 = arith.subf %30, %33 : vector<1x8x8xf32>
    %35 = math.exp %34 : vector<1x8x8xf32>
    %cst_11 = arith.constant dense<0.000000e+00> : vector<1x8xf32>
    %36 = vector.multi_reduction <add>, %35, %cst_11 [2] : vector<1x8x8xf32> to vector<1x8xf32>
    %37 = vector.shape_cast %36 : vector<1x8xf32> to vector<1x8x1xf32>
    %38 = tpu.reciprocal %37 {approx = true} : vector<1x8x1xf32> -> vector<1x8x1xf32>
    %39 = vector.broadcast %38 : vector<1x8x1xf32> to vector<1x8x8xf32>
    %40 = arith.mulf %35, %39 : vector<1x8x8xf32>
    %41 = arith.truncf %40 : vector<1x8x8xf32> to vector<1x8x8xbf16>
    "tpu.trace_start"() <{level = 10 : i32, message = "bqk,bkd->bqd"}> : () -> ()
    %cst_12 = arith.constant dense<0.000000e+00> : vector<1x8x8xf32>
    %42 = tpu.matmul %41, %27, %cst_12 {dimension_numbers = #tpu.dot_dimension_numbers<[2], [1], [1], [2], [0, 0, 0, 1, 1, 2], [0], [0]>} : vector<1x8x8xbf16>, vector<1x8x8xbf16>, vector<1x8x8xf32> -> vector<1x8x8xf32>
    "tpu.trace_stop"() : () -> ()
    %43 = vector.extract_strided_slice %22 {offsets = [0, 0, 8], sizes = [1, 8, 8], strides = [1, 1, 1]} : vector<1x8x32xbf16> to vector<1x8x8xbf16>
    %44 = vector.extract_strided_slice %23 {offsets = [0, 0, 8], sizes = [1, 8, 8], strides = [1, 1, 1]} : vector<1x8x32xbf16> to vector<1x8x8xbf16>
    %45 = vector.extract_strided_slice %24 {offsets = [0, 0, 8], sizes = [1, 8, 8], strides = [1, 1, 1]} : vector<1x8x32xbf16> to vector<1x8x8xbf16>
    "tpu.trace_start"() <{level = 10 : i32, message = "bqd,bkd->bqk"}> : () -> ()
    %cst_13 = arith.constant dense<0.000000e+00> : vector<1x8x8xf32>
    %46 = tpu.matmul %43, %44, %cst_13 {dimension_numbers = #tpu.dot_dimension_numbers<[2], [2], [1], [1], [0, 0, 0, 1, 1, 1], [0], [0]>} : vector<1x8x8xbf16>, vector<1x8x8xbf16>, vector<1x8x8xf32> -> vector<1x8x8xf32>
    "tpu.trace_stop"() : () -> ()
    %47 = vector.shape_cast %21 : vector<8x8xf32> to vector<1x8x8xf32>
    %48 = arith.addf %46, %47 : vector<1x8x8xf32>
    %cst_14 = arith.constant dense<0xFF800000> : vector<1x8xf32>
    %49 = vector.multi_reduction <maximumf>, %48, %cst_14 [2] : vector<1x8x8xf32> to vector<1x8xf32>
    %50 = vector.shape_cast %49 : vector<1x8xf32> to vector<1x8x1xf32>
    %51 = vector.broadcast %50 : vector<1x8x1xf32> to vector<1x8x8xf32>
    %52 = arith.subf %48, %51 : vector<1x8x8xf32>
    %53 = math.exp %52 : vector<1x8x8xf32>
    %cst_15 = arith.constant dense<0.000000e+00> : vector<1x8xf32>
    %54 = vector.multi_reduction <add>, %53, %cst_15 [2] : vector<1x8x8xf32> to vector<1x8xf32>
    %55 = vector.shape_cast %54 : vector<1x8xf32> to vector<1x8x1xf32>
    %56 = tpu.reciprocal %55 {approx = true} : vector<1x8x1xf32> -> vector<1x8x1xf32>
    %57 = vector.broadcast %56 : vector<1x8x1xf32> to vector<1x8x8xf32>
    %58 = arith.mulf %53, %57 : vector<1x8x8xf32>
    %59 = arith.truncf %58 : vector<1x8x8xf32> to vector<1x8x8xbf16>
    "tpu.trace_start"() <{level = 10 : i32, message = "bqk,bkd->bqd"}> : () -> ()
    %cst_16 = arith.constant dense<0.000000e+00> : vector<1x8x8xf32>
    %60 = tpu.matmul %59, %45, %cst_16 {dimension_numbers = #tpu.dot_dimension_numbers<[2], [1], [1], [2], [0, 0, 0, 1, 1, 2], [0], [0]>} : vector<1x8x8xbf16>, vector<1x8x8xbf16>, vector<1x8x8xf32> -> vector<1x8x8xf32>
    "tpu.trace_stop"() : () -> ()
    %61 = vector.extract_strided_slice %22 {offsets = [0, 0, 16], sizes = [1, 8, 8], strides = [1, 1, 1]} : vector<1x8x32xbf16> to vector<1x8x8xbf16>
    %62 = vector.extract_strided_slice %23 {offsets = [0, 0, 16], sizes = [1, 8, 8], strides = [1, 1, 1]} : vector<1x8x32xbf16> to vector<1x8x8xbf16>
    %63 = vector.extract_strided_slice %24 {offsets = [0, 0, 16], sizes = [1, 8, 8], strides = [1, 1, 1]} : vector<1x8x32xbf16> to vector<1x8x8xbf16>
    "tpu.trace_start"() <{level = 10 : i32, message = "bqd,bkd->bqk"}> : () -> ()
    %cst_17 = arith.constant dense<0.000000e+00> : vector<1x8x8xf32>
    %64 = tpu.matmul %61, %62, %cst_17 {dimension_numbers = #tpu.dot_dimension_numbers<[2], [2], [1], [1], [0, 0, 0, 1, 1, 1], [0], [0]>} : vector<1x8x8xbf16>, vector<1x8x8xbf16>, vector<1x8x8xf32> -> vector<1x8x8xf32>
    "tpu.trace_stop"() : () -> ()
    %65 = vector.shape_cast %21 : vector<8x8xf32> to vector<1x8x8xf32>
    %66 = arith.addf %64, %65 : vector<1x8x8xf32>
    %cst_18 = arith.constant dense<0xFF800000> : vector<1x8xf32>
    %67 = vector.multi_reduction <maximumf>, %66, %cst_18 [2] : vector<1x8x8xf32> to vector<1x8xf32>
    %68 = vector.shape_cast %67 : vector<1x8xf32> to vector<1x8x1xf32>
    %69 = vector.broadcast %68 : vector<1x8x1xf32> to vector<1x8x8xf32>
    %70 = arith.subf %66, %69 : vector<1x8x8xf32>
    %71 = math.exp %70 : vector<1x8x8xf32>
    %cst_19 = arith.constant dense<0.000000e+00> : vector<1x8xf32>
    %72 = vector.multi_reduction <add>, %71, %cst_19 [2] : vector<1x8x8xf32> to vector<1x8xf32>
    %73 = vector.shape_cast %72 : vector<1x8xf32> to vector<1x8x1xf32>
    %74 = tpu.reciprocal %73 {approx = true} : vector<1x8x1xf32> -> vector<1x8x1xf32>
    %75 = vector.broadcast %74 : vector<1x8x1xf32> to vector<1x8x8xf32>
    %76 = arith.mulf %71, %75 : vector<1x8x8xf32>
    %77 = arith.truncf %76 : vector<1x8x8xf32> to vector<1x8x8xbf16>
    "tpu.trace_start"() <{level = 10 : i32, message = "bqk,bkd->bqd"}> : () -> ()
    %cst_20 = arith.constant dense<0.000000e+00> : vector<1x8x8xf32>
    %78 = tpu.matmul %77, %63, %cst_20 {dimension_numbers = #tpu.dot_dimension_numbers<[2], [1], [1], [2], [0, 0, 0, 1, 1, 2], [0], [0]>} : vector<1x8x8xbf16>, vector<1x8x8xbf16>, vector<1x8x8xf32> -> vector<1x8x8xf32>
    "tpu.trace_stop"() : () -> ()
    %79 = vector.extract_strided_slice %22 {offsets = [0, 0, 24], sizes = [1, 8, 8], strides = [1, 1, 1]} : vector<1x8x32xbf16> to vector<1x8x8xbf16>
    %80 = vector.extract_strided_slice %23 {offsets = [0, 0, 24], sizes = [1, 8, 8], strides = [1, 1, 1]} : vector<1x8x32xbf16> to vector<1x8x8xbf16>
    %81 = vector.extract_strided_slice %24 {offsets = [0, 0, 24], sizes = [1, 8, 8], strides = [1, 1, 1]} : vector<1x8x32xbf16> to vector<1x8x8xbf16>
    "tpu.trace_start"() <{level = 10 : i32, message = "bqd,bkd->bqk"}> : () -> ()
    %cst_21 = arith.constant dense<0.000000e+00> : vector<1x8x8xf32>
    %82 = tpu.matmul %79, %80, %cst_21 {dimension_numbers = #tpu.dot_dimension_numbers<[2], [2], [1], [1], [0, 0, 0, 1, 1, 1], [0], [0]>} : vector<1x8x8xbf16>, vector<1x8x8xbf16>, vector<1x8x8xf32> -> vector<1x8x8xf32>
    "tpu.trace_stop"() : () -> ()
    %83 = vector.shape_cast %21 : vector<8x8xf32> to vector<1x8x8xf32>
    %84 = arith.addf %82, %83 : vector<1x8x8xf32>
    %cst_22 = arith.constant dense<0xFF800000> : vector<1x8xf32>
    %85 = vector.multi_reduction <maximumf>, %84, %cst_22 [2] : vector<1x8x8xf32> to vector<1x8xf32>
    %86 = vector.shape_cast %85 : vector<1x8xf32> to vector<1x8x1xf32>
    %87 = vector.broadcast %86 : vector<1x8x1xf32> to vector<1x8x8xf32>
    %88 = arith.subf %84, %87 : vector<1x8x8xf32>
    %89 = math.exp %88 : vector<1x8x8xf32>
    %cst_23 = arith.constant dense<0.000000e+00> : vector<1x8xf32>
    %90 = vector.multi_reduction <add>, %89, %cst_23 [2] : vector<1x8x8xf32> to vector<1x8xf32>
    %91 = vector.shape_cast %90 : vector<1x8xf32> to vector<1x8x1xf32>
    %92 = tpu.reciprocal %91 {approx = true} : vector<1x8x1xf32> -> vector<1x8x1xf32>
    %93 = vector.broadcast %92 : vector<1x8x1xf32> to vector<1x8x8xf32>
    %94 = arith.mulf %89, %93 : vector<1x8x8xf32>
    %95 = arith.truncf %94 : vector<1x8x8xf32> to vector<1x8x8xbf16>
    "tpu.trace_start"() <{level = 10 : i32, message = "bqk,bkd->bqd"}> : () -> ()
    %cst_24 = arith.constant dense<0.000000e+00> : vector<1x8x8xf32>
    %96 = tpu.matmul %95, %81, %cst_24 {dimension_numbers = #tpu.dot_dimension_numbers<[2], [1], [1], [2], [0, 0, 0, 1, 1, 2], [0], [0]>} : vector<1x8x8xbf16>, vector<1x8x8xbf16>, vector<1x8x8xf32> -> vector<1x8x8xf32>
    "tpu.trace_stop"() : () -> ()
    %97 = tpu.concatenate %42, %60, %78, %96 in 2 : vector<1x8x8xf32>, vector<1x8x8xf32>, vector<1x8x8xf32>, vector<1x8x8xf32> -> vector<1x8x32xf32>
    %98 = vector.shape_cast %97 : vector<1x8x32xf32> to vector<8x32xf32>
    %99 = arith.truncf %98 : vector<8x32xf32> to vector<8x32xbf16>
    %c0_25 = arith.constant 0 : index
    %c0_26 = arith.constant 0 : index
    %100 = vector.load %arg4[%c0_25, %c0_26] : memref<32x32xbf16, #tpu.memory_space<vmem>>, vector<32x32xbf16>
    %cst_27 = arith.constant dense<0.000000e+00> : vector<8x32xf32>
    %101 = tpu.matmul %99, %100, %cst_27 {dimension_numbers = #tpu.dot_dimension_numbers<[1], [0], [0], [1], [0, 0, 1, 1], [], []>} : vector<8x32xbf16>, vector<32x32xbf16>, vector<8x32xf32> -> vector<8x32xf32>
    %c0_28 = arith.constant 0 : index
    %c0_29 = arith.constant 0 : index
    %102 = vector.load %arg5[%c0_28, %c0_29] : memref<1x32xf32, #tpu.memory_space<vmem>>, vector<1x32xf32>
    %103 = vector.broadcast %102 : vector<1x32xf32> to vector<8x32xf32>
    %104 = arith.addf %101, %103 : vector<8x32xf32>
    %105 = arith.addf %1, %104 : vector<8x32xf32>
    %c0_30 = arith.constant 0 : index
    %c0_31 = arith.constant 0 : index
    %106 = vector.load %arg6[%c0_30, %c0_31] : memref<1x32xf32, #tpu.memory_space<vmem>>, vector<1x32xf32>
    %c0_32 = arith.constant 0 : index
    %c0_33 = arith.constant 0 : index
    %107 = vector.load %arg7[%c0_32, %c0_33] : memref<1x32xf32, #tpu.memory_space<vmem>>, vector<1x32xf32>
    %cst_34 = arith.constant dense<0.000000e+00> : vector<8xf32>
    %108 = vector.multi_reduction <add>, %105, %cst_34 [1] : vector<8x32xf32> to vector<8xf32>
    %109 = vector.shape_cast %108 : vector<8xf32> to vector<8x1xf32>
    %cst_35 = arith.constant 3.200000e+01 : f32
    %110 = vector.broadcast %cst_35 : f32 to vector<8x1xf32>
    %111 = arith.divf %109, %110 : vector<8x1xf32>
    %112 = vector.broadcast %111 : vector<8x1xf32> to vector<8x32xf32>
    %113 = arith.subf %105, %112 : vector<8x32xf32>
    %114 = arith.mulf %113, %113 : vector<8x32xf32>
    %cst_36 = arith.constant dense<0.000000e+00> : vector<8xf32>
    %115 = vector.multi_reduction <add>, %114, %cst_36 [1] : vector<8x32xf32> to vector<8xf32>
    %116 = vector.shape_cast %115 : vector<8xf32> to vector<8x1xf32>
    %cst_37 = arith.constant 3.200000e+01 : f32
    %117 = vector.broadcast %cst_37 : f32 to vector<8x1xf32>
    %118 = arith.divf %116, %117 : vector<8x1xf32>
    %119 = vector.broadcast %111 : vector<8x1xf32> to vector<8x32xf32>
    %120 = arith.subf %105, %119 : vector<8x32xf32>
    %cst_38 = arith.constant 9.99999974E-6 : f32
    %121 = vector.broadcast %cst_38 : f32 to vector<8x1xf32>
    %122 = arith.addf %118, %121 : vector<8x1xf32>
    %123 = math.rsqrt %122 : vector<8x1xf32>
    %124 = vector.broadcast %123 : vector<8x1xf32> to vector<8x32xf32>
    %125 = arith.mulf %120, %124 : vector<8x32xf32>
    %126 = vector.broadcast %106 : vector<1x32xf32> to vector<8x32xf32>
    %127 = arith.mulf %125, %126 : vector<8x32xf32>
    %128 = vector.broadcast %107 : vector<1x32xf32> to vector<8x32xf32>
    %129 = arith.addf %127, %128 : vector<8x32xf32>
    %130 = arith.truncf %129 : vector<8x32xf32> to vector<8x32xbf16>
    %c0_39 = arith.constant 0 : index
    %c0_40 = arith.constant 0 : index
    %131 = vector.load %arg8[%c0_39, %c0_40] : memref<32x64xbf16, #tpu.memory_space<vmem>>, vector<32x64xbf16>
    %cst_41 = arith.constant dense<0.000000e+00> : vector<8x64xf32>
    %132 = tpu.matmul %130, %131, %cst_41 {dimension_numbers = #tpu.dot_dimension_numbers<[1], [0], [0], [1], [0, 0, 1, 1], [], []>} : vector<8x32xbf16>, vector<32x64xbf16>, vector<8x64xf32> -> vector<8x64xf32>
    %c0_42 = arith.constant 0 : index
    %c0_43 = arith.constant 0 : index
    %133 = vector.load %arg9[%c0_42, %c0_43] : memref<1x64xf32, #tpu.memory_space<vmem>>, vector<1x64xf32>
    %134 = vector.broadcast %133 : vector<1x64xf32> to vector<8x64xf32>
    %135 = arith.addf %132, %134 : vector<8x64xf32>
    %cst_44 = arith.constant 0.000000e+00 : f32
    %136 = vector.broadcast %cst_44 : f32 to vector<8x64xf32>
    %137 = arith.maximumf %135, %136 : vector<8x64xf32>
    %138 = arith.truncf %137 : vector<8x64xf32> to vector<8x64xbf16>
    %c0_45 = arith.constant 0 : index
    %c0_46 = arith.constant 0 : index
    %139 = vector.load %arg10[%c0_45, %c0_46] : memref<64x32xbf16, #tpu.memory_space<vmem>>, vector<64x32xbf16>
    %cst_47 = arith.constant dense<0.000000e+00> : vector<8x32xf32>
    %140 = tpu.matmul %138, %139, %cst_47 {dimension_numbers = #tpu.dot_dimension_numbers<[1], [0], [0], [1], [0, 0, 1, 1], [], []>} : vector<8x64xbf16>, vector<64x32xbf16>, vector<8x32xf32> -> vector<8x32xf32>
    %c0_48 = arith.constant 0 : index
    %c0_49 = arith.constant 0 : index
    %141 = vector.load %arg11[%c0_48, %c0_49] : memref<1x32xf32, #tpu.memory_space<vmem>>, vector<1x32xf32>
    %142 = vector.broadcast %141 : vector<1x32xf32> to vector<8x32xf32>
    %143 = arith.addf %140, %142 : vector<8x32xf32>
    %144 = arith.addf %129, %143 : vector<8x32xf32>
    %c0_50 = arith.constant 0 : index
    %c0_51 = arith.constant 0 : index
    %145 = vector.load %arg12[%c0_50, %c0_51] : memref<1x32xf32, #tpu.memory_space<vmem>>, vector<1x32xf32>
    %c0_52 = arith.constant 0 : index
    %c0_53 = arith.constant 0 : index
    %146 = vector.load %arg13[%c0_52, %c0_53] : memref<1x32xf32, #tpu.memory_space<vmem>>, vector<1x32xf32>
    %cst_54 = arith.constant dense<0.000000e+00> : vector<8xf32>
    %147 = vector.multi_reduction <add>, %144, %cst_54 [1] : vector<8x32xf32> to vector<8xf32>
    %148 = vector.shape_cast %147 : vector<8xf32> to vector<8x1xf32>
    %cst_55 = arith.constant 3.200000e+01 : f32
    %149 = vector.broadcast %cst_55 : f32 to vector<8x1xf32>
    %150 = arith.divf %148, %149 : vector<8x1xf32>
    %151 = vector.broadcast %150 : vector<8x1xf32> to vector<8x32xf32>
    %152 = arith.subf %144, %151 : vector<8x32xf32>
    %153 = arith.mulf %152, %152 : vector<8x32xf32>
    %cst_56 = arith.constant dense<0.000000e+00> : vector<8xf32>
    %154 = vector.multi_reduction <add>, %153, %cst_56 [1] : vector<8x32xf32> to vector<8xf32>
    %155 = vector.shape_cast %154 : vector<8xf32> to vector<8x1xf32>
    %cst_57 = arith.constant 3.200000e+01 : f32
    %156 = vector.broadcast %cst_57 : f32 to vector<8x1xf32>
    %157 = arith.divf %155, %156 : vector<8x1xf32>
    %158 = vector.broadcast %150 : vector<8x1xf32> to vector<8x32xf32>
    %159 = arith.subf %144, %158 : vector<8x32xf32>
    %cst_58 = arith.constant 9.99999974E-6 : f32
    %160 = vector.broadcast %cst_58 : f32 to vector<8x1xf32>
    %161 = arith.addf %157, %160 : vector<8x1xf32>
    %162 = math.rsqrt %161 : vector<8x1xf32>
    %163 = vector.broadcast %162 : vector<8x1xf32> to vector<8x32xf32>
    %164 = arith.mulf %159, %163 : vector<8x32xf32>
    %165 = vector.broadcast %145 : vector<1x32xf32> to vector<8x32xf32>
    %166 = arith.mulf %164, %165 : vector<8x32xf32>
    %167 = vector.broadcast %146 : vector<1x32xf32> to vector<8x32xf32>
    %168 = arith.addf %166, %167 : vector<8x32xf32>
    %169 = vector.shape_cast %168 : vector<8x32xf32> to vector<1x8x32xf32>
    %c0_59 = arith.constant 0 : index
    %c0_60 = arith.constant 0 : index
    %c0_61 = arith.constant 0 : index
    %170 = vector.load %arg14[%c0_59, %c0_60, %c0_61] : memref<1x8x32xf32, #tpu.memory_space<vmem>>, vector<1x8x32xf32>
    tpu.vector_store %arg14[%c0_59, %c0_60, %c0_61], %169 {strides = array<i32>} : memref<1x8x32xf32, #tpu.memory_space<vmem>>, vector<1x8x32xf32>,
    return
  }
  func.func @transform_0(%arg0: i32) -> (i32, i32, i32) {
    %c0_i32 = arith.constant 0 : i32
    %c0_i32_0 = arith.constant 0 : i32
    %c0_i32_1 = arith.constant 0 : i32
    return %arg0, %c0_i32, %c0_i32_0 : i32, i32, i32
  }
  func.func @transform_1(%arg0: i32) -> (i32, i32) {
    %c0_i32 = arith.constant 0 : i32
    %c0_i32_0 = arith.constant 0 : i32
    %c0_i32_1 = arith.constant 0 : i32
    return %c0_i32, %c0_i32_0 : i32, i32
  }
  func.func @transform_2(%arg0: i32) -> (i32, i32) {
    %c0_i32 = arith.constant 0 : i32
    %c0_i32_0 = arith.constant 0 : i32
    %c0_i32_1 = arith.constant 0 : i32
    return %c0_i32, %c0_i32_0 : i32, i32
  }
  func.func @transform_3(%arg0: i32) -> (i32, i32) {
    %c0_i32 = arith.constant 0 : i32
    %c0_i32_0 = arith.constant 0 : i32
    %c0_i32_1 = arith.constant 0 : i32
    return %c0_i32, %c0_i32_0 : i32, i32
  }
  func.func @transform_4(%arg0: i32) -> (i32, i32) {
    %c0_i32 = arith.constant 0 : i32
    %c0_i32_0 = arith.constant 0 : i32
    %c0_i32_1 = arith.constant 0 : i32
    return %c0_i32, %c0_i32_0 : i32, i32
  }
  func.func @transform_5(%arg0: i32) -> (i32, i32) {
    %c0_i32 = arith.constant 0 : i32
    %c0_i32_0 = arith.constant 0 : i32
    %c0_i32_1 = arith.constant 0 : i32
    return %c0_i32, %c0_i32_0 : i32, i32
  }
  func.func @transform_6(%arg0: i32) -> (i32, i32) {
    %c0_i32 = arith.constant 0 : i32
    %c0_i32_0 = arith.constant 0 : i32
    %c0_i32_1 = arith.constant 0 : i32
    return %c0_i32, %c0_i32_0 : i32, i32
  }
  func.func @transform_7(%arg0: i32) -> (i32, i32) {
    %c0_i32 = arith.constant 0 : i32
    %c0_i32_0 = arith.constant 0 : i32
    %c0_i32_1 = arith.constant 0 : i32
    return %c0_i32, %c0_i32_0 : i32, i32
  }
  func.func @transform_8(%arg0: i32) -> (i32, i32) {
    %c0_i32 = arith.constant 0 : i32
    %c0_i32_0 = arith.constant 0 : i32
    %c0_i32_1 = arith.constant 0 : i32
    return %c0_i32, %c0_i32_0 : i32, i32
  }
  func.func @transform_9(%arg0: i32) -> (i32, i32) {
    %c0_i32 = arith.constant 0 : i32
    %c0_i32_0 = arith.constant 0 : i32
    %c0_i32_1 = arith.constant 0 : i32
    return %c0_i32, %c0_i32_0 : i32, i32
  }
  func.func @transform_10(%arg0: i32) -> (i32, i32) {
    %c0_i32 = arith.constant 0 : i32
    %c0_i32_0 = arith.constant 0 : i32
    %c0_i32_1 = arith.constant 0 : i32
    return %c0_i32, %c0_i32_0 : i32, i32
  }
  func.func @transform_11(%arg0: i32) -> (i32, i32) {
    %c0_i32 = arith.constant 0 : i32
    %c0_i32_0 = arith.constant 0 : i32
    %c0_i32_1 = arith.constant 0 : i32
    return %c0_i32, %c0_i32_0 : i32, i32
  }
  func.func @transform_12(%arg0: i32) -> (i32, i32) {
    %c0_i32 = arith.constant 0 : i32
    %c0_i32_0 = arith.constant 0 : i32
    %c0_i32_1 = arith.constant 0 : i32
    return %c0_i32, %c0_i32_0 : i32, i32
  }
  func.func @transform_13(%arg0: i32) -> (i32, i32, i32) {
    %c0_i32 = arith.constant 0 : i32
    %c0_i32_0 = arith.constant 0 : i32
    %c0_i32_1 = arith.constant 0 : i32
    return %arg0, %c0_i32, %c0_i32_0 : i32, i32, i32
  }
}

module attributes {stable_mosaic.version = 11 : i64} {
  func.func @decoder_block_kernel(%arg0: i32, %arg1: memref<1x8x32xf32, #tpu.memory_space<vmem>>, %arg2: memref<1x8x32xf32, #tpu.memory_space<vmem>>, %arg3: memref<32x96xbf16, #tpu.memory_space<vmem>>, %arg4: memref<1x96xf32, #tpu.memory_space<vmem>>, %arg5: memref<32x32xbf16, #tpu.memory_space<vmem>>, %arg6: memref<1x32xf32, #tpu.memory_space<vmem>>, %arg7: memref<1x32xf32, #tpu.memory_space<vmem>>, %arg8: memref<1x32xf32, #tpu.memory_space<vmem>>, %arg9: memref<32x32xbf16, #tpu.memory_space<vmem>>, %arg10: memref<1x32xf32, #tpu.memory_space<vmem>>, %arg11: memref<32x64xbf16, #tpu.memory_space<vmem>>, %arg12: memref<1x64xf32, #tpu.memory_space<vmem>>, %arg13: memref<32x32xbf16, #tpu.memory_space<vmem>>, %arg14: memref<1x32xf32, #tpu.memory_space<vmem>>, %arg15: memref<1x32xf32, #tpu.memory_space<vmem>>, %arg16: memref<1x32xf32, #tpu.memory_space<vmem>>, %arg17: memref<32x64xbf16, #tpu.memory_space<vmem>>, %arg18: memref<1x64xf32, #tpu.memory_space<vmem>>, %arg19: memref<64x32xbf16, #tpu.memory_space<vmem>>, %arg20: memref<1x32xf32, #tpu.memory_space<vmem>>, %arg21: memref<1x32xf32, #tpu.memory_space<vmem>>, %arg22: memref<1x32xf32, #tpu.memory_space<vmem>>, %arg23: memref<1x8x32xf32, #tpu.memory_space<vmem>>) attributes {dimension_semantics = [#tpu.dimension_semantics<parallel>], iteration_bounds = array<i64: 2>, scalar_prefetch = 0 : i64, scratch_operands = 0 : i64, tpu.core_type = #tpu.core_type<tc>, window_params = [{transform_indices = @transform_0, window_bounds = array<i64: 1, 8, 32>}, {transform_indices = @transform_1, window_bounds = array<i64: 1, 8, 32>}, {pipeline_mode = #tpu.pipeline_mode<synchronous>, transform_indices = @transform_2, window_bounds = array<i64: 32, 96>}, {pipeline_mode = #tpu.pipeline_mode<synchronous>, transform_indices = @transform_3, window_bounds = array<i64: 1, 96>}, {pipeline_mode = #tpu.pipeline_mode<synchronous>, transform_indices = @transform_4, window_bounds = array<i64: 32, 32>}, {pipeline_mode = #tpu.pipeline_mode<synchronous>, transform_indices = @transform_5, window_bounds = array<i64: 1, 32>}, {pipeline_mode = #tpu.pipeline_mode<synchronous>, transform_indices = @transform_6, window_bounds = array<i64: 1, 32>}, {pipeline_mode = #tpu.pipeline_mode<synchronous>, transform_indices = @transform_7, window_bounds = array<i64: 1, 32>}, {pipeline_mode = #tpu.pipeline_mode<synchronous>, transform_indices = @transform_8, window_bounds = array<i64: 32, 32>}, {pipeline_mode = #tpu.pipeline_mode<synchronous>, transform_indices = @transform_9, window_bounds = array<i64: 1, 32>}, {pipeline_mode = #tpu.pipeline_mode<synchronous>, transform_indices = @transform_10, window_bounds = array<i64: 32, 64>}, {pipeline_mode = #tpu.pipeline_mode<synchronous>, transform_indices = @transform_11, window_bounds = array<i64: 1, 64>}, {pipeline_mode = #tpu.pipeline_mode<synchronous>, transform_indices = @transform_12, window_bounds = array<i64: 32, 32>}, {pipeline_mode = #tpu.pipeline_mode<synchronous>, transform_indices = @transform_13, window_bounds = array<i64: 1, 32>}, {pipeline_mode = #tpu.pipeline_mode<synchronous>, transform_indices = @transform_14, window_bounds = array<i64: 1, 32>}, {pipeline_mode = #tpu.pipeline_mode<synchronous>, transform_indices = @transform_15, window_bounds = array<i64: 1, 32>}, {pipeline_mode = #tpu.pipeline_mode<synchronous>, transform_indices = @transform_16, window_bounds = array<i64: 32, 64>}, {pipeline_mode = #tpu.pipeline_mode<synchronous>, transform_indices = @transform_17, window_bounds = array<i64: 1, 64>}, {pipeline_mode = #tpu.pipeline_mode<synchronous>, transform_indices = @transform_18, window_bounds = array<i64: 64, 32>}, {pipeline_mode = #tpu.pipeline_mode<synchronous>, transform_indices = @transform_19, window_bounds = array<i64: 1, 32>}, {pipeline_mode = #tpu.pipeline_mode<synchronous>, transform_indices = @transform_20, window_bounds = array<i64: 1, 32>}, {pipeline_mode = #tpu.pipeline_mode<synchronous>, transform_indices = @transform_21, window_bounds = array<i64: 1, 32>}, {transform_indices = @transform_22, window_bounds = array<i64: 1, 8, 32>}]} {
    %c0 = arith.constant 0 : index
    %c0_0 = arith.constant 0 : index
    %c0_1 = arith.constant 0 : index
    %0 = vector.load %arg1[%c0, %c0_0, %c0_1] : memref<1x8x32xf32, #tpu.memory_space<vmem>>, vector<1x8x32xf32>
    %1 = vector.shape_cast %0 : vector<1x8x32xf32> to vector<8x32xf32>
    %c0_2 = arith.constant 0 : index
    %c0_3 = arith.constant 0 : index
    %c0_4 = arith.constant 0 : index
    %2 = vector.load %arg2[%c0_2, %c0_3, %c0_4] : memref<1x8x32xf32, #tpu.memory_space<vmem>>, vector<1x8x32xf32>
    %3 = vector.shape_cast %2 : vector<1x8x32xf32> to vector<8x32xf32>
    %4 = arith.truncf %1 : vector<8x32xf32> to vector<8x32xbf16>
    %c0_5 = arith.constant 0 : index
    %c0_6 = arith.constant 0 : index
    %5 = vector.load %arg3[%c0_5, %c0_6] : memref<32x96xbf16, #tpu.memory_space<vmem>>, vector<32x96xbf16>
    %cst = arith.constant dense<0.000000e+00> : vector<8x96xf32>
    %6 = tpu.matmul %4, %5, %cst {dimension_numbers = #tpu.dot_dimension_numbers<[1], [0], [0], [1], [0, 0, 1, 1], [], []>} : vector<8x32xbf16>, vector<32x96xbf16>, vector<8x96xf32> -> vector<8x96xf32>
    %c0_7 = arith.constant 0 : index
    %c0_8 = arith.constant 0 : index
    %7 = vector.load %arg4[%c0_7, %c0_8] : memref<1x96xf32, #tpu.memory_space<vmem>>, vector<1x96xf32>
    %8 = vector.broadcast %7 : vector<1x96xf32> to vector<8x96xf32>
    %9 = arith.addf %6, %8 : vector<8x96xf32>
    %10 = vector.extract_strided_slice %9 {offsets = [0, 0], sizes = [8, 32], strides = [1, 1]} : vector<8x96xf32> to vector<8x32xf32>
    %cst_9 = arith.constant 0.353553385 : f32
    %11 = vector.broadcast %cst_9 : f32 to vector<8x32xf32>
    %12 = arith.mulf %10, %11 : vector<8x32xf32>
    %13 = vector.shape_cast %12 : vector<8x32xf32> to vector<1x8x32xf32>
    %14 = vector.extract_strided_slice %9 {offsets = [0, 32], sizes = [8, 32], strides = [1, 1]} : vector<8x96xf32> to vector<8x32xf32>
    %15 = vector.shape_cast %14 : vector<8x32xf32> to vector<1x8x32xf32>
    %16 = vector.extract_strided_slice %9 {offsets = [0, 64], sizes = [8, 32], strides = [1, 1]} : vector<8x96xf32> to vector<8x32xf32>
    %17 = vector.shape_cast %16 : vector<8x32xf32> to vector<1x8x32xf32>
    %18 = tpu.iota {dimensions = array<i32: 0>} : vector<8x8xi32>
    %19 = tpu.iota {dimensions = array<i32: 1>} : vector<8x8xi32>
    %20 = arith.cmpi sle, %19, %18 : vector<8x8xi32>
    %cst_10 = arith.constant 1.000000e+00 : f32
    %cst_11 = arith.constant -1.000000e+32 : f32
    %21 = vector.broadcast %cst_10 : f32 to vector<8x8xf32>
    %22 = vector.broadcast %cst_11 : f32 to vector<8x8xf32>
    %23 = arith.select %20, %21, %22 : vector<8x8xi1>, vector<8x8xf32>
    %24 = arith.truncf %13 : vector<1x8x32xf32> to vector<1x8x32xbf16>
    %25 = arith.truncf %15 : vector<1x8x32xf32> to vector<1x8x32xbf16>
    %26 = arith.truncf %17 : vector<1x8x32xf32> to vector<1x8x32xbf16>
    %27 = vector.extract_strided_slice %24 {offsets = [0, 0, 0], sizes = [1, 8, 8], strides = [1, 1, 1]} : vector<1x8x32xbf16> to vector<1x8x8xbf16>
    %28 = vector.extract_strided_slice %25 {offsets = [0, 0, 0], sizes = [1, 8, 8], strides = [1, 1, 1]} : vector<1x8x32xbf16> to vector<1x8x8xbf16>
    %29 = vector.extract_strided_slice %26 {offsets = [0, 0, 0], sizes = [1, 8, 8], strides = [1, 1, 1]} : vector<1x8x32xbf16> to vector<1x8x8xbf16>
    "tpu.trace_start"() <{level = 10 : i32, message = "bqd,bkd->bqk"}> : () -> ()
    %cst_12 = arith.constant dense<0.000000e+00> : vector<1x8x8xf32>
    %30 = tpu.matmul %27, %28, %cst_12 {dimension_numbers = #tpu.dot_dimension_numbers<[2], [2], [1], [1], [0, 0, 0, 1, 1, 1], [0], [0]>} : vector<1x8x8xbf16>, vector<1x8x8xbf16>, vector<1x8x8xf32> -> vector<1x8x8xf32>
    "tpu.trace_stop"() : () -> ()
    %31 = vector.shape_cast %23 : vector<8x8xf32> to vector<1x8x8xf32>
    %32 = arith.addf %30, %31 : vector<1x8x8xf32>
    %cst_13 = arith.constant dense<0xFF800000> : vector<1x8xf32>
    %33 = vector.multi_reduction <maximumf>, %32, %cst_13 [2] : vector<1x8x8xf32> to vector<1x8xf32>
    %34 = vector.shape_cast %33 : vector<1x8xf32> to vector<1x8x1xf32>
    %35 = vector.broadcast %34 : vector<1x8x1xf32> to vector<1x8x8xf32>
    %36 = arith.subf %32, %35 : vector<1x8x8xf32>
    %37 = math.exp %36 : vector<1x8x8xf32>
    %cst_14 = arith.constant dense<0.000000e+00> : vector<1x8xf32>
    %38 = vector.multi_reduction <add>, %37, %cst_14 [2] : vector<1x8x8xf32> to vector<1x8xf32>
    %39 = vector.shape_cast %38 : vector<1x8xf32> to vector<1x8x1xf32>
    %40 = tpu.reciprocal %39 {approx = true} : vector<1x8x1xf32> -> vector<1x8x1xf32>
    %41 = vector.broadcast %40 : vector<1x8x1xf32> to vector<1x8x8xf32>
    %42 = arith.mulf %37, %41 : vector<1x8x8xf32>
    %43 = arith.truncf %42 : vector<1x8x8xf32> to vector<1x8x8xbf16>
    "tpu.trace_start"() <{level = 10 : i32, message = "bqk,bkd->bqd"}> : () -> ()
    %cst_15 = arith.constant dense<0.000000e+00> : vector<1x8x8xf32>
    %44 = tpu.matmul %43, %29, %cst_15 {dimension_numbers = #tpu.dot_dimension_numbers<[2], [1], [1], [2], [0, 0, 0, 1, 1, 2], [0], [0]>} : vector<1x8x8xbf16>, vector<1x8x8xbf16>, vector<1x8x8xf32> -> vector<1x8x8xf32>
    "tpu.trace_stop"() : () -> ()
    %45 = vector.extract_strided_slice %24 {offsets = [0, 0, 8], sizes = [1, 8, 8], strides = [1, 1, 1]} : vector<1x8x32xbf16> to vector<1x8x8xbf16>
    %46 = vector.extract_strided_slice %25 {offsets = [0, 0, 8], sizes = [1, 8, 8], strides = [1, 1, 1]} : vector<1x8x32xbf16> to vector<1x8x8xbf16>
    %47 = vector.extract_strided_slice %26 {offsets = [0, 0, 8], sizes = [1, 8, 8], strides = [1, 1, 1]} : vector<1x8x32xbf16> to vector<1x8x8xbf16>
    "tpu.trace_start"() <{level = 10 : i32, message = "bqd,bkd->bqk"}> : () -> ()
    %cst_16 = arith.constant dense<0.000000e+00> : vector<1x8x8xf32>
    %48 = tpu.matmul %45, %46, %cst_16 {dimension_numbers = #tpu.dot_dimension_numbers<[2], [2], [1], [1], [0, 0, 0, 1, 1, 1], [0], [0]>} : vector<1x8x8xbf16>, vector<1x8x8xbf16>, vector<1x8x8xf32> -> vector<1x8x8xf32>
    "tpu.trace_stop"() : () -> ()
    %49 = vector.shape_cast %23 : vector<8x8xf32> to vector<1x8x8xf32>
    %50 = arith.addf %48, %49 : vector<1x8x8xf32>
    %cst_17 = arith.constant dense<0xFF800000> : vector<1x8xf32>
    %51 = vector.multi_reduction <maximumf>, %50, %cst_17 [2] : vector<1x8x8xf32> to vector<1x8xf32>
    %52 = vector.shape_cast %51 : vector<1x8xf32> to vector<1x8x1xf32>
    %53 = vector.broadcast %52 : vector<1x8x1xf32> to vector<1x8x8xf32>
    %54 = arith.subf %50, %53 : vector<1x8x8xf32>
    %55 = math.exp %54 : vector<1x8x8xf32>
    %cst_18 = arith.constant dense<0.000000e+00> : vector<1x8xf32>
    %56 = vector.multi_reduction <add>, %55, %cst_18 [2] : vector<1x8x8xf32> to vector<1x8xf32>
    %57 = vector.shape_cast %56 : vector<1x8xf32> to vector<1x8x1xf32>
    %58 = tpu.reciprocal %57 {approx = true} : vector<1x8x1xf32> -> vector<1x8x1xf32>
    %59 = vector.broadcast %58 : vector<1x8x1xf32> to vector<1x8x8xf32>
    %60 = arith.mulf %55, %59 : vector<1x8x8xf32>
    %61 = arith.truncf %60 : vector<1x8x8xf32> to vector<1x8x8xbf16>
    "tpu.trace_start"() <{level = 10 : i32, message = "bqk,bkd->bqd"}> : () -> ()
    %cst_19 = arith.constant dense<0.000000e+00> : vector<1x8x8xf32>
    %62 = tpu.matmul %61, %47, %cst_19 {dimension_numbers = #tpu.dot_dimension_numbers<[2], [1], [1], [2], [0, 0, 0, 1, 1, 2], [0], [0]>} : vector<1x8x8xbf16>, vector<1x8x8xbf16>, vector<1x8x8xf32> -> vector<1x8x8xf32>
    "tpu.trace_stop"() : () -> ()
    %63 = vector.extract_strided_slice %24 {offsets = [0, 0, 16], sizes = [1, 8, 8], strides = [1, 1, 1]} : vector<1x8x32xbf16> to vector<1x8x8xbf16>
    %64 = vector.extract_strided_slice %25 {offsets = [0, 0, 16], sizes = [1, 8, 8], strides = [1, 1, 1]} : vector<1x8x32xbf16> to vector<1x8x8xbf16>
    %65 = vector.extract_strided_slice %26 {offsets = [0, 0, 16], sizes = [1, 8, 8], strides = [1, 1, 1]} : vector<1x8x32xbf16> to vector<1x8x8xbf16>
    "tpu.trace_start"() <{level = 10 : i32, message = "bqd,bkd->bqk"}> : () -> ()
    %cst_20 = arith.constant dense<0.000000e+00> : vector<1x8x8xf32>
    %66 = tpu.matmul %63, %64, %cst_20 {dimension_numbers = #tpu.dot_dimension_numbers<[2], [2], [1], [1], [0, 0, 0, 1, 1, 1], [0], [0]>} : vector<1x8x8xbf16>, vector<1x8x8xbf16>, vector<1x8x8xf32> -> vector<1x8x8xf32>
    "tpu.trace_stop"() : () -> ()
    %67 = vector.shape_cast %23 : vector<8x8xf32> to vector<1x8x8xf32>
    %68 = arith.addf %66, %67 : vector<1x8x8xf32>
    %cst_21 = arith.constant dense<0xFF800000> : vector<1x8xf32>
    %69 = vector.multi_reduction <maximumf>, %68, %cst_21 [2] : vector<1x8x8xf32> to vector<1x8xf32>
    %70 = vector.shape_cast %69 : vector<1x8xf32> to vector<1x8x1xf32>
    %71 = vector.broadcast %70 : vector<1x8x1xf32> to vector<1x8x8xf32>
    %72 = arith.subf %68, %71 : vector<1x8x8xf32>
    %73 = math.exp %72 : vector<1x8x8xf32>
    %cst_22 = arith.constant dense<0.000000e+00> : vector<1x8xf32>
    %74 = vector.multi_reduction <add>, %73, %cst_22 [2] : vector<1x8x8xf32> to vector<1x8xf32>
    %75 = vector.shape_cast %74 : vector<1x8xf32> to vector<1x8x1xf32>
    %76 = tpu.reciprocal %75 {approx = true} : vector<1x8x1xf32> -> vector<1x8x1xf32>
    %77 = vector.broadcast %76 : vector<1x8x1xf32> to vector<1x8x8xf32>
    %78 = arith.mulf %73, %77 : vector<1x8x8xf32>
    %79 = arith.truncf %78 : vector<1x8x8xf32> to vector<1x8x8xbf16>
    "tpu.trace_start"() <{level = 10 : i32, message = "bqk,bkd->bqd"}> : () -> ()
    %cst_23 = arith.constant dense<0.000000e+00> : vector<1x8x8xf32>
    %80 = tpu.matmul %79, %65, %cst_23 {dimension_numbers = #tpu.dot_dimension_numbers<[2], [1], [1], [2], [0, 0, 0, 1, 1, 2], [0], [0]>} : vector<1x8x8xbf16>, vector<1x8x8xbf16>, vector<1x8x8xf32> -> vector<1x8x8xf32>
    "tpu.trace_stop"() : () -> ()
    %81 = vector.extract_strided_slice %24 {offsets = [0, 0, 24], sizes = [1, 8, 8], strides = [1, 1, 1]} : vector<1x8x32xbf16> to vector<1x8x8xbf16>
    %82 = vector.extract_strided_slice %25 {offsets = [0, 0, 24], sizes = [1, 8, 8], strides = [1, 1, 1]} : vector<1x8x32xbf16> to vector<1x8x8xbf16>
    %83 = vector.extract_strided_slice %26 {offsets = [0, 0, 24], sizes = [1, 8, 8], strides = [1, 1, 1]} : vector<1x8x32xbf16> to vector<1x8x8xbf16>
    "tpu.trace_start"() <{level = 10 : i32, message = "bqd,bkd->bqk"}> : () -> ()
    %cst_24 = arith.constant dense<0.000000e+00> : vector<1x8x8xf32>
    %84 = tpu.matmul %81, %82, %cst_24 {dimension_numbers = #tpu.dot_dimension_numbers<[2], [2], [1], [1], [0, 0, 0, 1, 1, 1], [0], [0]>} : vector<1x8x8xbf16>, vector<1x8x8xbf16>, vector<1x8x8xf32> -> vector<1x8x8xf32>
    "tpu.trace_stop"() : () -> ()
    %85 = vector.shape_cast %23 : vector<8x8xf32> to vector<1x8x8xf32>
    %86 = arith.addf %84, %85 : vector<1x8x8xf32>
    %cst_25 = arith.constant dense<0xFF800000> : vector<1x8xf32>
    %87 = vector.multi_reduction <maximumf>, %86, %cst_25 [2] : vector<1x8x8xf32> to vector<1x8xf32>
    %88 = vector.shape_cast %87 : vector<1x8xf32> to vector<1x8x1xf32>
    %89 = vector.broadcast %88 : vector<1x8x1xf32> to vector<1x8x8xf32>
    %90 = arith.subf %86, %89 : vector<1x8x8xf32>
    %91 = math.exp %90 : vector<1x8x8xf32>
    %cst_26 = arith.constant dense<0.000000e+00> : vector<1x8xf32>
    %92 = vector.multi_reduction <add>, %91, %cst_26 [2] : vector<1x8x8xf32> to vector<1x8xf32>
    %93 = vector.shape_cast %92 : vector<1x8xf32> to vector<1x8x1xf32>
    %94 = tpu.reciprocal %93 {approx = true} : vector<1x8x1xf32> -> vector<1x8x1xf32>
    %95 = vector.broadcast %94 : vector<1x8x1xf32> to vector<1x8x8xf32>
    %96 = arith.mulf %91, %95 : vector<1x8x8xf32>
    %97 = arith.truncf %96 : vector<1x8x8xf32> to vector<1x8x8xbf16>
    "tpu.trace_start"() <{level = 10 : i32, message = "bqk,bkd->bqd"}> : () -> ()
    %cst_27 = arith.constant dense<0.000000e+00> : vector<1x8x8xf32>
    %98 = tpu.matmul %97, %83, %cst_27 {dimension_numbers = #tpu.dot_dimension_numbers<[2], [1], [1], [2], [0, 0, 0, 1, 1, 2], [0], [0]>} : vector<1x8x8xbf16>, vector<1x8x8xbf16>, vector<1x8x8xf32> -> vector<1x8x8xf32>
    "tpu.trace_stop"() : () -> ()
    %99 = tpu.concatenate %44, %62, %80, %98 in 2 : vector<1x8x8xf32>, vector<1x8x8xf32>, vector<1x8x8xf32>, vector<1x8x8xf32> -> vector<1x8x32xf32>
    %100 = vector.shape_cast %99 : vector<1x8x32xf32> to vector<8x32xf32>
    %101 = arith.truncf %100 : vector<8x32xf32> to vector<8x32xbf16>
    %c0_28 = arith.constant 0 : index
    %c0_29 = arith.constant 0 : index
    %102 = vector.load %arg5[%c0_28, %c0_29] : memref<32x32xbf16, #tpu.memory_space<vmem>>, vector<32x32xbf16>
    %cst_30 = arith.constant dense<0.000000e+00> : vector<8x32xf32>
    %103 = tpu.matmul %101, %102, %cst_30 {dimension_numbers = #tpu.dot_dimension_numbers<[1], [0], [0], [1], [0, 0, 1, 1], [], []>} : vector<8x32xbf16>, vector<32x32xbf16>, vector<8x32xf32> -> vector<8x32xf32>
    %c0_31 = arith.constant 0 : index
    %c0_32 = arith.constant 0 : index
    %104 = vector.load %arg6[%c0_31, %c0_32] : memref<1x32xf32, #tpu.memory_space<vmem>>, vector<1x32xf32>
    %105 = vector.broadcast %104 : vector<1x32xf32> to vector<8x32xf32>
    %106 = arith.addf %103, %105 : vector<8x32xf32>
    %107 = arith.addf %1, %106 : vector<8x32xf32>
    %c0_33 = arith.constant 0 : index
    %c0_34 = arith.constant 0 : index
    %108 = vector.load %arg7[%c0_33, %c0_34] : memref<1x32xf32, #tpu.memory_space<vmem>>, vector<1x32xf32>
    %c0_35 = arith.constant 0 : index
    %c0_36 = arith.constant 0 : index
    %109 = vector.load %arg8[%c0_35, %c0_36] : memref<1x32xf32, #tpu.memory_space<vmem>>, vector<1x32xf32>
    %cst_37 = arith.constant dense<0.000000e+00> : vector<8xf32>
    %110 = vector.multi_reduction <add>, %107, %cst_37 [1] : vector<8x32xf32> to vector<8xf32>
    %111 = vector.shape_cast %110 : vector<8xf32> to vector<8x1xf32>
    %cst_38 = arith.constant 3.200000e+01 : f32
    %112 = vector.broadcast %cst_38 : f32 to vector<8x1xf32>
    %113 = arith.divf %111, %112 : vector<8x1xf32>
    %114 = vector.broadcast %113 : vector<8x1xf32> to vector<8x32xf32>
    %115 = arith.subf %107, %114 : vector<8x32xf32>
    %116 = arith.mulf %115, %115 : vector<8x32xf32>
    %cst_39 = arith.constant dense<0.000000e+00> : vector<8xf32>
    %117 = vector.multi_reduction <add>, %116, %cst_39 [1] : vector<8x32xf32> to vector<8xf32>
    %118 = vector.shape_cast %117 : vector<8xf32> to vector<8x1xf32>
    %cst_40 = arith.constant 3.200000e+01 : f32
    %119 = vector.broadcast %cst_40 : f32 to vector<8x1xf32>
    %120 = arith.divf %118, %119 : vector<8x1xf32>
    %121 = vector.broadcast %113 : vector<8x1xf32> to vector<8x32xf32>
    %122 = arith.subf %107, %121 : vector<8x32xf32>
    %cst_41 = arith.constant 9.99999974E-6 : f32
    %123 = vector.broadcast %cst_41 : f32 to vector<8x1xf32>
    %124 = arith.addf %120, %123 : vector<8x1xf32>
    %125 = math.rsqrt %124 : vector<8x1xf32>
    %126 = vector.broadcast %125 : vector<8x1xf32> to vector<8x32xf32>
    %127 = arith.mulf %122, %126 : vector<8x32xf32>
    %128 = vector.broadcast %108 : vector<1x32xf32> to vector<8x32xf32>
    %129 = arith.mulf %127, %128 : vector<8x32xf32>
    %130 = vector.broadcast %109 : vector<1x32xf32> to vector<8x32xf32>
    %131 = arith.addf %129, %130 : vector<8x32xf32>
    %132 = arith.truncf %131 : vector<8x32xf32> to vector<8x32xbf16>
    %c0_42 = arith.constant 0 : index
    %c0_43 = arith.constant 0 : index
    %133 = vector.load %arg9[%c0_42, %c0_43] : memref<32x32xbf16, #tpu.memory_space<vmem>>, vector<32x32xbf16>
    %cst_44 = arith.constant dense<0.000000e+00> : vector<8x32xf32>
    %134 = tpu.matmul %132, %133, %cst_44 {dimension_numbers = #tpu.dot_dimension_numbers<[1], [0], [0], [1], [0, 0, 1, 1], [], []>} : vector<8x32xbf16>, vector<32x32xbf16>, vector<8x32xf32> -> vector<8x32xf32>
    %c0_45 = arith.constant 0 : index
    %c0_46 = arith.constant 0 : index
    %135 = vector.load %arg10[%c0_45, %c0_46] : memref<1x32xf32, #tpu.memory_space<vmem>>, vector<1x32xf32>
    %136 = vector.broadcast %135 : vector<1x32xf32> to vector<8x32xf32>
    %137 = arith.addf %134, %136 : vector<8x32xf32>
    %cst_47 = arith.constant 0.353553385 : f32
    %138 = vector.broadcast %cst_47 : f32 to vector<8x32xf32>
    %139 = arith.mulf %137, %138 : vector<8x32xf32>
    %140 = vector.shape_cast %139 : vector<8x32xf32> to vector<1x8x32xf32>
    %141 = arith.truncf %3 : vector<8x32xf32> to vector<8x32xbf16>
    %c0_48 = arith.constant 0 : index
    %c0_49 = arith.constant 0 : index
    %142 = vector.load %arg11[%c0_48, %c0_49] : memref<32x64xbf16, #tpu.memory_space<vmem>>, vector<32x64xbf16>
    %cst_50 = arith.constant dense<0.000000e+00> : vector<8x64xf32>
    %143 = tpu.matmul %141, %142, %cst_50 {dimension_numbers = #tpu.dot_dimension_numbers<[1], [0], [0], [1], [0, 0, 1, 1], [], []>} : vector<8x32xbf16>, vector<32x64xbf16>, vector<8x64xf32> -> vector<8x64xf32>
    %c0_51 = arith.constant 0 : index
    %c0_52 = arith.constant 0 : index
    %144 = vector.load %arg12[%c0_51, %c0_52] : memref<1x64xf32, #tpu.memory_space<vmem>>, vector<1x64xf32>
    %145 = vector.broadcast %144 : vector<1x64xf32> to vector<8x64xf32>
    %146 = arith.addf %143, %145 : vector<8x64xf32>
    %147 = vector.extract_strided_slice %146 {offsets = [0, 0], sizes = [8, 32], strides = [1, 1]} : vector<8x64xf32> to vector<8x32xf32>
    %148 = vector.shape_cast %147 : vector<8x32xf32> to vector<1x8x32xf32>
    %149 = vector.extract_strided_slice %146 {offsets = [0, 32], sizes = [8, 32], strides = [1, 1]} : vector<8x64xf32> to vector<8x32xf32>
    %150 = vector.shape_cast %149 : vector<8x32xf32> to vector<1x8x32xf32>
    %151 = arith.truncf %140 : vector<1x8x32xf32> to vector<1x8x32xbf16>
    %152 = arith.truncf %148 : vector<1x8x32xf32> to vector<1x8x32xbf16>
    %153 = arith.truncf %150 : vector<1x8x32xf32> to vector<1x8x32xbf16>
    %154 = vector.extract_strided_slice %151 {offsets = [0, 0, 0], sizes = [1, 8, 8], strides = [1, 1, 1]} : vector<1x8x32xbf16> to vector<1x8x8xbf16>
    %155 = vector.extract_strided_slice %152 {offsets = [0, 0, 0], sizes = [1, 8, 8], strides = [1, 1, 1]} : vector<1x8x32xbf16> to vector<1x8x8xbf16>
    %156 = vector.extract_strided_slice %153 {offsets = [0, 0, 0], sizes = [1, 8, 8], strides = [1, 1, 1]} : vector<1x8x32xbf16> to vector<1x8x8xbf16>
    "tpu.trace_start"() <{level = 10 : i32, message = "bqd,bkd->bqk"}> : () -> ()
    %cst_53 = arith.constant dense<0.000000e+00> : vector<1x8x8xf32>
    %157 = tpu.matmul %154, %155, %cst_53 {dimension_numbers = #tpu.dot_dimension_numbers<[2], [2], [1], [1], [0, 0, 0, 1, 1, 1], [0], [0]>} : vector<1x8x8xbf16>, vector<1x8x8xbf16>, vector<1x8x8xf32> -> vector<1x8x8xf32>
    "tpu.trace_stop"() : () -> ()
    %cst_54 = arith.constant dense<0xFF800000> : vector<1x8xf32>
    %158 = vector.multi_reduction <maximumf>, %157, %cst_54 [2] : vector<1x8x8xf32> to vector<1x8xf32>
    %159 = vector.shape_cast %158 : vector<1x8xf32> to vector<1x8x1xf32>
    %160 = vector.broadcast %159 : vector<1x8x1xf32> to vector<1x8x8xf32>
    %161 = arith.subf %157, %160 : vector<1x8x8xf32>
    %162 = math.exp %161 : vector<1x8x8xf32>
    %cst_55 = arith.constant dense<0.000000e+00> : vector<1x8xf32>
    %163 = vector.multi_reduction <add>, %162, %cst_55 [2] : vector<1x8x8xf32> to vector<1x8xf32>
    %164 = vector.shape_cast %163 : vector<1x8xf32> to vector<1x8x1xf32>
    %165 = tpu.reciprocal %164 {approx = true} : vector<1x8x1xf32> -> vector<1x8x1xf32>
    %166 = vector.broadcast %165 : vector<1x8x1xf32> to vector<1x8x8xf32>
    %167 = arith.mulf %162, %166 : vector<1x8x8xf32>
    %168 = arith.truncf %167 : vector<1x8x8xf32> to vector<1x8x8xbf16>
    "tpu.trace_start"() <{level = 10 : i32, message = "bqk,bkd->bqd"}> : () -> ()
    %cst_56 = arith.constant dense<0.000000e+00> : vector<1x8x8xf32>
    %169 = tpu.matmul %168, %156, %cst_56 {dimension_numbers = #tpu.dot_dimension_numbers<[2], [1], [1], [2], [0, 0, 0, 1, 1, 2], [0], [0]>} : vector<1x8x8xbf16>, vector<1x8x8xbf16>, vector<1x8x8xf32> -> vector<1x8x8xf32>
    "tpu.trace_stop"() : () -> ()
    %170 = vector.extract_strided_slice %151 {offsets = [0, 0, 8], sizes = [1, 8, 8], strides = [1, 1, 1]} : vector<1x8x32xbf16> to vector<1x8x8xbf16>
    %171 = vector.extract_strided_slice %152 {offsets = [0, 0, 8], sizes = [1, 8, 8], strides = [1, 1, 1]} : vector<1x8x32xbf16> to vector<1x8x8xbf16>
    %172 = vector.extract_strided_slice %153 {offsets = [0, 0, 8], sizes = [1, 8, 8], strides = [1, 1, 1]} : vector<1x8x32xbf16> to vector<1x8x8xbf16>
    "tpu.trace_start"() <{level = 10 : i32, message = "bqd,bkd->bqk"}> : () -> ()
    %cst_57 = arith.constant dense<0.000000e+00> : vector<1x8x8xf32>
    %173 = tpu.matmul %170, %171, %cst_57 {dimension_numbers = #tpu.dot_dimension_numbers<[2], [2], [1], [1], [0, 0, 0, 1, 1, 1], [0], [0]>} : vector<1x8x8xbf16>, vector<1x8x8xbf16>, vector<1x8x8xf32> -> vector<1x8x8xf32>
    "tpu.trace_stop"() : () -> ()
    %cst_58 = arith.constant dense<0xFF800000> : vector<1x8xf32>
    %174 = vector.multi_reduction <maximumf>, %173, %cst_58 [2] : vector<1x8x8xf32> to vector<1x8xf32>
    %175 = vector.shape_cast %174 : vector<1x8xf32> to vector<1x8x1xf32>
    %176 = vector.broadcast %175 : vector<1x8x1xf32> to vector<1x8x8xf32>
    %177 = arith.subf %173, %176 : vector<1x8x8xf32>
    %178 = math.exp %177 : vector<1x8x8xf32>
    %cst_59 = arith.constant dense<0.000000e+00> : vector<1x8xf32>
    %179 = vector.multi_reduction <add>, %178, %cst_59 [2] : vector<1x8x8xf32> to vector<1x8xf32>
    %180 = vector.shape_cast %179 : vector<1x8xf32> to vector<1x8x1xf32>
    %181 = tpu.reciprocal %180 {approx = true} : vector<1x8x1xf32> -> vector<1x8x1xf32>
    %182 = vector.broadcast %181 : vector<1x8x1xf32> to vector<1x8x8xf32>
    %183 = arith.mulf %178, %182 : vector<1x8x8xf32>
    %184 = arith.truncf %183 : vector<1x8x8xf32> to vector<1x8x8xbf16>
    "tpu.trace_start"() <{level = 10 : i32, message = "bqk,bkd->bqd"}> : () -> ()
    %cst_60 = arith.constant dense<0.000000e+00> : vector<1x8x8xf32>
    %185 = tpu.matmul %184, %172, %cst_60 {dimension_numbers = #tpu.dot_dimension_numbers<[2], [1], [1], [2], [0, 0, 0, 1, 1, 2], [0], [0]>} : vector<1x8x8xbf16>, vector<1x8x8xbf16>, vector<1x8x8xf32> -> vector<1x8x8xf32>
    "tpu.trace_stop"() : () -> ()
    %186 = vector.extract_strided_slice %151 {offsets = [0, 0, 16], sizes = [1, 8, 8], strides = [1, 1, 1]} : vector<1x8x32xbf16> to vector<1x8x8xbf16>
    %187 = vector.extract_strided_slice %152 {offsets = [0, 0, 16], sizes = [1, 8, 8], strides = [1, 1, 1]} : vector<1x8x32xbf16> to vector<1x8x8xbf16>
    %188 = vector.extract_strided_slice %153 {offsets = [0, 0, 16], sizes = [1, 8, 8], strides = [1, 1, 1]} : vector<1x8x32xbf16> to vector<1x8x8xbf16>
    "tpu.trace_start"() <{level = 10 : i32, message = "bqd,bkd->bqk"}> : () -> ()
    %cst_61 = arith.constant dense<0.000000e+00> : vector<1x8x8xf32>
    %189 = tpu.matmul %186, %187, %cst_61 {dimension_numbers = #tpu.dot_dimension_numbers<[2], [2], [1], [1], [0, 0, 0, 1, 1, 1], [0], [0]>} : vector<1x8x8xbf16>, vector<1x8x8xbf16>, vector<1x8x8xf32> -> vector<1x8x8xf32>
    "tpu.trace_stop"() : () -> ()
    %cst_62 = arith.constant dense<0xFF800000> : vector<1x8xf32>
    %190 = vector.multi_reduction <maximumf>, %189, %cst_62 [2] : vector<1x8x8xf32> to vector<1x8xf32>
    %191 = vector.shape_cast %190 : vector<1x8xf32> to vector<1x8x1xf32>
    %192 = vector.broadcast %191 : vector<1x8x1xf32> to vector<1x8x8xf32>
    %193 = arith.subf %189, %192 : vector<1x8x8xf32>
    %194 = math.exp %193 : vector<1x8x8xf32>
    %cst_63 = arith.constant dense<0.000000e+00> : vector<1x8xf32>
    %195 = vector.multi_reduction <add>, %194, %cst_63 [2] : vector<1x8x8xf32> to vector<1x8xf32>
    %196 = vector.shape_cast %195 : vector<1x8xf32> to vector<1x8x1xf32>
    %197 = tpu.reciprocal %196 {approx = true} : vector<1x8x1xf32> -> vector<1x8x1xf32>
    %198 = vector.broadcast %197 : vector<1x8x1xf32> to vector<1x8x8xf32>
    %199 = arith.mulf %194, %198 : vector<1x8x8xf32>
    %200 = arith.truncf %199 : vector<1x8x8xf32> to vector<1x8x8xbf16>
    "tpu.trace_start"() <{level = 10 : i32, message = "bqk,bkd->bqd"}> : () -> ()
    %cst_64 = arith.constant dense<0.000000e+00> : vector<1x8x8xf32>
    %201 = tpu.matmul %200, %188, %cst_64 {dimension_numbers = #tpu.dot_dimension_numbers<[2], [1], [1], [2], [0, 0, 0, 1, 1, 2], [0], [0]>} : vector<1x8x8xbf16>, vector<1x8x8xbf16>, vector<1x8x8xf32> -> vector<1x8x8xf32>
    "tpu.trace_stop"() : () -> ()
    %202 = vector.extract_strided_slice %151 {offsets = [0, 0, 24], sizes = [1, 8, 8], strides = [1, 1, 1]} : vector<1x8x32xbf16> to vector<1x8x8xbf16>
    %203 = vector.extract_strided_slice %152 {offsets = [0, 0, 24], sizes = [1, 8, 8], strides = [1, 1, 1]} : vector<1x8x32xbf16> to vector<1x8x8xbf16>
    %204 = vector.extract_strided_slice %153 {offsets = [0, 0, 24], sizes = [1, 8, 8], strides = [1, 1, 1]} : vector<1x8x32xbf16> to vector<1x8x8xbf16>
    "tpu.trace_start"() <{level = 10 : i32, message = "bqd,bkd->bqk"}> : () -> ()
    %cst_65 = arith.constant dense<0.000000e+00> : vector<1x8x8xf32>
    %205 = tpu.matmul %202, %203, %cst_65 {dimension_numbers = #tpu.dot_dimension_numbers<[2], [2], [1], [1], [0, 0, 0, 1, 1, 1], [0], [0]>} : vector<1x8x8xbf16>, vector<1x8x8xbf16>, vector<1x8x8xf32> -> vector<1x8x8xf32>
    "tpu.trace_stop"() : () -> ()
    %cst_66 = arith.constant dense<0xFF800000> : vector<1x8xf32>
    %206 = vector.multi_reduction <maximumf>, %205, %cst_66 [2] : vector<1x8x8xf32> to vector<1x8xf32>
    %207 = vector.shape_cast %206 : vector<1x8xf32> to vector<1x8x1xf32>
    %208 = vector.broadcast %207 : vector<1x8x1xf32> to vector<1x8x8xf32>
    %209 = arith.subf %205, %208 : vector<1x8x8xf32>
    %210 = math.exp %209 : vector<1x8x8xf32>
    %cst_67 = arith.constant dense<0.000000e+00> : vector<1x8xf32>
    %211 = vector.multi_reduction <add>, %210, %cst_67 [2] : vector<1x8x8xf32> to vector<1x8xf32>
    %212 = vector.shape_cast %211 : vector<1x8xf32> to vector<1x8x1xf32>
    %213 = tpu.reciprocal %212 {approx = true} : vector<1x8x1xf32> -> vector<1x8x1xf32>
    %214 = vector.broadcast %213 : vector<1x8x1xf32> to vector<1x8x8xf32>
    %215 = arith.mulf %210, %214 : vector<1x8x8xf32>
    %216 = arith.truncf %215 : vector<1x8x8xf32> to vector<1x8x8xbf16>
    "tpu.trace_start"() <{level = 10 : i32, message = "bqk,bkd->bqd"}> : () -> ()
    %cst_68 = arith.constant dense<0.000000e+00> : vector<1x8x8xf32>
    %217 = tpu.matmul %216, %204, %cst_68 {dimension_numbers = #tpu.dot_dimension_numbers<[2], [1], [1], [2], [0, 0, 0, 1, 1, 2], [0], [0]>} : vector<1x8x8xbf16>, vector<1x8x8xbf16>, vector<1x8x8xf32> -> vector<1x8x8xf32>
    "tpu.trace_stop"() : () -> ()
    %218 = tpu.concatenate %169, %185, %201, %217 in 2 : vector<1x8x8xf32>, vector<1x8x8xf32>, vector<1x8x8xf32>, vector<1x8x8xf32> -> vector<1x8x32xf32>
    %219 = vector.shape_cast %218 : vector<1x8x32xf32> to vector<8x32xf32>
    %220 = arith.truncf %219 : vector<8x32xf32> to vector<8x32xbf16>
    %c0_69 = arith.constant 0 : index
    %c0_70 = arith.constant 0 : index
    %221 = vector.load %arg13[%c0_69, %c0_70] : memref<32x32xbf16, #tpu.memory_space<vmem>>, vector<32x32xbf16>
    %cst_71 = arith.constant dense<0.000000e+00> : vector<8x32xf32>
    %222 = tpu.matmul %220, %221, %cst_71 {dimension_numbers = #tpu.dot_dimension_numbers<[1], [0], [0], [1], [0, 0, 1, 1], [], []>} : vector<8x32xbf16>, vector<32x32xbf16>, vector<8x32xf32> -> vector<8x32xf32>
    %c0_72 = arith.constant 0 : index
    %c0_73 = arith.constant 0 : index
    %223 = vector.load %arg14[%c0_72, %c0_73] : memref<1x32xf32, #tpu.memory_space<vmem>>, vector<1x32xf32>
    %224 = vector.broadcast %223 : vector<1x32xf32> to vector<8x32xf32>
    %225 = arith.addf %222, %224 : vector<8x32xf32>
    %226 = arith.addf %131, %225 : vector<8x32xf32>
    %c0_74 = arith.constant 0 : index
    %c0_75 = arith.constant 0 : index
    %227 = vector.load %arg15[%c0_74, %c0_75] : memref<1x32xf32, #tpu.memory_space<vmem>>, vector<1x32xf32>
    %c0_76 = arith.constant 0 : index
    %c0_77 = arith.constant 0 : index
    %228 = vector.load %arg16[%c0_76, %c0_77] : memref<1x32xf32, #tpu.memory_space<vmem>>, vector<1x32xf32>
    %cst_78 = arith.constant dense<0.000000e+00> : vector<8xf32>
    %229 = vector.multi_reduction <add>, %226, %cst_78 [1] : vector<8x32xf32> to vector<8xf32>
    %230 = vector.shape_cast %229 : vector<8xf32> to vector<8x1xf32>
    %cst_79 = arith.constant 3.200000e+01 : f32
    %231 = vector.broadcast %cst_79 : f32 to vector<8x1xf32>
    %232 = arith.divf %230, %231 : vector<8x1xf32>
    %233 = vector.broadcast %232 : vector<8x1xf32> to vector<8x32xf32>
    %234 = arith.subf %226, %233 : vector<8x32xf32>
    %235 = arith.mulf %234, %234 : vector<8x32xf32>
    %cst_80 = arith.constant dense<0.000000e+00> : vector<8xf32>
    %236 = vector.multi_reduction <add>, %235, %cst_80 [1] : vector<8x32xf32> to vector<8xf32>
    %237 = vector.shape_cast %236 : vector<8xf32> to vector<8x1xf32>
    %cst_81 = arith.constant 3.200000e+01 : f32
    %238 = vector.broadcast %cst_81 : f32 to vector<8x1xf32>
    %239 = arith.divf %237, %238 : vector<8x1xf32>
    %240 = vector.broadcast %232 : vector<8x1xf32> to vector<8x32xf32>
    %241 = arith.subf %226, %240 : vector<8x32xf32>
    %cst_82 = arith.constant 9.99999974E-6 : f32
    %242 = vector.broadcast %cst_82 : f32 to vector<8x1xf32>
    %243 = arith.addf %239, %242 : vector<8x1xf32>
    %244 = math.rsqrt %243 : vector<8x1xf32>
    %245 = vector.broadcast %244 : vector<8x1xf32> to vector<8x32xf32>
    %246 = arith.mulf %241, %245 : vector<8x32xf32>
    %247 = vector.broadcast %227 : vector<1x32xf32> to vector<8x32xf32>
    %248 = arith.mulf %246, %247 : vector<8x32xf32>
    %249 = vector.broadcast %228 : vector<1x32xf32> to vector<8x32xf32>
    %250 = arith.addf %248, %249 : vector<8x32xf32>
    %251 = arith.truncf %250 : vector<8x32xf32> to vector<8x32xbf16>
    %c0_83 = arith.constant 0 : index
    %c0_84 = arith.constant 0 : index
    %252 = vector.load %arg17[%c0_83, %c0_84] : memref<32x64xbf16, #tpu.memory_space<vmem>>, vector<32x64xbf16>
    %cst_85 = arith.constant dense<0.000000e+00> : vector<8x64xf32>
    %253 = tpu.matmul %251, %252, %cst_85 {dimension_numbers = #tpu.dot_dimension_numbers<[1], [0], [0], [1], [0, 0, 1, 1], [], []>} : vector<8x32xbf16>, vector<32x64xbf16>, vector<8x64xf32> -> vector<8x64xf32>
    %c0_86 = arith.constant 0 : index
    %c0_87 = arith.constant 0 : index
    %254 = vector.load %arg18[%c0_86, %c0_87] : memref<1x64xf32, #tpu.memory_space<vmem>>, vector<1x64xf32>
    %255 = vector.broadcast %254 : vector<1x64xf32> to vector<8x64xf32>
    %256 = arith.addf %253, %255 : vector<8x64xf32>
    %cst_88 = arith.constant 0.000000e+00 : f32
    %257 = vector.broadcast %cst_88 : f32 to vector<8x64xf32>
    %258 = arith.maximumf %256, %257 : vector<8x64xf32>
    %259 = arith.truncf %258 : vector<8x64xf32> to vector<8x64xbf16>
    %c0_89 = arith.constant 0 : index
    %c0_90 = arith.constant 0 : index
    %260 = vector.load %arg19[%c0_89, %c0_90] : memref<64x32xbf16, #tpu.memory_space<vmem>>, vector<64x32xbf16>
    %cst_91 = arith.constant dense<0.000000e+00> : vector<8x32xf32>
    %261 = tpu.matmul %259, %260, %cst_91 {dimension_numbers = #tpu.dot_dimension_numbers<[1], [0], [0], [1], [0, 0, 1, 1], [], []>} : vector<8x64xbf16>, vector<64x32xbf16>, vector<8x32xf32> -> vector<8x32xf32>
    %c0_92 = arith.constant 0 : index
    %c0_93 = arith.constant 0 : index
    %262 = vector.load %arg20[%c0_92, %c0_93] : memref<1x32xf32, #tpu.memory_space<vmem>>, vector<1x32xf32>
    %263 = vector.broadcast %262 : vector<1x32xf32> to vector<8x32xf32>
    %264 = arith.addf %261, %263 : vector<8x32xf32>
    %265 = arith.addf %250, %264 : vector<8x32xf32>
    %c0_94 = arith.constant 0 : index
    %c0_95 = arith.constant 0 : index
    %266 = vector.load %arg21[%c0_94, %c0_95] : memref<1x32xf32, #tpu.memory_space<vmem>>, vector<1x32xf32>
    %c0_96 = arith.constant 0 : index
    %c0_97 = arith.constant 0 : index
    %267 = vector.load %arg22[%c0_96, %c0_97] : memref<1x32xf32, #tpu.memory_space<vmem>>, vector<1x32xf32>
    %cst_98 = arith.constant dense<0.000000e+00> : vector<8xf32>
    %268 = vector.multi_reduction <add>, %265, %cst_98 [1] : vector<8x32xf32> to vector<8xf32>
    %269 = vector.shape_cast %268 : vector<8xf32> to vector<8x1xf32>
    %cst_99 = arith.constant 3.200000e+01 : f32
    %270 = vector.broadcast %cst_99 : f32 to vector<8x1xf32>
    %271 = arith.divf %269, %270 : vector<8x1xf32>
    %272 = vector.broadcast %271 : vector<8x1xf32> to vector<8x32xf32>
    %273 = arith.subf %265, %272 : vector<8x32xf32>
    %274 = arith.mulf %273, %273 : vector<8x32xf32>
    %cst_100 = arith.constant dense<0.000000e+00> : vector<8xf32>
    %275 = vector.multi_reduction <add>, %274, %cst_100 [1] : vector<8x32xf32> to vector<8xf32>
    %276 = vector.shape_cast %275 : vector<8xf32> to vector<8x1xf32>
    %cst_101 = arith.constant 3.200000e+01 : f32
    %277 = vector.broadcast %cst_101 : f32 to vector<8x1xf32>
    %278 = arith.divf %276, %277 : vector<8x1xf32>
    %279 = vector.broadcast %271 : vector<8x1xf32> to vector<8x32xf32>
    %280 = arith.subf %265, %279 : vector<8x32xf32>
    %cst_102 = arith.constant 9.99999974E-6 : f32
    %281 = vector.broadcast %cst_102 : f32 to vector<8x1xf32>
    %282 = arith.addf %278, %281 : vector<8x1xf32>
    %283 = math.rsqrt %282 : vector<8x1xf32>
    %284 = vector.broadcast %283 : vector<8x1xf32> to vector<8x32xf32>
    %285 = arith.mulf %280, %284 : vector<8x32xf32>
    %286 = vector.broadcast %266 : vector<1x32xf32> to vector<8x32xf32>
    %287 = arith.mulf %285, %286 : vector<8x32xf32>
    %288 = vector.broadcast %267 : vector<1x32xf32> to vector<8x32xf32>
    %289 = arith.addf %287, %288 : vector<8x32xf32>
    %290 = vector.shape_cast %289 : vector<8x32xf32> to vector<1x8x32xf32>
    %c0_103 = arith.constant 0 : index
    %c0_104 = arith.constant 0 : index
    %c0_105 = arith.constant 0 : index
    %291 = vector.load %arg23[%c0_103, %c0_104, %c0_105] : memref<1x8x32xf32, #tpu.memory_space<vmem>>, vector<1x8x32xf32>
    tpu.vector_store %arg23[%c0_103, %c0_104, %c0_105], %290 {strides = array<i32>} : memref<1x8x32xf32, #tpu.memory_space<vmem>>, vector<1x8x32xf32>,
    return
  }
  func.func @transform_0(%arg0: i32) -> (i32, i32, i32) {
    %c0_i32 = arith.constant 0 : i32
    %c0_i32_0 = arith.constant 0 : i32
    %c0_i32_1 = arith.constant 0 : i32
    return %arg0, %c0_i32, %c0_i32_0 : i32, i32, i32
  }
  func.func @transform_1(%arg0: i32) -> (i32, i32, i32) {
    %c0_i32 = arith.constant 0 : i32
    %c0_i32_0 = arith.constant 0 : i32
    %c0_i32_1 = arith.constant 0 : i32
    return %arg0, %c0_i32, %c0_i32_0 : i32, i32, i32
  }
  func.func @transform_2(%arg0: i32) -> (i32, i32) {
    %c0_i32 = arith.constant 0 : i32
    %c0_i32_0 = arith.constant 0 : i32
    %c0_i32_1 = arith.constant 0 : i32
    return %c0_i32, %c0_i32_0 : i32, i32
  }
  func.func @transform_3(%arg0: i32) -> (i32, i32) {
    %c0_i32 = arith.constant 0 : i32
    %c0_i32_0 = arith.constant 0 : i32
    %c0_i32_1 = arith.constant 0 : i32
    return %c0_i32, %c0_i32_0 : i32, i32
  }
  func.func @transform_4(%arg0: i32) -> (i32, i32) {
    %c0_i32 = arith.constant 0 : i32
    %c0_i32_0 = arith.constant 0 : i32
    %c0_i32_1 = arith.constant 0 : i32
    return %c0_i32, %c0_i32_0 : i32, i32
  }
  func.func @transform_5(%arg0: i32) -> (i32, i32) {
    %c0_i32 = arith.constant 0 : i32
    %c0_i32_0 = arith.constant 0 : i32
    %c0_i32_1 = arith.constant 0 : i32
    return %c0_i32, %c0_i32_0 : i32, i32
  }
  func.func @transform_6(%arg0: i32) -> (i32, i32) {
    %c0_i32 = arith.constant 0 : i32
    %c0_i32_0 = arith.constant 0 : i32
    %c0_i32_1 = arith.constant 0 : i32
    return %c0_i32, %c0_i32_0 : i32, i32
  }
  func.func @transform_7(%arg0: i32) -> (i32, i32) {
    %c0_i32 = arith.constant 0 : i32
    %c0_i32_0 = arith.constant 0 : i32
    %c0_i32_1 = arith.constant 0 : i32
    return %c0_i32, %c0_i32_0 : i32, i32
  }
  func.func @transform_8(%arg0: i32) -> (i32, i32) {
    %c0_i32 = arith.constant 0 : i32
    %c0_i32_0 = arith.constant 0 : i32
    %c0_i32_1 = arith.constant 0 : i32
    return %c0_i32, %c0_i32_0 : i32, i32
  }
  func.func @transform_9(%arg0: i32) -> (i32, i32) {
    %c0_i32 = arith.constant 0 : i32
    %c0_i32_0 = arith.constant 0 : i32
    %c0_i32_1 = arith.constant 0 : i32
    return %c0_i32, %c0_i32_0 : i32, i32
  }
  func.func @transform_10(%arg0: i32) -> (i32, i32) {
    %c0_i32 = arith.constant 0 : i32
    %c0_i32_0 = arith.constant 0 : i32
    %c0_i32_1 = arith.constant 0 : i32
    return %c0_i32, %c0_i32_0 : i32, i32
  }
  func.func @transform_11(%arg0: i32) -> (i32, i32) {
    %c0_i32 = arith.constant 0 : i32
    %c0_i32_0 = arith.constant 0 : i32
    %c0_i32_1 = arith.constant 0 : i32
    return %c0_i32, %c0_i32_0 : i32, i32
  }
  func.func @transform_12(%arg0: i32) -> (i32, i32) {
    %c0_i32 = arith.constant 0 : i32
    %c0_i32_0 = arith.constant 0 : i32
    %c0_i32_1 = arith.constant 0 : i32
    return %c0_i32, %c0_i32_0 : i32, i32
  }
  func.func @transform_13(%arg0: i32) -> (i32, i32) {
    %c0_i32 = arith.constant 0 : i32
    %c0_i32_0 = arith.constant 0 : i32
    %c0_i32_1 = arith.constant 0 : i32
    return %c0_i32, %c0_i32_0 : i32, i32
  }
  func.func @transform_14(%arg0: i32) -> (i32, i32) {
    %c0_i32 = arith.constant 0 : i32
    %c0_i32_0 = arith.constant 0 : i32
    %c0_i32_1 = arith.constant 0 : i32
    return %c0_i32, %c0_i32_0 : i32, i32
  }
  func.func @transform_15(%arg0: i32) -> (i32, i32) {
    %c0_i32 = arith.constant 0 : i32
    %c0_i32_0 = arith.constant 0 : i32
    %c0_i32_1 = arith.constant 0 : i32
    return %c0_i32, %c0_i32_0 : i32, i32
  }
  func.func @transform_16(%arg0: i32) -> (i32, i32) {
    %c0_i32 = arith.constant 0 : i32
    %c0_i32_0 = arith.constant 0 : i32
    %c0_i32_1 = arith.constant 0 : i32
    return %c0_i32, %c0_i32_0 : i32, i32
  }
  func.func @transform_17(%arg0: i32) -> (i32, i32) {
    %c0_i32 = arith.constant 0 : i32
    %c0_i32_0 = arith.constant 0 : i32
    %c0_i32_1 = arith.constant 0 : i32
    return %c0_i32, %c0_i32_0 : i32, i32
  }
  func.func @transform_18(%arg0: i32) -> (i32, i32) {
    %c0_i32 = arith.constant 0 : i32
    %c0_i32_0 = arith.constant 0 : i32
    %c0_i32_1 = arith.constant 0 : i32
    return %c0_i32, %c0_i32_0 : i32, i32
  }
  func.func @transform_19(%arg0: i32) -> (i32, i32) {
    %c0_i32 = arith.constant 0 : i32
    %c0_i32_0 = arith.constant 0 : i32
    %c0_i32_1 = arith.constant 0 : i32
    return %c0_i32, %c0_i32_0 : i32, i32
  }
  func.func @transform_20(%arg0: i32) -> (i32, i32) {
    %c0_i32 = arith.constant 0 : i32
    %c0_i32_0 = arith.constant 0 : i32
    %c0_i32_1 = arith.constant 0 : i32
    return %c0_i32, %c0_i32_0 : i32, i32
  }
  func.func @transform_21(%arg0: i32) -> (i32, i32) {
    %c0_i32 = arith.constant 0 : i32
    %c0_i32_0 = arith.constant 0 : i32
    %c0_i32_1 = arith.constant 0 : i32
    return %c0_i32, %c0_i32_0 : i32, i32
  }
  func.func @transform_22(%arg0: i32) -> (i32, i32, i32) {
    %c0_i32 = arith.constant 0 : i32
    %c0_i32_0 = arith.constant 0 : i32
    %c0_i32_1 = arith.constant 0 : i32
    return %arg0, %c0_i32, %c0_i32_0 : i32, i32, i32
  }
}

</mosaic_0001>

<llo_original>
// kernel: transformer_block_forward.3
$region0: #{transformer_block_forward.3}
  #allocation0 [shape = 'u32[]', space=smem, size = 0x4, offset = 0x4, fixed_abs, tag = 'smem constant byte address 0x4 - core index']
  #allocation1 [shape = 'u32[144,128]{1,0:T(1,128)}', space=vmem, size = 0x12000, scoped, tag = 'internal scratch']
  %s0 = inlined_call_operand.vmem [shape: f32[2,8,32], index: 0, kind: input, shape index: {}]
  %s1 = inlined_call_operand.vmem [shape: bf16[32,96], index: 1, kind: input, shape index: {}]
  %s2 = inlined_call_operand.vmem [shape: f32[1,96], index: 2, kind: input, shape index: {}]
  %s3 = inlined_call_operand.vmem [shape: bf16[32,32], index: 3, kind: input, shape index: {}]
  %s4 = inlined_call_operand.vmem [shape: f32[1,32], index: 4, kind: input, shape index: {}]
  %s5 = inlined_call_operand.vmem [shape: f32[1,32], index: 5, kind: input, shape index: {}]
  %s6 = inlined_call_operand.vmem [shape: f32[1,32], index: 6, kind: input, shape index: {}]
  %s7 = inlined_call_operand.vmem [shape: bf16[32,64], index: 7, kind: input, shape index: {}]
  %s8 = inlined_call_operand.vmem [shape: f32[1,64], index: 8, kind: input, shape index: {}]
  %s9 = inlined_call_operand.vmem [shape: bf16[64,32], index: 9, kind: input, shape index: {}]
  %s10 = inlined_call_operand.vmem [shape: f32[1,32], index: 10, kind: input, shape index: {}]
  %s11 = inlined_call_operand.vmem [shape: f32[1,32], index: 11, kind: input, shape index: {}]
  %s12 = inlined_call_operand.vmem [shape: f32[1,32], index: 12, kind: input, shape index: {}]
  %s13 = inlined_call_operand.vmem [shape: f32[2,8,32], index: 13, kind: output, shape index: {}]
  %s14 = sld [smem:[#allocation0]]
  $region85: #{transformer_block_forward.3} parent=0
    _
  %s16 = ssub.s32 1, %s14
  %s17 = scalar_select 0, %s16, %s14
  loop: start=0, step=1, limit=4
  $region2: #{transformer_block_forward.3} parent=0 // loop_pre_header
    _
  $region3: #{transformer_block_forward.3} parent=0 // loop_header
    %s19 = sphi 0, %s23
    %p20 = scmp.ge.s32.totalorder %s19, 4
    %s29 = sphi 0, %s31
    %s32 = sphi 0, %s29
    %s33 = sphi 0, %s32
    %s49 = sphi 0, %s33
    %s53 = sphi 0, %s53
    %s55 = sphi 0, %s53
    %s56 = sphi 0, %s55
    %s70 = sphi 0, %s56
    %s74 = sphi 0, %s74
    %s76 = sphi 0, %s74
    %s77 = sphi 0, %s76
    %s91 = sphi 0, %s77
    %s95 = sphi 0, %s95
    %s97 = sphi 0, %s95
    %s98 = sphi 0, %s97
    %s112 = sphi 0, %s98
    %s116 = sphi 0, %s116
    %s118 = sphi 0, %s116
    %s119 = sphi 0, %s118
    %s133 = sphi 0, %s119
    %s137 = sphi 0, %s137
    %s139 = sphi 0, %s137
    %s140 = sphi 0, %s139
    %s154 = sphi 0, %s140
    %s158 = sphi 0, %s158
    %s160 = sphi 0, %s158
    %s161 = sphi 0, %s160
    %s175 = sphi 0, %s161
    %s179 = sphi 0, %s179
    %s181 = sphi 0, %s179
    %s182 = sphi 0, %s181
    %s196 = sphi 0, %s182
    %s200 = sphi 0, %s200
    %s202 = sphi 0, %s200
    %s203 = sphi 0, %s202
    %s217 = sphi 0, %s203
    %s221 = sphi 0, %s221
    %s223 = sphi 0, %s221
    %s224 = sphi 0, %s223
    %s238 = sphi 0, %s224
    %s242 = sphi 0, %s242
    %s244 = sphi 0, %s242
    %s245 = sphi 0, %s244
    %s259 = sphi 0, %s245
    %s263 = sphi 0, %s263
    %s265 = sphi 0, %s263
    %s266 = sphi 0, %s265
    %s280 = sphi 0, %s266
    %s284 = sphi 0, %s284
    %s286 = sphi 0, %s284
    %s287 = sphi 0, %s286
    %s301 = sphi 0, %s287
    %s307 = sphi 0, %s309
    %s310 = sphi 0, %s307
    %s311 = sphi 0, %s310
    %s327 = sphi 0, %s311
  $region4: #{transformer_block_forward.3} parent=0 // loop_header_branch
    %22 = sbr.rel (%p20) target = $region8
  $region5: #{transformer_block_forward.3} parent=0 // loop_body
    %s24 = ssub.s32 %s19, 1
    %s25 = ssub.s32 %s19, 2
    %s26 = sadd.s32 %s19, 1
    %s27 = ssub.s32 %s19, %s26
    %p28 = scmp.eq.s32.totalorder %s27, 0
    %s30 = sadd.s32 %s29, 1
    %s31 = scalar_select %p28, %s29, %s30
    %p34 = pneg %p28
    %p35 = scmp.eq.s32.totalorder %s19, 1
    %p36 = por %p34, %p35
    %p37 = scmp.ne.s32.totalorder %s29, %s32
    %p38 = scmp.eq.s32.totalorder %s19, 0
    %p39 = por %p37, %p38
    %p40 = scmp.ne.s32.totalorder %s29, %s32
    %p41 = scmp.eq.s32.totalorder %s24, 1
    %p42 = por %p40, %p41
    %p43 = scmp.ne.s32.totalorder %s32, %s33
    %p44 = scmp.eq.s32.totalorder %s24, 0
    %p45 = por %p43, %p44
    %p46 = scmp.ne.s32.totalorder %s32, %s33
    %p47 = scmp.eq.s32.totalorder %s25, 1
    %p48 = por %p46, %p47
    %p50 = scmp.ne.s32.totalorder %s33, %s49
    %p51 = scmp.eq.s32.totalorder %s25, 0
    %p52 = por %p50, %p51
    %s54 = sadd.s32 %s53, 1
    %p57 = scmp.eq.s32.totalorder %s19, 1
    %p58 = scmp.ne.s32.totalorder %s53, %s55
    %p59 = scmp.eq.s32.totalorder %s19, 0
    %p60 = por %p58, %p59
    %p61 = scmp.ne.s32.totalorder %s53, %s55
    %p62 = scmp.eq.s32.totalorder %s24, 1
    %p63 = por %p61, %p62
    %p64 = scmp.ne.s32.totalorder %s55, %s56
    %p65 = scmp.eq.s32.totalorder %s24, 0
    %p66 = por %p64, %p65
    %p67 = scmp.ne.s32.totalorder %s55, %s56
    %p68 = scmp.eq.s32.totalorder %s25, 1
    %p69 = por %p67, %p68
    %p71 = scmp.ne.s32.totalorder %s56, %s70
    %p72 = scmp.eq.s32.totalorder %s25, 0
    %p73 = por %p71, %p72
    %s75 = sadd.s32 %s74, 1
    %p78 = scmp.eq.s32.totalorder %s19, 1
    %p79 = scmp.ne.s32.totalorder %s74, %s76
    %p80 = scmp.eq.s32.totalorder %s19, 0
    %p81 = por %p79, %p80
    %p82 = scmp.ne.s32.totalorder %s74, %s76
    %p83 = scmp.eq.s32.totalorder %s24, 1
    %p84 = por %p82, %p83
    %p85 = scmp.ne.s32.totalorder %s76, %s77
    %p86 = scmp.eq.s32.totalorder %s24, 0
    %p87 = por %p85, %p86
    %p88 = scmp.ne.s32.totalorder %s76, %s77
    %p89 = scmp.eq.s32.totalorder %s25, 1
    %p90 = por %p88, %p89
    %p92 = scmp.ne.s32.totalorder %s77, %s91
    %p93 = scmp.eq.s32.totalorder %s25, 0
    %p94 = por %p92, %p93
    %s96 = sadd.s32 %s95, 1
    %p99 = scmp.eq.s32.totalorder %s19, 1
    %p100 = scmp.ne.s32.totalorder %s95, %s97
    %p101 = scmp.eq.s32.totalorder %s19, 0
    %p102 = por %p100, %p101
    %p103 = scmp.ne.s32.totalorder %s95, %s97
    %p104 = scmp.eq.s32.totalorder %s24, 1
    %p105 = por %p103, %p104
    %p106 = scmp.ne.s32.totalorder %s97, %s98
    %p107 = scmp.eq.s32.totalorder %s24, 0
    %p108 = por %p106, %p107
    %p109 = scmp.ne.s32.totalorder %s97, %s98
    %p110 = scmp.eq.s32.totalorder %s25, 1
    %p111 = por %p109, %p110
    %p113 = scmp.ne.s32.totalorder %s98, %s112
    %p114 = scmp.eq.s32.totalorder %s25, 0
    %p115 = por %p113, %p114
    %s117 = sadd.s32 %s116, 1
    %p120 = scmp.eq.s32.totalorder %s19, 1
    %p121 = scmp.ne.s32.totalorder %s116, %s118
    %p122 = scmp.eq.s32.totalorder %s19, 0
    %p123 = por %p121, %p122
    %p124 = scmp.ne.s32.totalorder %s116, %s118
    %p125 = scmp.eq.s32.totalorder %s24, 1
    %p126 = por %p124, %p125
    %p127 = scmp.ne.s32.totalorder %s118, %s119
    %p128 = scmp.eq.s32.totalorder %s24, 0
    %p129 = por %p127, %p128
    %p130 = scmp.ne.s32.totalorder %s118, %s119
    %p131 = scmp.eq.s32.totalorder %s25, 1
    %p132 = por %p130, %p131
    %p134 = scmp.ne.s32.totalorder %s119, %s133
    %p135 = scmp.eq.s32.totalorder %s25, 0
    %p136 = por %p134, %p135
    %s138 = sadd.s32 %s137, 1
    %p141 = scmp.eq.s32.totalorder %s19, 1
    %p142 = scmp.ne.s32.totalorder %s137, %s139
    %p143 = scmp.eq.s32.totalorder %s19, 0
    %p144 = por %p142, %p143
    %p145 = scmp.ne.s32.totalorder %s137, %s139
    %p146 = scmp.eq.s32.totalorder %s24, 1
    %p147 = por %p145, %p146
    %p148 = scmp.ne.s32.totalorder %s139, %s140
    %p149 = scmp.eq.s32.totalorder %s24, 0
    %p150 = por %p148, %p149
    %p151 = scmp.ne.s32.totalorder %s139, %s140
    %p152 = scmp.eq.s32.totalorder %s25, 1
    %p153 = por %p151, %p152
    %p155 = scmp.ne.s32.totalorder %s140, %s154
    %p156 = scmp.eq.s32.totalorder %s25, 0
    %p157 = por %p155, %p156
    %s159 = sadd.s32 %s158, 1
    %p162 = scmp.eq.s32.totalorder %s19, 1
    %p163 = scmp.ne.s32.totalorder %s158, %s160
    %p164 = scmp.eq.s32.totalorder %s19, 0
    %p165 = por %p163, %p164
    %p166 = scmp.ne.s32.totalorder %s158, %s160
    %p167 = scmp.eq.s32.totalorder %s24, 1
    %p168 = por %p166, %p167
    %p169 = scmp.ne.s32.totalorder %s160, %s161
    %p170 = scmp.eq.s32.totalorder %s24, 0
    %p171 = por %p169, %p170
    %p172 = scmp.ne.s32.totalorder %s160, %s161
    %p173 = scmp.eq.s32.totalorder %s25, 1
    %p174 = por %p172, %p173
    %p176 = scmp.ne.s32.totalorder %s161, %s175
    %p177 = scmp.eq.s32.totalorder %s25, 0
    %p178 = por %p176, %p177
    %s180 = sadd.s32 %s179, 1
    %p183 = scmp.eq.s32.totalorder %s19, 1
    %p184 = scmp.ne.s32.totalorder %s179, %s181
    %p185 = scmp.eq.s32.totalorder %s19, 0
    %p186 = por %p184, %p185
    %p187 = scmp.ne.s32.totalorder %s179, %s181
    %p188 = scmp.eq.s32.totalorder %s24, 1
    %p189 = por %p187, %p188
    %p190 = scmp.ne.s32.totalorder %s181, %s182
    %p191 = scmp.eq.s32.totalorder %s24, 0
    %p192 = por %p190, %p191
    %p193 = scmp.ne.s32.totalorder %s181, %s182
    %p194 = scmp.eq.s32.totalorder %s25, 1
    %p195 = por %p193, %p194
    %p197 = scmp.ne.s32.totalorder %s182, %s196
    %p198 = scmp.eq.s32.totalorder %s25, 0
    %p199 = por %p197, %p198
    %s201 = sadd.s32 %s200, 1
    %p204 = scmp.eq.s32.totalorder %s19, 1
    %p205 = scmp.ne.s32.totalorder %s200, %s202
    %p206 = scmp.eq.s32.totalorder %s19, 0
    %p207 = por %p205, %p206
    %p208 = scmp.ne.s32.totalorder %s200, %s202
    %p209 = scmp.eq.s32.totalorder %s24, 1
    %p210 = por %p208, %p209
    %p211 = scmp.ne.s32.totalorder %s202, %s203
    %p212 = scmp.eq.s32.totalorder %s24, 0
    %p213 = por %p211, %p212
    %p214 = scmp.ne.s32.totalorder %s202, %s203
    %p215 = scmp.eq.s32.totalorder %s25, 1
    %p216 = por %p214, %p215
    %p218 = scmp.ne.s32.totalorder %s203, %s217
    %p219 = scmp.eq.s32.totalorder %s25, 0
    %p220 = por %p218, %p219
    %s222 = sadd.s32 %s221, 1
    %p225 = scmp.eq.s32.totalorder %s19, 1
    %p226 = scmp.ne.s32.totalorder %s221, %s223
    %p227 = scmp.eq.s32.totalorder %s19, 0
    %p228 = por %p226, %p227
    %p229 = scmp.ne.s32.totalorder %s221, %s223
    %p230 = scmp.eq.s32.totalorder %s24, 1
    %p231 = por %p229, %p230
    %p232 = scmp.ne.s32.totalorder %s223, %s224
    %p233 = scmp.eq.s32.totalorder %s24, 0
    %p234 = por %p232, %p233
    %p235 = scmp.ne.s32.totalorder %s223, %s224
    %p236 = scmp.eq.s32.totalorder %s25, 1
    %p237 = por %p235, %p236
    %p239 = scmp.ne.s32.totalorder %s224, %s238
    %p240 = scmp.eq.s32.totalorder %s25, 0
    %p241 = por %p239, %p240
    %s243 = sadd.s32 %s242, 1
    %p246 = scmp.eq.s32.totalorder %s19, 1
    %p247 = scmp.ne.s32.totalorder %s242, %s244
    %p248 = scmp.eq.s32.totalorder %s19, 0
    %p249 = por %p247, %p248
    %p250 = scmp.ne.s32.totalorder %s242, %s244
    %p251 = scmp.eq.s32.totalorder %s24, 1
    %p252 = por %p250, %p251
    %p253 = scmp.ne.s32.totalorder %s244, %s245
    %p254 = scmp.eq.s32.totalorder %s24, 0
    %p255 = por %p253, %p254
    %p256 = scmp.ne.s32.totalorder %s244, %s245
    %p257 = scmp.eq.s32.totalorder %s25, 1
    %p258 = por %p256, %p257
    %p260 = scmp.ne.s32.totalorder %s245, %s259
    %p261 = scmp.eq.s32.totalorder %s25, 0
    %p262 = por %p260, %p261
    %s264 = sadd.s32 %s263, 1
    %p267 = scmp.eq.s32.totalorder %s19, 1
    %p268 = scmp.ne.s32.totalorder %s263, %s265
    %p269 = scmp.eq.s32.totalorder %s19, 0
    %p270 = por %p268, %p269
    %p271 = scmp.ne.s32.totalorder %s263, %s265
    %p272 = scmp.eq.s32.totalorder %s24, 1
    %p273 = por %p271, %p272
    %p274 = scmp.ne.s32.totalorder %s265, %s266
    %p275 = scmp.eq.s32.totalorder %s24, 0
    %p276 = por %p274, %p275
    %p277 = scmp.ne.s32.totalorder %s265, %s266
    %p278 = scmp.eq.s32.totalorder %s25, 1
    %p279 = por %p277, %p278
    %p281 = scmp.ne.s32.totalorder %s266, %s280
    %p282 = scmp.eq.s32.totalorder %s25, 0
    %p283 = por %p281, %p282
    %s285 = sadd.s32 %s284, 1
    %p288 = scmp.eq.s32.totalorder %s19, 1
    %p289 = scmp.ne.s32.totalorder %s284, %s286
    %p290 = scmp.eq.s32.totalorder %s19, 0
    %p291 = por %p289, %p290
    %p292 = scmp.ne.s32.totalorder %s284, %s286
    %p293 = scmp.eq.s32.totalorder %s24, 1
    %p294 = por %p292, %p293
    %p295 = scmp.ne.s32.totalorder %s286, %s287
    %p296 = scmp.eq.s32.totalorder %s24, 0
    %p297 = por %p295, %p296
    %p298 = scmp.ne.s32.totalorder %s286, %s287
    %p299 = scmp.eq.s32.totalorder %s25, 1
    %p300 = por %p298, %p299
    %p302 = scmp.ne.s32.totalorder %s287, %s301
    %p303 = scmp.eq.s32.totalorder %s25, 0
    %p304 = por %p302, %p303
    %s305 = ssub.s32 %s19, %s26
    %p306 = scmp.eq.s32.totalorder %s305, 0
    %s308 = sadd.s32 %s307, 1
    %s309 = scalar_select %p306, %s307, %s308
    %p312 = pneg %p306
    %p313 = scmp.eq.s32.totalorder %s19, 1
    %p314 = por %p312, %p313
    %p315 = scmp.ne.s32.totalorder %s307, %s310
    %p316 = scmp.eq.s32.totalorder %s19, 0
    %p317 = por %p315, %p316
    %p318 = scmp.ne.s32.totalorder %s307, %s310
    %p319 = scmp.eq.s32.totalorder %s24, 1
    %p320 = por %p318, %p319
    %p321 = scmp.ne.s32.totalorder %s310, %s311
    %p322 = scmp.eq.s32.totalorder %s24, 0
    %p323 = por %p321, %p322
    %p324 = scmp.ne.s32.totalorder %s310, %s311
    %p325 = scmp.eq.s32.totalorder %s25, 1
    %p326 = por %p324, %p325
    %p328 = scmp.ne.s32.totalorder %s311, %s327
    %p329 = scmp.eq.s32.totalorder %s25, 0
    %p330 = por %p328, %p329
    %p331 = scmp.le.s32.totalorder 1, %s19
    %p332 = scmp.lt.s32.totalorder %s19, 3
    %p333 = pnand %p331, %p332
    %p334 = pneg %p333
    // Predicated region
    $region9: #{transformer_block_forward.3} parent=5 // pred_check
      _
    $region10: #{transformer_block_forward.3} parent=5 // pred_check_branch
      %336 = sbr.rel (%p333) target = $region12
    $region11: #{transformer_block_forward.3} parent=5 // pred_region
      %s337 = ssub.s32 %s19, 1
      // Predicated region
      $region13: #{transformer_block_forward.3} parent=11 // pred_check
        %p338 = pneg %p66
      $region14: #{transformer_block_forward.3} parent=11 // pred_check_branch
        %340 = sbr.rel (%p338) target = $region16
      $region15: #{transformer_block_forward.3} parent=11 // pred_region
        _
      $region16: #{transformer_block_forward.3} parent=11 // pred_fallthru
        _
      // Predicated region
      $region17: #{transformer_block_forward.3} parent=11 // pred_check
        %p341 = pneg %p87
      $region18: #{transformer_block_forward.3} parent=11 // pred_check_branch
        %343 = sbr.rel (%p341) target = $region20
      $region19: #{transformer_block_forward.3} parent=11 // pred_region
        _
      $region20: #{transformer_block_forward.3} parent=11 // pred_fallthru
        _
      // Predicated region
      $region21: #{transformer_block_forward.3} parent=11 // pred_check
        %p344 = pneg %p108
      $region22: #{transformer_block_forward.3} parent=11 // pred_check_branch
        %346 = sbr.rel (%p344) target = $region24
      $region23: #{transformer_block_forward.3} parent=11 // pred_region
        _
      $region24: #{transformer_block_forward.3} parent=11 // pred_fallthru
        _
      // Predicated region
      $region25: #{transformer_block_forward.3} parent=11 // pred_check
        %p347 = pneg %p129
      $region26: #{transformer_block_forward.3} parent=11 // pred_check_branch
        %349 = sbr.rel (%p347) target = $region28
      $region27: #{transformer_block_forward.3} parent=11 // pred_region
        _
      $region28: #{transformer_block_forward.3} parent=11 // pred_fallthru
        _
      // Predicated region
      $region29: #{transformer_block_forward.3} parent=11 // pred_check
        %p350 = pneg %p150
      $region30: #{transformer_block_forward.3} parent=11 // pred_check_branch
        %352 = sbr.rel (%p350) target = $region32
      $region31: #{transformer_block_forward.3} parent=11 // pred_region
        _
      $region32: #{transformer_block_forward.3} parent=11 // pred_fallthru
        _
      // Predicated region
      $region33: #{transformer_block_forward.3} parent=11 // pred_check
        %p353 = pneg %p171
      $region34: #{transformer_block_forward.3} parent=11 // pred_check_branch
        %355 = sbr.rel (%p353) target = $region36
      $region35: #{transformer_block_forward.3} parent=11 // pred_region
        _
      $region36: #{transformer_block_forward.3} parent=11 // pred_fallthru
        _
      // Predicated region
      $region37: #{transformer_block_forward.3} parent=11 // pred_check
        %p356 = pneg %p192
      $region38: #{transformer_block_forward.3} parent=11 // pred_check_branch
        %358 = sbr.rel (%p356) target = $region40
      $region39: #{transformer_block_forward.3} parent=11 // pred_region
        _
      $region40: #{transformer_block_forward.3} parent=11 // pred_fallthru
        _
      // Predicated region
      $region41: #{transformer_block_forward.3} parent=11 // pred_check
        %p359 = pneg %p213
      $region42: #{transformer_block_forward.3} parent=11 // pred_check_branch
        %361 = sbr.rel (%p359) target = $region44
      $region43: #{transformer_block_forward.3} parent=11 // pred_region
        _
      $region44: #{transformer_block_forward.3} parent=11 // pred_fallthru
        _
      // Predicated region
      $region45: #{transformer_block_forward.3} parent=11 // pred_check
        %p362 = pneg %p234
      $region46: #{transformer_block_forward.3} parent=11 // pred_check_branch
        %364 = sbr.rel (%p362) target = $region48
      $region47: #{transformer_block_forward.3} parent=11 // pred_region
        _
      $region48: #{transformer_block_forward.3} parent=11 // pred_fallthru
        _
      // Predicated region
      $region49: #{transformer_block_forward.3} parent=11 // pred_check
        %p365 = pneg %p255
      $region50: #{transformer_block_forward.3} parent=11 // pred_check_branch
        %367 = sbr.rel (%p365) target = $region52
      $region51: #{transformer_block_forward.3} parent=11 // pred_region
        _
      $region52: #{transformer_block_forward.3} parent=11 // pred_fallthru
        _
      // Predicated region
      $region53: #{transformer_block_forward.3} parent=11 // pred_check
        %p368 = pneg %p276
      $region54: #{transformer_block_forward.3} parent=11 // pred_check_branch
        %370 = sbr.rel (%p368) target = $region56
      $region55: #{transformer_block_forward.3} parent=11 // pred_region
        _
      $region56: #{transformer_block_forward.3} parent=11 // pred_fallthru
        _
      // Predicated region
      $region57: #{transformer_block_forward.3} parent=11 // pred_check
        %p371 = pneg %p297
      $region58: #{transformer_block_forward.3} parent=11 // pred_check_branch
        %373 = sbr.rel (%p371) target = $region60
      $region59: #{transformer_block_forward.3} parent=11 // pred_region
        _
      $region60: #{transformer_block_forward.3} parent=11 // pred_fallthru
        _
    $region12: #{transformer_block_forward.3} parent=5 // pred_fallthru
      _
    %p374 = scmp.lt.s32.totalorder %s19, 2
    // Predicated region
    $region61: #{transformer_block_forward.3} parent=5 // pred_check
      %p375 = pneg %p374
    $region62: #{transformer_block_forward.3} parent=5 // pred_check_branch
      %377 = sbr.rel (%p375) target = $region64
    $region63: #{transformer_block_forward.3} parent=5 // pred_region
      // Predicated region
      $region65: #{transformer_block_forward.3} parent=63 // pred_check
        %p378 = pneg %p39
      $region66: #{transformer_block_forward.3} parent=63 // pred_check_branch
        %380 = sbr.rel (%p378) target = $region68
      $region67: #{transformer_block_forward.3} parent=63 // pred_region
        %p381 = scmp.lt.s32.totalorder %s19, 1
        %s382 = scalar_select %p381, %s19, 1
        %s383 = smul.addr %s382, 8
        %s384 = scalar_lea.vmem %s0, %s383
      $region68: #{transformer_block_forward.3} parent=63 // pred_fallthru
        _
    $region64: #{transformer_block_forward.3} parent=5 // pred_fallthru
      _
    %p385 = scmp.le.s32.totalorder 1, %s19
    %p386 = scmp.lt.s32.totalorder %s19, 3
    %p387 = pnand %p385, %p386
    %p388 = pneg %p387
    // Predicated region
    $region69: #{transformer_block_forward.3} parent=5 // pred_check
      _
    $region70: #{transformer_block_forward.3} parent=5 // pred_check_branch
      %390 = sbr.rel (%p387) target = $region72
    $region71: #{transformer_block_forward.3} parent=5 // pred_region
      %s391 = ssub.s32 %s19, 1
      %p392 = scmp.lt.s32.totalorder %s24, 1
      %s393 = scalar_select %p392, %s24, 1
      %s394 = smul.addr %s393, 8
      %s395 = scalar_lea.vmem %s0, %s394
      %p396 = pneg %p45
      %p397 = pneg %p42
      %p398 = pneg %p66
      %p399 = pneg %p63
      %p400 = pneg %p87
      %p401 = pneg %p84
      %p402 = pneg %p108
      %p403 = pneg %p105
      %p404 = pneg %p129
      %p405 = pneg %p126
      %p406 = pneg %p150
      %p407 = pneg %p147
      %p408 = pneg %p171
      %p409 = pneg %p168
      %p410 = pneg %p192
      %p411 = pneg %p189
      %p412 = pneg %p213
      %p413 = pneg %p210
      %p414 = pneg %p234
      %p415 = pneg %p231
      %p416 = pneg %p255
      %p417 = pneg %p252
      %p418 = pneg %p276
      %p419 = pneg %p273
      %p420 = pneg %p297
      %p421 = pneg %p294
      %p422 = pneg %p323
      %p423 = pneg %p320
      %p424 = scmp.lt.s32.totalorder %s24, 1
      %s425 = scalar_select %p424, %s24, 1
      %s426 = smul.addr %s425, 8
      %s427 = scalar_lea.vmem %s13, %s426
      %p428 = scmp.lt.s32.totalorder %s24, 1
      %s429 = scalar_select %p428, %s24, 1
      %s430 = smul.addr %s429, 8
      %s431 = scalar_lea.vmem %s0, %s430
      %p432 = scmp.lt.s32.totalorder %s24, 1
      %s433 = scalar_select %p432, %s24, 1
      %s434 = smul.addr %s433, 8
      %s435 = scalar_lea.vmem %s13, %s434
      %v437 = vld [vmem:[%s431] sm:$0xff]
      %v438 = vpack.c.bf16 %v437, %v437
      %v439 = vld [vmem:[%s1] sm:$0xf]
      %v440 = vld [vmem:[%s1 + $0x4] sm:$0xf]
      %v441 = vld [vmem:[%s1 + $0x8] sm:$0xf]
      %v442 = vld [vmem:[%s1 + $0xc] sm:$0xf]
      %v443 = vld [vmem:[%s2] sm:$0x1]
      %v445 = vlaneseq
      %v446 = vshrl.u32 %v445, 7
      %v447 = vsub.s32 0, %v446
      %v448 = vrot.slane %v443, %v447
      %v454 = vunpack.c.l.b16 %v439
      %v455 = vunpack.c.l.b16 %v440
      %v456 = vunpack.c.l.b16 %v441
      %v457 = vunpack.c.l.b16 %v442
      %v458 = vpack.c.b16 %v455, %v454
      %v459 = vpack.c.b16 %v457, %v456
      %vm462 = vcmask 261120
      %v464 = vsel %vm462, %v438, 0
      %466 = vmatprep.subr.bf16.mxu0 0
      %467 = vmatpush1.bf16.msra.mxu0 0
      %468 = vmatprep.subr.bf16.mxu0 0
      %469 = vmatpush1.bf16.msra.mxu0 0
      %470 = vmatprep.subr.bf16.mxu0 0
      %471 = vmatpush1.bf16.msra.mxu0 0
      %472 = vmatprep.subr.bf16.mxu0 0
      %473 = vmatpush1.bf16.msra.mxu0 0
      %474 = vmatprep.subr.bf16.mxu0 0
      %475 = vmatpush1.bf16.msra.mxu0 0
      %476 = vmatprep.subr.bf16.mxu0 0
      %477 = vmatpush1.bf16.msra.mxu0 0
      %478 = vmatprep.subr.bf16.mxu0 0
      %479 = vmatpush1.bf16.msra.mxu0 %v459
      %480 = vmatprep.subr.bf16.mxu0 0
      %481 = vmatpush1.bf16.msra.mxu0 %v458
      %482 = vmatprep.subr.bf16.mxu0 0
      %483 = vmatpush2.bf16.msra.mxu0 0
      %484 = vmatprep.subr.bf16.mxu0 0
      %485 = vmatpush2.bf16.msra.mxu0 0
      %486 = vmatprep.subr.bf16.mxu0 0
      %487 = vmatpush2.bf16.msra.mxu0 0
      %488 = vmatprep.subr.bf16.mxu0 0
      %489 = vmatpush2.bf16.msra.mxu0 0
      %490 = vmatprep.subr.bf16.mxu0 0
      %491 = vmatpush2.bf16.msra.mxu0 0
      %492 = vmatprep.subr.bf16.mxu0 0
      %493 = vmatpush2.bf16.msra.mxu0 0
      %494 = vmatprep.subr.bf16.mxu0 0
      %495 = vmatpush2.bf16.msra.mxu0 0
      %496 = vmatprep.subr.bf16.mxu0 0
      %497 = vmatpush2.bf16.msra.mxu0 0
      %498 = vmatprep.mubr.bf16.mxu0 0
      %499 = vmatmul.mubr.bf16.gmra.mxu0 %v464
      %v500 = vpop.f32.mrf.mxu0
      %v501 = vadd.f32 %v448, %v500
      %v502 = vpop.f32.mrf.mxu0
      %v503 = vpop.f32.mrf.mxu0
      %v504 = vpop.f32.mrf.mxu0
      %505 = vdwg.mxu0
      %v506 = vmul.f32 %v501, 0.35355338
      %v507 = vlaneseq
      %v508 = vshrl.u32 %v507, 7
      %v509 = vlaneseq
      %v510 = vand.u32 %v509, 127
      %vm511 = vcmp.lt.s32.totalorder %v510, %v508
      %v512 = vsel %vm511, 0.0, -1e+32
      %v513 = vpack.c.bf16 %v506, %v506
      %v514 = vpack.c.bf16 %v501, %v501
      %516 = vrot.lane.b32.xlu0 %v514, 96
      %v517 = vpop.permute.xlu0 %516
      %vm518 = vcmask 64512
      %v520 = vsel %vm518, %v513, 0
      %v523 = vsel %vm518, %v517, 0
      %525 = vmatprep.subr.bf16.mxu0 0
      %526 = vmatpush1.bf16.xpose.msra.mxu0 0
      %527 = vmatprep.subr.bf16.mxu0 0
      %528 = vmatpush1.bf16.xpose.msra.mxu0 0
      %529 = vmatprep.subr.bf16.mxu0 0
      %530 = vmatpush1.bf16.xpose.msra.mxu0 0
      %531 = vmatprep.subr.bf16.mxu0 0
      %532 = vmatpush1.bf16.xpose.msra.mxu0 0
      %533 = vmatprep.subr.bf16.mxu0 0
      %534 = vmatpush1.bf16.xpose.msra.mxu0 0
      %535 = vmatprep.subr.bf16.mxu0 0
      %536 = vmatpush1.bf16.xpose.msra.mxu0 0
      %537 = vmatprep.subr.bf16.mxu0 0
      %538 = vmatpush1.bf16.xpose.msra.mxu0 0
      %539 = vmatprep.subr.bf16.mxu0 0
      %540 = vmatpush1.bf16.xpose.msra.mxu0 %v523
      %541 = vmatprep.subr.bf16.mxu0 0
      %542 = vmatpush2.bf16.xpose.msra.mxu0 0
      %543 = vmatprep.subr.bf16.mxu0 0
      %544 = vmatpush2.bf16.xpose.msra.mxu0 0
      %545 = vmatprep.subr.bf16.mxu0 0
      %546 = vmatpush2.bf16.xpose.msra.mxu0 0
      %547 = vmatprep.subr.bf16.mxu0 0
      %548 = vmatpush2.bf16.xpose.msra.mxu0 0
      %549 = vmatprep.subr.bf16.mxu0 0
      %550 = vmatpush2.bf16.xpose.msra.mxu0 0
      %551 = vmatprep.subr.bf16.mxu0 0
      %552 = vmatpush2.bf16.xpose.msra.mxu0 0
      %553 = vmatprep.subr.bf16.mxu0 0
      %554 = vmatpush2.bf16.xpose.msra.mxu0 0
      %555 = vmatprep.subr.bf16.mxu0 0
      %556 = vmatpush2.bf16.xpose.msra.mxu0 0
      %557 = vmatprep.mubr.bf16.mxu0 0
      %558 = vmatmul.mubr.bf16.gmra.mxu0 %v520
      %v559 = vpop.f32.mrf.mxu0
      %v560 = vadd.f32 %v512, %v559
      %v561 = vpop.f32.mrf.mxu0
      %v562 = vpop.f32.mrf.mxu0
      %v563 = vpop.f32.mrf.mxu0
      %564 = vdwg.mxu0
      %v565 = vsel %vm518, %v560, -inf
      %566 = vmax.xlane.f32.xlu0 %v565
      %v567 = vpop.xlane.xlu0 %566
      %v568 = vsub.f32 %v560, %v567
      %v569 = vmul.f32 %v568, 1.442695
      %v570 = vpow.pop %v569
      %v571 = vsel %vm518, %v570, 0.0
      %572 = vadd.xlane.f32.xlu0 %v571
      %v573 = vpop.xlane.xlu0 %572
      %v574 = vrcp.pop %v573
      %v575 = vmul.f32 %v570, %v574
      %v576 = vpack.c.bf16 %v575, %v575
      %577 = vrot.lane.b32.xlu0 %v514, 64
      %v578 = vpop.permute.xlu0 %577
      %v580 = vsel %vm518, %v576, 0
      %vm582 = vcmask 1043456
      %v584 = vsel %vm582, %v578, 0
      %586 = vmatprep.subr.bf16.mxu0 0
      %587 = vmatpush1.bf16.msra.mxu0 0
      %588 = vmatprep.subr.bf16.mxu0 0
      %589 = vmatpush1.bf16.msra.mxu0 0
      %590 = vmatprep.subr.bf16.mxu0 0
      %591 = vmatpush1.bf16.msra.mxu0 0
      %592 = vmatprep.subr.bf16.mxu0 0
      %593 = vmatpush1.bf16.msra.mxu0 0
      %594 = vmatprep.subr.bf16.mxu0 0
      %595 = vmatpush1.bf16.msra.mxu0 0
      %596 = vmatprep.subr.bf16.mxu0 0
      %597 = vmatpush1.bf16.msra.mxu0 0
      %598 = vmatprep.subr.bf16.mxu0 0
      %599 = vmatpush1.bf16.msra.mxu0 0
      %600 = vmatprep.subr.bf16.mxu0 0
      %601 = vmatpush1.bf16.msra.mxu0 %v584
      %602 = vmatprep.subr.bf16.mxu0 0
      %603 = vmatpush2.bf16.msra.mxu0 0
      %604 = vmatprep.subr.bf16.mxu0 0
      %605 = vmatpush2.bf16.msra.mxu0 0
      %606 = vmatprep.subr.bf16.mxu0 0
      %607 = vmatpush2.bf16.msra.mxu0 0
      %608 = vmatprep.subr.bf16.mxu0 0
      %609 = vmatpush2.bf16.msra.mxu0 0
      %610 = vmatprep.subr.bf16.mxu0 0
      %611 = vmatpush2.bf16.msra.mxu0 0
      %612 = vmatprep.subr.bf16.mxu0 0
      %613 = vmatpush2.bf16.msra.mxu0 0
      %614 = vmatprep.subr.bf16.mxu0 0
      %615 = vmatpush2.bf16.msra.mxu0 0
      %616 = vmatprep.subr.bf16.mxu0 0
      %617 = vmatpush2.bf16.msra.mxu0 0
      %618 = vmatprep.mubr.bf16.mxu0 0
      %619 = vmatmul.mubr.bf16.gmra.mxu0 %v580
      %v620 = vpop.f32.mrf.mxu0
      %v621 = vadd.f32 0.0, %v620
      %v622 = vpop.f32.mrf.mxu0
      %v623 = vpop.f32.mrf.mxu0
      %v624 = vpop.f32.mrf.mxu0
      %625 = vdwg.mxu0
      %627 = vrot.lane.b32.xlu0 %v513, 120
      %v628 = vpop.permute.xlu0 %627
      %629 = vrot.lane.b32.xlu0 %v514, 88
      %v630 = vpop.permute.xlu0 %629
      %v632 = vsel %vm518, %v628, 0
      %v635 = vsel %vm518, %v630, 0
      %637 = vmatprep.subr.bf16.mxu0 0
      %638 = vmatpush1.bf16.xpose.msra.mxu0 0
      %639 = vmatprep.subr.bf16.mxu0 0
      %640 = vmatpush1.bf16.xpose.msra.mxu0 0
      %641 = vmatprep.subr.bf16.mxu0 0
      %642 = vmatpush1.bf16.xpose.msra.mxu0 0
      %643 = vmatprep.subr.bf16.mxu0 0
      %644 = vmatpush1.bf16.xpose.msra.mxu0 0
      %645 = vmatprep.subr.bf16.mxu0 0
      %646 = vmatpush1.bf16.xpose.msra.mxu0 0
      %647 = vmatprep.subr.bf16.mxu0 0
      %648 = vmatpush1.bf16.xpose.msra.mxu0 0
      %649 = vmatprep.subr.bf16.mxu0 0
      %650 = vmatpush1.bf16.xpose.msra.mxu0 0
      %651 = vmatprep.subr.bf16.mxu0 0
      %652 = vmatpush1.bf16.xpose.msra.mxu0 %v635
      %653 = vmatprep.subr.bf16.mxu0 0
      %654 = vmatpush2.bf16.xpose.msra.mxu0 0
      %655 = vmatprep.subr.bf16.mxu0 0
      %656 = vmatpush2.bf16.xpose.msra.mxu0 0
      %657 = vmatprep.subr.bf16.mxu0 0
      %658 = vmatpush2.bf16.xpose.msra.mxu0 0
      %659 = vmatprep.subr.bf16.mxu0 0
      %660 = vmatpush2.bf16.xpose.msra.mxu0 0
      %661 = vmatprep.subr.bf16.mxu0 0
      %662 = vmatpush2.bf16.xpose.msra.mxu0 0
      %663 = vmatprep.subr.bf16.mxu0 0
      %664 = vmatpush2.bf16.xpose.msra.mxu0 0
      %665 = vmatprep.subr.bf16.mxu0 0
      %666 = vmatpush2.bf16.xpose.msra.mxu0 0
      %667 = vmatprep.subr.bf16.mxu0 0
      %668 = vmatpush2.bf16.xpose.msra.mxu0 0
      %669 = vmatprep.mubr.bf16.mxu0 0
      %670 = vmatmul.mubr.bf16.gmra.mxu0 %v632
      %v671 = vpop.f32.mrf.mxu0
      %v672 = vadd.f32 %v512, %v671
      %v673 = vpop.f32.mrf.mxu0
      %v674 = vpop.f32.mrf.mxu0
      %v675 = vpop.f32.mrf.mxu0
      %676 = vdwg.mxu0
      %v677 = vsel %vm518, %v672, -inf
      %678 = vmax.xlane.f32.xlu0 %v677
      %v679 = vpop.xlane.xlu0 %678
      %v680 = vsub.f32 %v672, %v679
      %v681 = vmul.f32 %v680, 1.442695
      %v682 = vpow.pop %v681
      %v683 = vsel %vm518, %v682, 0.0
      %684 = vadd.xlane.f32.xlu0 %v683
      %v685 = vpop.xlane.xlu0 %684
      %v686 = vrcp.pop %v685
      %v687 = vmul.f32 %v682, %v686
      %v688 = vpack.c.bf16 %v687, %v687
      %689 = vrot.lane.b32.xlu0 %v514, 56
      %v690 = vpop.permute.xlu0 %689
      %v692 = vsel %vm518, %v688, 0
      %v695 = vsel %vm582, %v690, 0
      %697 = vmatprep.subr.bf16.mxu0 0
      %698 = vmatpush1.bf16.msra.mxu0 0
      %699 = vmatprep.subr.bf16.mxu0 0
      %700 = vmatpush1.bf16.msra.mxu0 0
      %701 = vmatprep.subr.bf16.mxu0 0
      %702 = vmatpush1.bf16.msra.mxu0 0
      %703 = vmatprep.subr.bf16.mxu0 0
      %704 = vmatpush1.bf16.msra.mxu0 0
      %705 = vmatprep.subr.bf16.mxu0 0
      %706 = vmatpush1.bf16.msra.mxu0 0
      %707 = vmatprep.subr.bf16.mxu0 0
      %708 = vmatpush1.bf16.msra.mxu0 0
      %709 = vmatprep.subr.bf16.mxu0 0
      %710 = vmatpush1.bf16.msra.mxu0 0
      %711 = vmatprep.subr.bf16.mxu0 0
      %712 = vmatpush1.bf16.msra.mxu0 %v695
      %713 = vmatprep.subr.bf16.mxu0 0
      %714 = vmatpush2.bf16.msra.mxu0 0
      %715 = vmatprep.subr.bf16.mxu0 0
      %716 = vmatpush2.bf16.msra.mxu0 0
      %717 = vmatprep.subr.bf16.mxu0 0
      %718 = vmatpush2.bf16.msra.mxu0 0
      %719 = vmatprep.subr.bf16.mxu0 0
      %720 = vmatpush2.bf16.msra.mxu0 0
      %721 = vmatprep.subr.bf16.mxu0 0
      %722 = vmatpush2.bf16.msra.mxu0 0
      %723 = vmatprep.subr.bf16.mxu0 0
      %724 = vmatpush2.bf16.msra.mxu0 0
      %725 = vmatprep.subr.bf16.mxu0 0
      %726 = vmatpush2.bf16.msra.mxu0 0
      %727 = vmatprep.subr.bf16.mxu0 0
      %728 = vmatpush2.bf16.msra.mxu0 0
      %729 = vmatprep.mubr.bf16.mxu0 0
      %730 = vmatmul.mubr.bf16.gmra.mxu0 %v692
      %v731 = vpop.f32.mrf.mxu0
      %v732 = vadd.f32 0.0, %v731
      %v733 = vpop.f32.mrf.mxu0
      %v734 = vpop.f32.mrf.mxu0
      %v735 = vpop.f32.mrf.mxu0
      %736 = vdwg.mxu0
      %737 = vrot.lane.b32.xlu0 %v513, 112
      %v738 = vpop.permute.xlu0 %737
      %739 = vrot.lane.b32.xlu0 %v514, 80
      %v740 = vpop.permute.xlu0 %739
      %v742 = vsel %vm518, %v738, 0
      %v745 = vsel %vm518, %v740, 0
      %747 = vmatprep.subr.bf16.mxu0 0
      %748 = vmatpush1.bf16.xpose.msra.mxu0 0
      %749 = vmatprep.subr.bf16.mxu0 0
      %750 = vmatpush1.bf16.xpose.msra.mxu0 0
      %751 = vmatprep.subr.bf16.mxu0 0
      %752 = vmatpush1.bf16.xpose.msra.mxu0 0
      %753 = vmatprep.subr.bf16.mxu0 0
      %754 = vmatpush1.bf16.xpose.msra.mxu0 0
      %755 = vmatprep.subr.bf16.mxu0 0
      %756 = vmatpush1.bf16.xpose.msra.mxu0 0
      %757 = vmatprep.subr.bf16.mxu0 0
      %758 = vmatpush1.bf16.xpose.msra.mxu0 0
      %759 = vmatprep.subr.bf16.mxu0 0
      %760 = vmatpush1.bf16.xpose.msra.mxu0 0
      %761 = vmatprep.subr.bf16.mxu0 0
      %762 = vmatpush1.bf16.xpose.msra.mxu0 %v745
      %763 = vmatprep.subr.bf16.mxu0 0
      %764 = vmatpush2.bf16.xpose.msra.mxu0 0
      %765 = vmatprep.subr.bf16.mxu0 0
      %766 = vmatpush2.bf16.xpose.msra.mxu0 0
      %767 = vmatprep.subr.bf16.mxu0 0
      %768 = vmatpush2.bf16.xpose.msra.mxu0 0
      %769 = vmatprep.subr.bf16.mxu0 0
      %770 = vmatpush2.bf16.xpose.msra.mxu0 0
      %771 = vmatprep.subr.bf16.mxu0 0
      %772 = vmatpush2.bf16.xpose.msra.mxu0 0
      %773 = vmatprep.subr.bf16.mxu0 0
      %774 = vmatpush2.bf16.xpose.msra.mxu0 0
      %775 = vmatprep.subr.bf16.mxu0 0
      %776 = vmatpush2.bf16.xpose.msra.mxu0 0
      %777 = vmatprep.subr.bf16.mxu0 0
      %778 = vmatpush2.bf16.xpose.msra.mxu0 0
      %779 = vmatprep.mubr.bf16.mxu0 0
      %780 = vmatmul.mubr.bf16.gmra.mxu0 %v742
      %v781 = vpop.f32.mrf.mxu0
      %v782 = vadd.f32 %v512, %v781
      %v783 = vpop.f32.mrf.mxu0
      %v784 = vpop.f32.mrf.mxu0
      %v785 = vpop.f32.mrf.mxu0
      %786 = vdwg.mxu0
      %v787 = vsel %vm518, %v782, -inf
      %788 = vmax.xlane.f32.xlu0 %v787
      %v789 = vpop.xlane.xlu0 %788
      %v790 = vsub.f32 %v782, %v789
      %v791 = vmul.f32 %v790, 1.442695
      %v792 = vpow.pop %v791
      %v793 = vsel %vm518, %v792, 0.0
      %794 = vadd.xlane.f32.xlu0 %v793
      %v795 = vpop.xlane.xlu0 %794
      %v796 = vrcp.pop %v795
      %v797 = vmul.f32 %v792, %v796
      %v798 = vpack.c.bf16 %v797, %v797
      %799 = vrot.lane.b32.xlu0 %v514, 48
      %v800 = vpop.permute.xlu0 %799
      %v802 = vsel %vm518, %v798, 0
      %v805 = vsel %vm582, %v800, 0
      %807 = vmatprep.subr.bf16.mxu0 0
      %808 = vmatpush1.bf16.msra.mxu0 0
      %809 = vmatprep.subr.bf16.mxu0 0
      %810 = vmatpush1.bf16.msra.mxu0 0
      %811 = vmatprep.subr.bf16.mxu0 0
      %812 = vmatpush1.bf16.msra.mxu0 0
      %813 = vmatprep.subr.bf16.mxu0 0
      %814 = vmatpush1.bf16.msra.mxu0 0
      %815 = vmatprep.subr.bf16.mxu0 0
      %816 = vmatpush1.bf16.msra.mxu0 0
      %817 = vmatprep.subr.bf16.mxu0 0
      %818 = vmatpush1.bf16.msra.mxu0 0
      %819 = vmatprep.subr.bf16.mxu0 0
      %820 = vmatpush1.bf16.msra.mxu0 0
      %821 = vmatprep.subr.bf16.mxu0 0
      %822 = vmatpush1.bf16.msra.mxu0 %v805
      %823 = vmatprep.subr.bf16.mxu0 0
      %824 = vmatpush2.bf16.msra.mxu0 0
      %825 = vmatprep.subr.bf16.mxu0 0
      %826 = vmatpush2.bf16.msra.mxu0 0
      %827 = vmatprep.subr.bf16.mxu0 0
      %828 = vmatpush2.bf16.msra.mxu0 0
      %829 = vmatprep.subr.bf16.mxu0 0
      %830 = vmatpush2.bf16.msra.mxu0 0
      %831 = vmatprep.subr.bf16.mxu0 0
      %832 = vmatpush2.bf16.msra.mxu0 0
      %833 = vmatprep.subr.bf16.mxu0 0
      %834 = vmatpush2.bf16.msra.mxu0 0
      %835 = vmatprep.subr.bf16.mxu0 0
      %836 = vmatpush2.bf16.msra.mxu0 0
      %837 = vmatprep.subr.bf16.mxu0 0
      %838 = vmatpush2.bf16.msra.mxu0 0
      %839 = vmatprep.mubr.bf16.mxu0 0
      %840 = vmatmul.mubr.bf16.gmra.mxu0 %v802
      %v841 = vpop.f32.mrf.mxu0
      %v842 = vadd.f32 0.0, %v841
      %v843 = vpop.f32.mrf.mxu0
      %v844 = vpop.f32.mrf.mxu0
      %v845 = vpop.f32.mrf.mxu0
      %846 = vdwg.mxu0
      %847 = vrot.lane.b32.xlu0 %v513, 104
      %v848 = vpop.permute.xlu0 %847
      %849 = vrot.lane.b32.xlu0 %v514, 72
      %v850 = vpop.permute.xlu0 %849
      %v852 = vsel %vm518, %v848, 0
      %v855 = vsel %vm518, %v850, 0
      %857 = vmatprep.subr.bf16.mxu0 0
      %858 = vmatpush1.bf16.xpose.msra.mxu0 0
      %859 = vmatprep.subr.bf16.mxu0 0
      %860 = vmatpush1.bf16.xpose.msra.mxu0 0
      %861 = vmatprep.subr.bf16.mxu0 0
      %862 = vmatpush1.bf16.xpose.msra.mxu0 0
      %863 = vmatprep.subr.bf16.mxu0 0
      %864 = vmatpush1.bf16.xpose.msra.mxu0 0
      %865 = vmatprep.subr.bf16.mxu0 0
      %866 = vmatpush1.bf16.xpose.msra.mxu0 0
      %867 = vmatprep.subr.bf16.mxu0 0
      %868 = vmatpush1.bf16.xpose.msra.mxu0 0
      %869 = vmatprep.subr.bf16.mxu0 0
      %870 = vmatpush1.bf16.xpose.msra.mxu0 0
      %871 = vmatprep.subr.bf16.mxu0 0
      %872 = vmatpush1.bf16.xpose.msra.mxu0 %v855
      %873 = vmatprep.subr.bf16.mxu0 0
      %874 = vmatpush2.bf16.xpose.msra.mxu0 0
      %875 = vmatprep.subr.bf16.mxu0 0
      %876 = vmatpush2.bf16.xpose.msra.mxu0 0
      %877 = vmatprep.subr.bf16.mxu0 0
      %878 = vmatpush2.bf16.xpose.msra.mxu0 0
      %879 = vmatprep.subr.bf16.mxu0 0
      %880 = vmatpush2.bf16.xpose.msra.mxu0 0
      %881 = vmatprep.subr.bf16.mxu0 0
      %882 = vmatpush2.bf16.xpose.msra.mxu0 0
      %883 = vmatprep.subr.bf16.mxu0 0
      %884 = vmatpush2.bf16.xpose.msra.mxu0 0
      %885 = vmatprep.subr.bf16.mxu0 0
      %886 = vmatpush2.bf16.xpose.msra.mxu0 0
      %887 = vmatprep.subr.bf16.mxu0 0
      %888 = vmatpush2.bf16.xpose.msra.mxu0 0
      %889 = vmatprep.mubr.bf16.mxu0 0
      %890 = vmatmul.mubr.bf16.gmra.mxu0 %v852
      %v891 = vpop.f32.mrf.mxu0
      %v892 = vadd.f32 %v512, %v891
      %v893 = vpop.f32.mrf.mxu0
      %v894 = vpop.f32.mrf.mxu0
      %v895 = vpop.f32.mrf.mxu0
      %896 = vdwg.mxu0
      %v897 = vsel %vm518, %v892, -inf
      %898 = vmax.xlane.f32.xlu0 %v897
      %v899 = vpop.xlane.xlu0 %898
      %v900 = vsub.f32 %v892, %v899
      %v901 = vmul.f32 %v900, 1.442695
      %v902 = vpow.pop %v901
      %v903 = vsel %vm518, %v902, 0.0
      %904 = vadd.xlane.f32.xlu0 %v903
      %v905 = vpop.xlane.xlu0 %904
      %v906 = vrcp.pop %v905
      %v907 = vmul.f32 %v902, %v906
      %v908 = vpack.c.bf16 %v907, %v907
      %909 = vrot.lane.b32.xlu0 %v514, 40
      %v910 = vpop.permute.xlu0 %909
      %v912 = vsel %vm518, %v908, 0
      %v915 = vsel %vm582, %v910, 0
      %917 = vmatprep.subr.bf16.mxu0 0
      %918 = vmatpush1.bf16.msra.mxu0 0
      %919 = vmatprep.subr.bf16.mxu0 0
      %920 = vmatpush1.bf16.msra.mxu0 0
      %921 = vmatprep.subr.bf16.mxu0 0
      %922 = vmatpush1.bf16.msra.mxu0 0
      %923 = vmatprep.subr.bf16.mxu0 0
      %924 = vmatpush1.bf16.msra.mxu0 0
      %925 = vmatprep.subr.bf16.mxu0 0
      %926 = vmatpush1.bf16.msra.mxu0 0
      %927 = vmatprep.subr.bf16.mxu0 0
      %928 = vmatpush1.bf16.msra.mxu0 0
      %929 = vmatprep.subr.bf16.mxu0 0
      %930 = vmatpush1.bf16.msra.mxu0 0
      %931 = vmatprep.subr.bf16.mxu0 0
      %932 = vmatpush1.bf16.msra.mxu0 %v915
      %933 = vmatprep.subr.bf16.mxu0 0
      %934 = vmatpush2.bf16.msra.mxu0 0
      %935 = vmatprep.subr.bf16.mxu0 0
      %936 = vmatpush2.bf16.msra.mxu0 0
      %937 = vmatprep.subr.bf16.mxu0 0
      %938 = vmatpush2.bf16.msra.mxu0 0
      %939 = vmatprep.subr.bf16.mxu0 0
      %940 = vmatpush2.bf16.msra.mxu0 0
      %941 = vmatprep.subr.bf16.mxu0 0
      %942 = vmatpush2.bf16.msra.mxu0 0
      %943 = vmatprep.subr.bf16.mxu0 0
      %944 = vmatpush2.bf16.msra.mxu0 0
      %945 = vmatprep.subr.bf16.mxu0 0
      %946 = vmatpush2.bf16.msra.mxu0 0
      %947 = vmatprep.subr.bf16.mxu0 0
      %948 = vmatpush2.bf16.msra.mxu0 0
      %949 = vmatprep.mubr.bf16.mxu0 0
      %950 = vmatmul.mubr.bf16.gmra.mxu0 %v912
      %v951 = vpop.f32.mrf.mxu0
      %v952 = vadd.f32 0.0, %v951
      %v953 = vpop.f32.mrf.mxu0
      %v954 = vpop.f32.mrf.mxu0
      %v955 = vpop.f32.mrf.mxu0
      %956 = vdwg.mxu0
      %958 = vrot.lane.b32.xlu0 %v732, 8
      %v959 = vpop.permute.xlu0 %958
      %962 = vrot.lane.b32.xlu0 %v842, 16
      %v963 = vpop.permute.xlu0 %962
      %966 = vrot.lane.b32.xlu0 %v952, 24
      %v967 = vpop.permute.xlu0 %966
      %v969 = vsel %vm518, %v621, %v959
      %vm970 = vcmask 130048
      %v971 = vsel %vm970, %v969, %v963
      %vm972 = vcmask 195584
      %v973 = vsel %vm972, %v971, %v967
      %v974 = vpack.c.bf16 %v973, %v973
      %v975 = vld [vmem:[%s3] sm:$0xf]
      %v976 = vld [vmem:[%s3 + $0x4] sm:$0xf]
      %v977 = vld [vmem:[%s3 + $0x8] sm:$0xf]
      %v978 = vld [vmem:[%s3 + $0xc] sm:$0xf]
      %v979 = vld [vmem:[%s4] sm:$0x1]
      %v981 = vlaneseq
      %v982 = vshrl.u32 %v981, 7
      %v983 = vsub.s32 0, %v982
      %v984 = vrot.slane %v979, %v983
      %v990 = vunpack.c.l.b16 %v975
      %v991 = vunpack.c.l.b16 %v976
      %v992 = vunpack.c.l.b16 %v977
      %v993 = vunpack.c.l.b16 %v978
      %v994 = vpack.c.b16 %v991, %v990
      %v995 = vpack.c.b16 %v993, %v992
      %v999 = vsel %vm462, %v974, 0
      %1001 = vmatprep.subr.bf16.mxu0 0
      %1002 = vmatpush1.bf16.msra.mxu0 0
      %1003 = vmatprep.subr.bf16.mxu0 0
      %1004 = vmatpush1.bf16.msra.mxu0 0
      %1005 = vmatprep.subr.bf16.mxu0 0
      %1006 = vmatpush1.bf16.msra.mxu0 0
      %1007 = vmatprep.subr.bf16.mxu0 0
      %1008 = vmatpush1.bf16.msra.mxu0 0
      %1009 = vmatprep.subr.bf16.mxu0 0
      %1010 = vmatpush1.bf16.msra.mxu0 0
      %1011 = vmatprep.subr.bf16.mxu0 0
      %1012 = vmatpush1.bf16.msra.mxu0 0
      %1013 = vmatprep.subr.bf16.mxu0 0
      %1014 = vmatpush1.bf16.msra.mxu0 %v995
      %1015 = vmatprep.subr.bf16.mxu0 0
      %1016 = vmatpush1.bf16.msra.mxu0 %v994
      %1017 = vmatprep.subr.bf16.mxu0 0
      %1018 = vmatpush2.bf16.msra.mxu0 0
      %1019 = vmatprep.subr.bf16.mxu0 0
      %1020 = vmatpush2.bf16.msra.mxu0 0
      %1021 = vmatprep.subr.bf16.mxu0 0
      %1022 = vmatpush2.bf16.msra.mxu0 0
      %1023 = vmatprep.subr.bf16.mxu0 0
      %1024 = vmatpush2.bf16.msra.mxu0 0
      %1025 = vmatprep.subr.bf16.mxu0 0
      %1026 = vmatpush2.bf16.msra.mxu0 0
      %1027 = vmatprep.subr.bf16.mxu0 0
      %1028 = vmatpush2.bf16.msra.mxu0 0
      %1029 = vmatprep.subr.bf16.mxu0 0
      %1030 = vmatpush2.bf16.msra.mxu0 0
      %1031 = vmatprep.subr.bf16.mxu0 0
      %1032 = vmatpush2.bf16.msra.mxu0 0
      %1033 = vmatprep.mubr.bf16.mxu0 0
      %1034 = vmatmul.mubr.bf16.gmra.mxu0 %v999
      %v1035 = vpop.f32.mrf.mxu0
      %v1036 = vadd.f32 %v984, %v1035
      %v1037 = vpop.f32.mrf.mxu0
      %v1038 = vpop.f32.mrf.mxu0
      %v1039 = vpop.f32.mrf.mxu0
      %1040 = vdwg.mxu0
      %v1041 = vadd.f32 %v437, %v1036
      %v1042 = vld [vmem:[%s5] sm:$0x1]
      %v1043 = vld [vmem:[%s6] sm:$0x1]
      %v1044 = vsel %vm462, %v1041, 0.0
      %1045 = vadd.xlane.f32.xlu0 %v1044
      %v1046 = vpop.xlane.xlu0 %1045
      %v1047 = vrcp.pop 32.0
      %v1048 = vmul.f32 %v1046, %v1047
      %v1049 = vsub.f32 %v1041, %v1048
      %v1050 = vmul.f32 %v1049, %v1049
      %v1051 = vsel %vm462, %v1050, 0.0
      %1052 = vadd.xlane.f32.xlu0 %v1051
      %v1053 = vpop.xlane.xlu0 %1052
      %v1054 = vmul.f32 %v1053, %v1047
      %v1055 = vadd.f32 %v1054, 1e-05
      %v1056 = vrsqrt.pop %v1055
      %v1057 = vmul.f32 %v1049, %v1056
      %v1059 = vlaneseq
      %v1060 = vshrl.u32 %v1059, 7
      %v1061 = vsub.s32 0, %v1060
      %v1062 = vrot.slane %v1042, %v1061
      %v1064 = vmul.f32 %v1057, %v1062
      %v1066 = vlaneseq
      %v1067 = vshrl.u32 %v1066, 7
      %v1068 = vsub.s32 0, %v1067
      %v1069 = vrot.slane %v1043, %v1068
      %v1071 = vadd.f32 %v1064, %v1069
      %v1072 = vpack.c.bf16 %v1071, %v1071
      %v1073 = vld [vmem:[%s7] sm:$0xf]
      %v1074 = vld [vmem:[%s7 + $0x4] sm:$0xf]
      %v1075 = vld [vmem:[%s7 + $0x8] sm:$0xf]
      %v1076 = vld [vmem:[%s7 + $0xc] sm:$0xf]
      %v1077 = vld [vmem:[%s8] sm:$0x1]
      %v1079 = vlaneseq
      %v1080 = vshrl.u32 %v1079, 7
      %v1081 = vsub.s32 0, %v1080
      %v1082 = vrot.slane %v1077, %v1081
      %v1088 = vunpack.c.l.b16 %v1073
      %v1089 = vunpack.c.l.b16 %v1074
      %v1090 = vunpack.c.l.b16 %v1075
      %v1091 = vunpack.c.l.b16 %v1076
      %v1092 = vpack.c.b16 %v1089, %v1088
      %v1093 = vpack.c.b16 %v1091, %v1090
      %v1097 = vsel %vm462, %v1072, 0
      %1099 = vmatprep.subr.bf16.mxu0 0
      %1100 = vmatpush1.bf16.msra.mxu0 0
      %1101 = vmatprep.subr.bf16.mxu0 0
      %1102 = vmatpush1.bf16.msra.mxu0 0
      %1103 = vmatprep.subr.bf16.mxu0 0
      %1104 = vmatpush1.bf16.msra.mxu0 0
      %1105 = vmatprep.subr.bf16.mxu0 0
      %1106 = vmatpush1.bf16.msra.mxu0 0
      %1107 = vmatprep.subr.bf16.mxu0 0
      %1108 = vmatpush1.bf16.msra.mxu0 0
      %1109 = vmatprep.subr.bf16.mxu0 0
      %1110 = vmatpush1.bf16.msra.mxu0 0
      %1111 = vmatprep.subr.bf16.mxu0 0
      %1112 = vmatpush1.bf16.msra.mxu0 %v1093
      %1113 = vmatprep.subr.bf16.mxu0 0
      %1114 = vmatpush1.bf16.msra.mxu0 %v1092
      %1115 = vmatprep.subr.bf16.mxu0 0
      %1116 = vmatpush2.bf16.msra.mxu0 0
      %1117 = vmatprep.subr.bf16.mxu0 0
      %1118 = vmatpush2.bf16.msra.mxu0 0
      %1119 = vmatprep.subr.bf16.mxu0 0
      %1120 = vmatpush2.bf16.msra.mxu0 0
      %1121 = vmatprep.subr.bf16.mxu0 0
      %1122 = vmatpush2.bf16.msra.mxu0 0
      %1123 = vmatprep.subr.bf16.mxu0 0
      %1124 = vmatpush2.bf16.msra.mxu0 0
      %1125 = vmatprep.subr.bf16.mxu0 0
      %1126 = vmatpush2.bf16.msra.mxu0 0
      %1127 = vmatprep.subr.bf16.mxu0 0
      %1128 = vmatpush2.bf16.msra.mxu0 0
      %1129 = vmatprep.subr.bf16.mxu0 0
      %1130 = vmatpush2.bf16.msra.mxu0 0
      %1131 = vmatprep.mubr.bf16.mxu0 0
      %1132 = vmatmul.mubr.bf16.gmra.mxu0 %v1097
      %v1133 = vpop.f32.mrf.mxu0
      %v1134 = vadd.f32 %v1082, %v1133
      %v1135 = vpop.f32.mrf.mxu0
      %v1136 = vpop.f32.mrf.mxu0
      %v1137 = vpop.f32.mrf.mxu0
      %1138 = vdwg.mxu0
      %v1139 = vmax.f32 %v1134, 0.0
      %v1140 = vpack.c.bf16 %v1139, %v1139
      %v1141 = vld [vmem:[%s9] sm:$0xf]
      %v1142 = vld [vmem:[%s9 + $0x4] sm:$0xf]
      %v1143 = vld [vmem:[%s9 + $0x8] sm:$0xf]
      %v1144 = vld [vmem:[%s9 + $0xc] sm:$0xf]
      %v1145 = vld [vmem:[%s9 + $0x10] sm:$0xf]
      %v1146 = vld [vmem:[%s9 + $0x14] sm:$0xf]
      %v1147 = vld [vmem:[%s9 + $0x18] sm:$0xf]
      %v1148 = vld [vmem:[%s9 + $0x1c] sm:$0xf]
      %v1149 = vld [vmem:[%s10] sm:$0x1]
      %v1151 = vlaneseq
      %v1152 = vshrl.u32 %v1151, 7
      %v1153 = vsub.s32 0, %v1152
      %v1154 = vrot.slane %v1149, %v1153
      %v1164 = vunpack.c.l.b16 %v1141
      %v1165 = vunpack.c.l.b16 %v1142
      %v1166 = vunpack.c.l.b16 %v1143
      %v1167 = vunpack.c.l.b16 %v1144
      %v1168 = vunpack.c.l.b16 %v1145
      %v1169 = vunpack.c.l.b16 %v1146
      %v1170 = vunpack.c.l.b16 %v1147
      %v1171 = vunpack.c.l.b16 %v1148
      %v1172 = vpack.c.b16 %v1165, %v1164
      %v1173 = vpack.c.b16 %v1167, %v1166
      %v1174 = vpack.c.b16 %v1169, %v1168
      %v1175 = vpack.c.b16 %v1171, %v1170
      %vm1180 = vcmask 523264
      %v1182 = vsel %vm1180, %v1140, 0
      %1184 = vmatprep.subr.bf16.mxu0 0
      %1185 = vmatpush1.bf16.msra.mxu0 0
      %1186 = vmatprep.subr.bf16.mxu0 0
      %1187 = vmatpush1.bf16.msra.mxu0 0
      %1188 = vmatprep.subr.bf16.mxu0 0
      %1189 = vmatpush1.bf16.msra.mxu0 0
      %1190 = vmatprep.subr.bf16.mxu0 0
      %1191 = vmatpush1.bf16.msra.mxu0 0
      %1192 = vmatprep.subr.bf16.mxu0 0
      %1193 = vmatpush1.bf16.msra.mxu0 %v1175
      %1194 = vmatprep.subr.bf16.mxu0 0
      %1195 = vmatpush1.bf16.msra.mxu0 %v1174
      %1196 = vmatprep.subr.bf16.mxu0 0
      %1197 = vmatpush1.bf16.msra.mxu0 %v1173
      %1198 = vmatprep.subr.bf16.mxu0 0
      %1199 = vmatpush1.bf16.msra.mxu0 %v1172
      %1200 = vmatprep.subr.bf16.mxu0 0
      %1201 = vmatpush2.bf16.msra.mxu0 0
      %1202 = vmatprep.subr.bf16.mxu0 0
      %1203 = vmatpush2.bf16.msra.mxu0 0
      %1204 = vmatprep.subr.bf16.mxu0 0
      %1205 = vmatpush2.bf16.msra.mxu0 0
      %1206 = vmatprep.subr.bf16.mxu0 0
      %1207 = vmatpush2.bf16.msra.mxu0 0
      %1208 = vmatprep.subr.bf16.mxu0 0
      %1209 = vmatpush2.bf16.msra.mxu0 0
      %1210 = vmatprep.subr.bf16.mxu0 0
      %1211 = vmatpush2.bf16.msra.mxu0 0
      %1212 = vmatprep.subr.bf16.mxu0 0
      %1213 = vmatpush2.bf16.msra.mxu0 0
      %1214 = vmatprep.subr.bf16.mxu0 0
      %1215 = vmatpush2.bf16.msra.mxu0 0
      %1216 = vmatprep.mubr.bf16.mxu0 0
      %1217 = vmatmul.mubr.bf16.gmra.mxu0 %v1182
      %v1218 = vpop.f32.mrf.mxu0
      %v1219 = vadd.f32 %v1154, %v1218
      %v1220 = vpop.f32.mrf.mxu0
      %v1221 = vpop.f32.mrf.mxu0
      %v1222 = vpop.f32.mrf.mxu0
      %1223 = vdwg.mxu0
      %v1224 = vadd.f32 %v1071, %v1219
      %v1225 = vld [vmem:[%s11] sm:$0x1]
      %v1226 = vld [vmem:[%s12] sm:$0x1]
      %v1227 = vsel %vm462, %v1224, 0.0
      %1228 = vadd.xlane.f32.xlu0 %v1227
      %v1229 = vpop.xlane.xlu0 %1228
      %v1230 = vmul.f32 %v1229, %v1047
      %v1231 = vsub.f32 %v1224, %v1230
      %v1232 = vmul.f32 %v1231, %v1231
      %v1233 = vsel %vm462, %v1232, 0.0
      %1234 = vadd.xlane.f32.xlu0 %v1233
      %v1235 = vpop.xlane.xlu0 %1234
      %v1236 = vmul.f32 %v1235, %v1047
      %v1237 = vadd.f32 %v1236, 1e-05
      %v1238 = vrsqrt.pop %v1237
      %v1239 = vmul.f32 %v1231, %v1238
      %v1241 = vlaneseq
      %v1242 = vshrl.u32 %v1241, 7
      %v1243 = vsub.s32 0, %v1242
      %v1244 = vrot.slane %v1225, %v1243
      %v1246 = vmul.f32 %v1239, %v1244
      %v1248 = vlaneseq
      %v1249 = vshrl.u32 %v1248, 7
      %v1250 = vsub.s32 0, %v1249
      %v1251 = vrot.slane %v1226, %v1250
      %v1253 = vadd.f32 %v1246, %v1251
      %1254 = vst.msk [vmem:[%s435] sm:$0xff] %vm462, %v1253
      %p1255 = scmp.lt.s32.totalorder %s24, 1
      %s1256 = scalar_select %p1255, %s24, 1
      %s1257 = smul.addr %s1256, 8
      %s1258 = scalar_lea.vmem %s13, %s1257
      // Predicated region
      $region73: #{transformer_block_forward.3} parent=71 // pred_check
        %p1259 = pneg %p320
      $region74: #{transformer_block_forward.3} parent=71 // pred_check_branch
        %1261 = sbr.rel (%p1259) target = $region76
      $region75: #{transformer_block_forward.3} parent=71 // pred_region
        _
      $region76: #{transformer_block_forward.3} parent=71 // pred_fallthru
        _
    $region72: #{transformer_block_forward.3} parent=5 // pred_fallthru
      _
    %p1262 = scmp.le.s32.totalorder 2, %s19
    // Predicated region
    $region77: #{transformer_block_forward.3} parent=5 // pred_check
      %p1263 = pneg %p1262
    $region78: #{transformer_block_forward.3} parent=5 // pred_check_branch
      %1265 = sbr.rel (%p1263) target = $region80
    $region79: #{transformer_block_forward.3} parent=5 // pred_region
      %s1266 = ssub.s32 %s19, 2
      // Predicated region
      $region81: #{transformer_block_forward.3} parent=79 // pred_check
        %p1267 = pneg %p326
      $region82: #{transformer_block_forward.3} parent=79 // pred_check_branch
        %1269 = sbr.rel (%p1267) target = $region84
      $region83: #{transformer_block_forward.3} parent=79 // pred_region
        %p1270 = scmp.lt.s32.totalorder %s25, 1
        %s1271 = scalar_select %p1270, %s25, 1
        %s1272 = smul.addr %s1271, 8
        %s1273 = scalar_lea.vmem %s13, %s1272
      $region84: #{transformer_block_forward.3} parent=79 // pred_fallthru
        _
    $region80: #{transformer_block_forward.3} parent=5 // pred_fallthru
      _
  $region6: #{transformer_block_forward.3} parent=0 // loop_footer
    %s23 = sadd.s32 1, %s19
  $region7: #{transformer_block_forward.3} parent=0 // loop_footer_branch
    %18 = sbr.rel target = $region3
  $region8: #{transformer_block_forward.3} parent=0 // loop_exit
    _

// kernel: transformer_block_forward.4
$region0: #{transformer_block_forward.4}
  #allocation0 [shape = 'u32[]', space=smem, size = 0x4, offset = 0x4, fixed_abs, tag = 'smem constant byte address 0x4 - core index']
  #allocation1 [shape = 'u32[144,128]{1,0:T(1,128)}', space=vmem, size = 0x12000, scoped, tag = 'internal scratch']
  %s0 = inlined_call_operand.vmem [shape: f32[2,8,32], index: 0, kind: input, shape index: {}, may-alias: {0,1}]
  %s1 = inlined_call_operand.vmem [shape: f32[2,8,32], index: 1, kind: input, shape index: {}, may-alias: {0,1}]
  %s2 = inlined_call_operand.vmem [shape: bf16[32,96], index: 2, kind: input, shape index: {}]
  %s3 = inlined_call_operand.vmem [shape: f32[1,96], index: 3, kind: input, shape index: {}]
  %s4 = inlined_call_operand.vmem [shape: bf16[32,32], index: 4, kind: input, shape index: {}]
  %s5 = inlined_call_operand.vmem [shape: f32[1,32], index: 5, kind: input, shape index: {}]
  %s6 = inlined_call_operand.vmem [shape: f32[1,32], index: 6, kind: input, shape index: {}]
  %s7 = inlined_call_operand.vmem [shape: f32[1,32], index: 7, kind: input, shape index: {}]
  %s8 = inlined_call_operand.vmem [shape: bf16[32,32], index: 8, kind: input, shape index: {}]
  %s9 = inlined_call_operand.vmem [shape: f32[1,32], index: 9, kind: input, shape index: {}]
  %s10 = inlined_call_operand.vmem [shape: bf16[32,64], index: 10, kind: input, shape index: {}]
  %s11 = inlined_call_operand.vmem [shape: f32[1,64], index: 11, kind: input, shape index: {}]
  %s12 = inlined_call_operand.vmem [shape: bf16[32,32], index: 12, kind: input, shape index: {}]
  %s13 = inlined_call_operand.vmem [shape: f32[1,32], index: 13, kind: input, shape index: {}]
  %s14 = inlined_call_operand.vmem [shape: f32[1,32], index: 14, kind: input, shape index: {}]
  %s15 = inlined_call_operand.vmem [shape: f32[1,32], index: 15, kind: input, shape index: {}]
  %s16 = inlined_call_operand.vmem [shape: bf16[32,64], index: 16, kind: input, shape index: {}]
  %s17 = inlined_call_operand.vmem [shape: f32[1,64], index: 17, kind: input, shape index: {}]
  %s18 = inlined_call_operand.vmem [shape: bf16[64,32], index: 18, kind: input, shape index: {}]
  %s19 = inlined_call_operand.vmem [shape: f32[1,32], index: 19, kind: input, shape index: {}]
  %s20 = inlined_call_operand.vmem [shape: f32[1,32], index: 20, kind: input, shape index: {}]
  %s21 = inlined_call_operand.vmem [shape: f32[1,32], index: 21, kind: input, shape index: {}]
  %s22 = inlined_call_operand.vmem [shape: f32[2,8,32], index: 22, kind: output, shape index: {}]
  %s23 = sld [smem:[#allocation0]]
  $region121: #{transformer_block_forward.4} parent=0
    _
  %s25 = ssub.s32 1, %s23
  %s26 = scalar_select 0, %s25, %s23
  loop: start=0, step=1, limit=4
  $region2: #{transformer_block_forward.4} parent=0 // loop_pre_header
    _
  $region3: #{transformer_block_forward.4} parent=0 // loop_header
    %s28 = sphi 0, %s32
    %p29 = scmp.ge.s32.totalorder %s28, 4
    %s38 = sphi 0, %s40
    %s41 = sphi 0, %s38
    %s42 = sphi 0, %s41
    %s58 = sphi 0, %s42
    %s64 = sphi 0, %s66
    %s67 = sphi 0, %s64
    %s68 = sphi 0, %s67
    %s84 = sphi 0, %s68
    %s88 = sphi 0, %s88
    %s90 = sphi 0, %s88
    %s91 = sphi 0, %s90
    %s105 = sphi 0, %s91
    %s109 = sphi 0, %s109
    %s111 = sphi 0, %s109
    %s112 = sphi 0, %s111
    %s126 = sphi 0, %s112
    %s130 = sphi 0, %s130
    %s132 = sphi 0, %s130
    %s133 = sphi 0, %s132
    %s147 = sphi 0, %s133
    %s151 = sphi 0, %s151
    %s153 = sphi 0, %s151
    %s154 = sphi 0, %s153
    %s168 = sphi 0, %s154
    %s172 = sphi 0, %s172
    %s174 = sphi 0, %s172
    %s175 = sphi 0, %s174
    %s189 = sphi 0, %s175
    %s193 = sphi 0, %s193
    %s195 = sphi 0, %s193
    %s196 = sphi 0, %s195
    %s210 = sphi 0, %s196
    %s214 = sphi 0, %s214
    %s216 = sphi 0, %s214
    %s217 = sphi 0, %s216
    %s231 = sphi 0, %s217
    %s235 = sphi 0, %s235
    %s237 = sphi 0, %s235
    %s238 = sphi 0, %s237
    %s252 = sphi 0, %s238
    %s256 = sphi 0, %s256
    %s258 = sphi 0, %s256
    %s259 = sphi 0, %s258
    %s273 = sphi 0, %s259
    %s277 = sphi 0, %s277
    %s279 = sphi 0, %s277
    %s280 = sphi 0, %s279
    %s294 = sphi 0, %s280
    %s298 = sphi 0, %s298
    %s300 = sphi 0, %s298
    %s301 = sphi 0, %s300
    %s315 = sphi 0, %s301
    %s319 = sphi 0, %s319
    %s321 = sphi 0, %s319
    %s322 = sphi 0, %s321
    %s336 = sphi 0, %s322
    %s340 = sphi 0, %s340
    %s342 = sphi 0, %s340
    %s343 = sphi 0, %s342
    %s357 = sphi 0, %s343
    %s361 = sphi 0, %s361
    %s363 = sphi 0, %s361
    %s364 = sphi 0, %s363
    %s378 = sphi 0, %s364
    %s382 = sphi 0, %s382
    %s384 = sphi 0, %s382
    %s385 = sphi 0, %s384
    %s399 = sphi 0, %s385
    %s403 = sphi 0, %s403
    %s405 = sphi 0, %s403
    %s406 = sphi 0, %s405
    %s420 = sphi 0, %s406
    %s424 = sphi 0, %s424
    %s426 = sphi 0, %s424
    %s427 = sphi 0, %s426
    %s441 = sphi 0, %s427
    %s445 = sphi 0, %s445
    %s447 = sphi 0, %s445
    %s448 = sphi 0, %s447
    %s462 = sphi 0, %s448
    %s466 = sphi 0, %s466
    %s468 = sphi 0, %s466
    %s469 = sphi 0, %s468
    %s483 = sphi 0, %s469
    %s487 = sphi 0, %s487
    %s489 = sphi 0, %s487
    %s490 = sphi 0, %s489
    %s504 = sphi 0, %s490
    %s510 = sphi 0, %s512
    %s513 = sphi 0, %s510
    %s514 = sphi 0, %s513
    %s530 = sphi 0, %s514
  $region4: #{transformer_block_forward.4} parent=0 // loop_header_branch
    %31 = sbr.rel (%p29) target = $region8
  $region5: #{transformer_block_forward.4} parent=0 // loop_body
    %s33 = ssub.s32 %s28, 1
    %s34 = ssub.s32 %s28, 2
    %s35 = sadd.s32 %s28, 1
    %s36 = ssub.s32 %s28, %s35
    %p37 = scmp.eq.s32.totalorder %s36, 0
    %s39 = sadd.s32 %s38, 1
    %s40 = scalar_select %p37, %s38, %s39
    %p43 = pneg %p37
    %p44 = scmp.eq.s32.totalorder %s28, 1
    %p45 = por %p43, %p44
    %p46 = scmp.ne.s32.totalorder %s38, %s41
    %p47 = scmp.eq.s32.totalorder %s28, 0
    %p48 = por %p46, %p47
    %p49 = scmp.ne.s32.totalorder %s38, %s41
    %p50 = scmp.eq.s32.totalorder %s33, 1
    %p51 = por %p49, %p50
    %p52 = scmp.ne.s32.totalorder %s41, %s42
    %p53 = scmp.eq.s32.totalorder %s33, 0
    %p54 = por %p52, %p53
    %p55 = scmp.ne.s32.totalorder %s41, %s42
    %p56 = scmp.eq.s32.totalorder %s34, 1
    %p57 = por %p55, %p56
    %p59 = scmp.ne.s32.totalorder %s42, %s58
    %p60 = scmp.eq.s32.totalorder %s34, 0
    %p61 = por %p59, %p60
    %s62 = ssub.s32 %s28, %s35
    %p63 = scmp.eq.s32.totalorder %s62, 0
    %s65 = sadd.s32 %s64, 1
    %s66 = scalar_select %p63, %s64, %s65
    %p69 = pneg %p63
    %p70 = scmp.eq.s32.totalorder %s28, 1
    %p71 = por %p69, %p70
    %p72 = scmp.ne.s32.totalorder %s64, %s67
    %p73 = scmp.eq.s32.totalorder %s28, 0
    %p74 = por %p72, %p73
    %p75 = scmp.ne.s32.totalorder %s64, %s67
    %p76 = scmp.eq.s32.totalorder %s33, 1
    %p77 = por %p75, %p76
    %p78 = scmp.ne.s32.totalorder %s67, %s68
    %p79 = scmp.eq.s32.totalorder %s33, 0
    %p80 = por %p78, %p79
    %p81 = scmp.ne.s32.totalorder %s67, %s68
    %p82 = scmp.eq.s32.totalorder %s34, 1
    %p83 = por %p81, %p82
    %p85 = scmp.ne.s32.totalorder %s68, %s84
    %p86 = scmp.eq.s32.totalorder %s34, 0
    %p87 = por %p85, %p86
    %s89 = sadd.s32 %s88, 1
    %p92 = scmp.eq.s32.totalorder %s28, 1
    %p93 = scmp.ne.s32.totalorder %s88, %s90
    %p94 = scmp.eq.s32.totalorder %s28, 0
    %p95 = por %p93, %p94
    %p96 = scmp.ne.s32.totalorder %s88, %s90
    %p97 = scmp.eq.s32.totalorder %s33, 1
    %p98 = por %p96, %p97
    %p99 = scmp.ne.s32.totalorder %s90, %s91
    %p100 = scmp.eq.s32.totalorder %s33, 0
    %p101 = por %p99, %p100
    %p102 = scmp.ne.s32.totalorder %s90, %s91
    %p103 = scmp.eq.s32.totalorder %s34, 1
    %p104 = por %p102, %p103
    %p106 = scmp.ne.s32.totalorder %s91, %s105
    %p107 = scmp.eq.s32.totalorder %s34, 0
    %p108 = por %p106, %p107
    %s110 = sadd.s32 %s109, 1
    %p113 = scmp.eq.s32.totalorder %s28, 1
    %p114 = scmp.ne.s32.totalorder %s109, %s111
    %p115 = scmp.eq.s32.totalorder %s28, 0
    %p116 = por %p114, %p115
    %p117 = scmp.ne.s32.totalorder %s109, %s111
    %p118 = scmp.eq.s32.totalorder %s33, 1
    %p119 = por %p117, %p118
    %p120 = scmp.ne.s32.totalorder %s111, %s112
    %p121 = scmp.eq.s32.totalorder %s33, 0
    %p122 = por %p120, %p121
    %p123 = scmp.ne.s32.totalorder %s111, %s112
    %p124 = scmp.eq.s32.totalorder %s34, 1
    %p125 = por %p123, %p124
    %p127 = scmp.ne.s32.totalorder %s112, %s126
    %p128 = scmp.eq.s32.totalorder %s34, 0
    %p129 = por %p127, %p128
    %s131 = sadd.s32 %s130, 1
    %p134 = scmp.eq.s32.totalorder %s28, 1
    %p135 = scmp.ne.s32.totalorder %s130, %s132
    %p136 = scmp.eq.s32.totalorder %s28, 0
    %p137 = por %p135, %p136
    %p138 = scmp.ne.s32.totalorder %s130, %s132
    %p139 = scmp.eq.s32.totalorder %s33, 1
    %p140 = por %p138, %p139
    %p141 = scmp.ne.s32.totalorder %s132, %s133
    %p142 = scmp.eq.s32.totalorder %s33, 0
    %p143 = por %p141, %p142
    %p144 = scmp.ne.s32.totalorder %s132, %s133
    %p145 = scmp.eq.s32.totalorder %s34, 1
    %p146 = por %p144, %p145
    %p148 = scmp.ne.s32.totalorder %s133, %s147
    %p149 = scmp.eq.s32.totalorder %s34, 0
    %p150 = por %p148, %p149
    %s152 = sadd.s32 %s151, 1
    %p155 = scmp.eq.s32.totalorder %s28, 1
    %p156 = scmp.ne.s32.totalorder %s151, %s153
    %p157 = scmp.eq.s32.totalorder %s28, 0
    %p158 = por %p156, %p157
    %p159 = scmp.ne.s32.totalorder %s151, %s153
    %p160 = scmp.eq.s32.totalorder %s33, 1
    %p161 = por %p159, %p160
    %p162 = scmp.ne.s32.totalorder %s153, %s154
    %p163 = scmp.eq.s32.totalorder %s33, 0
    %p164 = por %p162, %p163
    %p165 = scmp.ne.s32.totalorder %s153, %s154
    %p166 = scmp.eq.s32.totalorder %s34, 1
    %p167 = por %p165, %p166
    %p169 = scmp.ne.s32.totalorder %s154, %s168
    %p170 = scmp.eq.s32.totalorder %s34, 0
    %p171 = por %p169, %p170
    %s173 = sadd.s32 %s172, 1
    %p176 = scmp.eq.s32.totalorder %s28, 1
    %p177 = scmp.ne.s32.totalorder %s172, %s174
    %p178 = scmp.eq.s32.totalorder %s28, 0
    %p179 = por %p177, %p178
    %p180 = scmp.ne.s32.totalorder %s172, %s174
    %p181 = scmp.eq.s32.totalorder %s33, 1
    %p182 = por %p180, %p181
    %p183 = scmp.ne.s32.totalorder %s174, %s175
    %p184 = scmp.eq.s32.totalorder %s33, 0
    %p185 = por %p183, %p184
    %p186 = scmp.ne.s32.totalorder %s174, %s175
    %p187 = scmp.eq.s32.totalorder %s34, 1
    %p188 = por %p186, %p187
    %p190 = scmp.ne.s32.totalorder %s175, %s189
    %p191 = scmp.eq.s32.totalorder %s34, 0
    %p192 = por %p190, %p191
    %s194 = sadd.s32 %s193, 1
    %p197 = scmp.eq.s32.totalorder %s28, 1
    %p198 = scmp.ne.s32.totalorder %s193, %s195
    %p199 = scmp.eq.s32.totalorder %s28, 0
    %p200 = por %p198, %p199
    %p201 = scmp.ne.s32.totalorder %s193, %s195
    %p202 = scmp.eq.s32.totalorder %s33, 1
    %p203 = por %p201, %p202
    %p204 = scmp.ne.s32.totalorder %s195, %s196
    %p205 = scmp.eq.s32.totalorder %s33, 0
    %p206 = por %p204, %p205
    %p207 = scmp.ne.s32.totalorder %s195, %s196
    %p208 = scmp.eq.s32.totalorder %s34, 1
    %p209 = por %p207, %p208
    %p211 = scmp.ne.s32.totalorder %s196, %s210
    %p212 = scmp.eq.s32.totalorder %s34, 0
    %p213 = por %p211, %p212
    %s215 = sadd.s32 %s214, 1
    %p218 = scmp.eq.s32.totalorder %s28, 1
    %p219 = scmp.ne.s32.totalorder %s214, %s216
    %p220 = scmp.eq.s32.totalorder %s28, 0
    %p221 = por %p219, %p220
    %p222 = scmp.ne.s32.totalorder %s214, %s216
    %p223 = scmp.eq.s32.totalorder %s33, 1
    %p224 = por %p222, %p223
    %p225 = scmp.ne.s32.totalorder %s216, %s217
    %p226 = scmp.eq.s32.totalorder %s33, 0
    %p227 = por %p225, %p226
    %p228 = scmp.ne.s32.totalorder %s216, %s217
    %p229 = scmp.eq.s32.totalorder %s34, 1
    %p230 = por %p228, %p229
    %p232 = scmp.ne.s32.totalorder %s217, %s231
    %p233 = scmp.eq.s32.totalorder %s34, 0
    %p234 = por %p232, %p233
    %s236 = sadd.s32 %s235, 1
    %p239 = scmp.eq.s32.totalorder %s28, 1
    %p240 = scmp.ne.s32.totalorder %s235, %s237
    %p241 = scmp.eq.s32.totalorder %s28, 0
    %p242 = por %p240, %p241
    %p243 = scmp.ne.s32.totalorder %s235, %s237
    %p244 = scmp.eq.s32.totalorder %s33, 1
    %p245 = por %p243, %p244
    %p246 = scmp.ne.s32.totalorder %s237, %s238
    %p247 = scmp.eq.s32.totalorder %s33, 0
    %p248 = por %p246, %p247
    %p249 = scmp.ne.s32.totalorder %s237, %s238
    %p250 = scmp.eq.s32.totalorder %s34, 1
    %p251 = por %p249, %p250
    %p253 = scmp.ne.s32.totalorder %s238, %s252
    %p254 = scmp.eq.s32.totalorder %s34, 0
    %p255 = por %p253, %p254
    %s257 = sadd.s32 %s256, 1
    %p260 = scmp.eq.s32.totalorder %s28, 1
    %p261 = scmp.ne.s32.totalorder %s256, %s258
    %p262 = scmp.eq.s32.totalorder %s28, 0
    %p263 = por %p261, %p262
    %p264 = scmp.ne.s32.totalorder %s256, %s258
    %p265 = scmp.eq.s32.totalorder %s33, 1
    %p266 = por %p264, %p265
    %p267 = scmp.ne.s32.totalorder %s258, %s259
    %p268 = scmp.eq.s32.totalorder %s33, 0
    %p269 = por %p267, %p268
    %p270 = scmp.ne.s32.totalorder %s258, %s259
    %p271 = scmp.eq.s32.totalorder %s34, 1
    %p272 = por %p270, %p271
    %p274 = scmp.ne.s32.totalorder %s259, %s273
    %p275 = scmp.eq.s32.totalorder %s34, 0
    %p276 = por %p274, %p275
    %s278 = sadd.s32 %s277, 1
    %p281 = scmp.eq.s32.totalorder %s28, 1
    %p282 = scmp.ne.s32.totalorder %s277, %s279
    %p283 = scmp.eq.s32.totalorder %s28, 0
    %p284 = por %p282, %p283
    %p285 = scmp.ne.s32.totalorder %s277, %s279
    %p286 = scmp.eq.s32.totalorder %s33, 1
    %p287 = por %p285, %p286
    %p288 = scmp.ne.s32.totalorder %s279, %s280
    %p289 = scmp.eq.s32.totalorder %s33, 0
    %p290 = por %p288, %p289
    %p291 = scmp.ne.s32.totalorder %s279, %s280
    %p292 = scmp.eq.s32.totalorder %s34, 1
    %p293 = por %p291, %p292
    %p295 = scmp.ne.s32.totalorder %s280, %s294
    %p296 = scmp.eq.s32.totalorder %s34, 0
    %p297 = por %p295, %p296
    %s299 = sadd.s32 %s298, 1
    %p302 = scmp.eq.s32.totalorder %s28, 1
    %p303 = scmp.ne.s32.totalorder %s298, %s300
    %p304 = scmp.eq.s32.totalorder %s28, 0
    %p305 = por %p303, %p304
    %p306 = scmp.ne.s32.totalorder %s298, %s300
    %p307 = scmp.eq.s32.totalorder %s33, 1
    %p308 = por %p306, %p307
    %p309 = scmp.ne.s32.totalorder %s300, %s301
    %p310 = scmp.eq.s32.totalorder %s33, 0
    %p311 = por %p309, %p310
    %p312 = scmp.ne.s32.totalorder %s300, %s301
    %p313 = scmp.eq.s32.totalorder %s34, 1
    %p314 = por %p312, %p313
    %p316 = scmp.ne.s32.totalorder %s301, %s315
    %p317 = scmp.eq.s32.totalorder %s34, 0
    %p318 = por %p316, %p317
    %s320 = sadd.s32 %s319, 1
    %p323 = scmp.eq.s32.totalorder %s28, 1
    %p324 = scmp.ne.s32.totalorder %s319, %s321
    %p325 = scmp.eq.s32.totalorder %s28, 0
    %p326 = por %p324, %p325
    %p327 = scmp.ne.s32.totalorder %s319, %s321
    %p328 = scmp.eq.s32.totalorder %s33, 1
    %p329 = por %p327, %p328
    %p330 = scmp.ne.s32.totalorder %s321, %s322
    %p331 = scmp.eq.s32.totalorder %s33, 0
    %p332 = por %p330, %p331
    %p333 = scmp.ne.s32.totalorder %s321, %s322
    %p334 = scmp.eq.s32.totalorder %s34, 1
    %p335 = por %p333, %p334
    %p337 = scmp.ne.s32.totalorder %s322, %s336
    %p338 = scmp.eq.s32.totalorder %s34, 0
    %p339 = por %p337, %p338
    %s341 = sadd.s32 %s340, 1
    %p344 = scmp.eq.s32.totalorder %s28, 1
    %p345 = scmp.ne.s32.totalorder %s340, %s342
    %p346 = scmp.eq.s32.totalorder %s28, 0
    %p347 = por %p345, %p346
    %p348 = scmp.ne.s32.totalorder %s340, %s342
    %p349 = scmp.eq.s32.totalorder %s33, 1
    %p350 = por %p348, %p349
    %p351 = scmp.ne.s32.totalorder %s342, %s343
    %p352 = scmp.eq.s32.totalorder %s33, 0
    %p353 = por %p351, %p352
    %p354 = scmp.ne.s32.totalorder %s342, %s343
    %p355 = scmp.eq.s32.totalorder %s34, 1
    %p356 = por %p354, %p355
    %p358 = scmp.ne.s32.totalorder %s343, %s357
    %p359 = scmp.eq.s32.totalorder %s34, 0
    %p360 = por %p358, %p359
    %s362 = sadd.s32 %s361, 1
    %p365 = scmp.eq.s32.totalorder %s28, 1
    %p366 = scmp.ne.s32.totalorder %s361, %s363
    %p367 = scmp.eq.s32.totalorder %s28, 0
    %p368 = por %p366, %p367
    %p369 = scmp.ne.s32.totalorder %s361, %s363
    %p370 = scmp.eq.s32.totalorder %s33, 1
    %p371 = por %p369, %p370
    %p372 = scmp.ne.s32.totalorder %s363, %s364
    %p373 = scmp.eq.s32.totalorder %s33, 0
    %p374 = por %p372, %p373
    %p375 = scmp.ne.s32.totalorder %s363, %s364
    %p376 = scmp.eq.s32.totalorder %s34, 1
    %p377 = por %p375, %p376
    %p379 = scmp.ne.s32.totalorder %s364, %s378
    %p380 = scmp.eq.s32.totalorder %s34, 0
    %p381 = por %p379, %p380
    %s383 = sadd.s32 %s382, 1
    %p386 = scmp.eq.s32.totalorder %s28, 1
    %p387 = scmp.ne.s32.totalorder %s382, %s384
    %p388 = scmp.eq.s32.totalorder %s28, 0
    %p389 = por %p387, %p388
    %p390 = scmp.ne.s32.totalorder %s382, %s384
    %p391 = scmp.eq.s32.totalorder %s33, 1
    %p392 = por %p390, %p391
    %p393 = scmp.ne.s32.totalorder %s384, %s385
    %p394 = scmp.eq.s32.totalorder %s33, 0
    %p395 = por %p393, %p394
    %p396 = scmp.ne.s32.totalorder %s384, %s385
    %p397 = scmp.eq.s32.totalorder %s34, 1
    %p398 = por %p396, %p397
    %p400 = scmp.ne.s32.totalorder %s385, %s399
    %p401 = scmp.eq.s32.totalorder %s34, 0
    %p402 = por %p400, %p401
    %s404 = sadd.s32 %s403, 1
    %p407 = scmp.eq.s32.totalorder %s28, 1
    %p408 = scmp.ne.s32.totalorder %s403, %s405
    %p409 = scmp.eq.s32.totalorder %s28, 0
    %p410 = por %p408, %p409
    %p411 = scmp.ne.s32.totalorder %s403, %s405
    %p412 = scmp.eq.s32.totalorder %s33, 1
    %p413 = por %p411, %p412
    %p414 = scmp.ne.s32.totalorder %s405, %s406
    %p415 = scmp.eq.s32.totalorder %s33, 0
    %p416 = por %p414, %p415
    %p417 = scmp.ne.s32.totalorder %s405, %s406
    %p418 = scmp.eq.s32.totalorder %s34, 1
    %p419 = por %p417, %p418
    %p421 = scmp.ne.s32.totalorder %s406, %s420
    %p422 = scmp.eq.s32.totalorder %s34, 0
    %p423 = por %p421, %p422
    %s425 = sadd.s32 %s424, 1
    %p428 = scmp.eq.s32.totalorder %s28, 1
    %p429 = scmp.ne.s32.totalorder %s424, %s426
    %p430 = scmp.eq.s32.totalorder %s28, 0
    %p431 = por %p429, %p430
    %p432 = scmp.ne.s32.totalorder %s424, %s426
    %p433 = scmp.eq.s32.totalorder %s33, 1
    %p434 = por %p432, %p433
    %p435 = scmp.ne.s32.totalorder %s426, %s427
    %p436 = scmp.eq.s32.totalorder %s33, 0
    %p437 = por %p435, %p436
    %p438 = scmp.ne.s32.totalorder %s426, %s427
    %p439 = scmp.eq.s32.totalorder %s34, 1
    %p440 = por %p438, %p439
    %p442 = scmp.ne.s32.totalorder %s427, %s441
    %p443 = scmp.eq.s32.totalorder %s34, 0
    %p444 = por %p442, %p443
    %s446 = sadd.s32 %s445, 1
    %p449 = scmp.eq.s32.totalorder %s28, 1
    %p450 = scmp.ne.s32.totalorder %s445, %s447
    %p451 = scmp.eq.s32.totalorder %s28, 0
    %p452 = por %p450, %p451
    %p453 = scmp.ne.s32.totalorder %s445, %s447
    %p454 = scmp.eq.s32.totalorder %s33, 1
    %p455 = por %p453, %p454
    %p456 = scmp.ne.s32.totalorder %s447, %s448
    %p457 = scmp.eq.s32.totalorder %s33, 0
    %p458 = por %p456, %p457
    %p459 = scmp.ne.s32.totalorder %s447, %s448
    %p460 = scmp.eq.s32.totalorder %s34, 1
    %p461 = por %p459, %p460
    %p463 = scmp.ne.s32.totalorder %s448, %s462
    %p464 = scmp.eq.s32.totalorder %s34, 0
    %p465 = por %p463, %p464
    %s467 = sadd.s32 %s466, 1
    %p470 = scmp.eq.s32.totalorder %s28, 1
    %p471 = scmp.ne.s32.totalorder %s466, %s468
    %p472 = scmp.eq.s32.totalorder %s28, 0
    %p473 = por %p471, %p472
    %p474 = scmp.ne.s32.totalorder %s466, %s468
    %p475 = scmp.eq.s32.totalorder %s33, 1
    %p476 = por %p474, %p475
    %p477 = scmp.ne.s32.totalorder %s468, %s469
    %p478 = scmp.eq.s32.totalorder %s33, 0
    %p479 = por %p477, %p478
    %p480 = scmp.ne.s32.totalorder %s468, %s469
    %p481 = scmp.eq.s32.totalorder %s34, 1
    %p482 = por %p480, %p481
    %p484 = scmp.ne.s32.totalorder %s469, %s483
    %p485 = scmp.eq.s32.totalorder %s34, 0
    %p486 = por %p484, %p485
    %s488 = sadd.s32 %s487, 1
    %p491 = scmp.eq.s32.totalorder %s28, 1
    %p492 = scmp.ne.s32.totalorder %s487, %s489
    %p493 = scmp.eq.s32.totalorder %s28, 0
    %p494 = por %p492, %p493
    %p495 = scmp.ne.s32.totalorder %s487, %s489
    %p496 = scmp.eq.s32.totalorder %s33, 1
    %p497 = por %p495, %p496
    %p498 = scmp.ne.s32.totalorder %s489, %s490
    %p499 = scmp.eq.s32.totalorder %s33, 0
    %p500 = por %p498, %p499
    %p501 = scmp.ne.s32.totalorder %s489, %s490
    %p502 = scmp.eq.s32.totalorder %s34, 1
    %p503 = por %p501, %p502
    %p505 = scmp.ne.s32.totalorder %s490, %s504
    %p506 = scmp.eq.s32.totalorder %s34, 0
    %p507 = por %p505, %p506
    %s508 = ssub.s32 %s28, %s35
    %p509 = scmp.eq.s32.totalorder %s508, 0
    %s511 = sadd.s32 %s510, 1
    %s512 = scalar_select %p509, %s510, %s511
    %p515 = pneg %p509
    %p516 = scmp.eq.s32.totalorder %s28, 1
    %p517 = por %p515, %p516
    %p518 = scmp.ne.s32.totalorder %s510, %s513
    %p519 = scmp.eq.s32.totalorder %s28, 0
    %p520 = por %p518, %p519
    %p521 = scmp.ne.s32.totalorder %s510, %s513
    %p522 = scmp.eq.s32.totalorder %s33, 1
    %p523 = por %p521, %p522
    %p524 = scmp.ne.s32.totalorder %s513, %s514
    %p525 = scmp.eq.s32.totalorder %s33, 0
    %p526 = por %p524, %p525
    %p527 = scmp.ne.s32.totalorder %s513, %s514
    %p528 = scmp.eq.s32.totalorder %s34, 1
    %p529 = por %p527, %p528
    %p531 = scmp.ne.s32.totalorder %s514, %s530
    %p532 = scmp.eq.s32.totalorder %s34, 0
    %p533 = por %p531, %p532
    %p534 = scmp.le.s32.totalorder 1, %s28
    %p535 = scmp.lt.s32.totalorder %s28, 3
    %p536 = pnand %p534, %p535
    %p537 = pneg %p536
    // Predicated region
    $region9: #{transformer_block_forward.4} parent=5 // pred_check
      _
    $region10: #{transformer_block_forward.4} parent=5 // pred_check_branch
      %539 = sbr.rel (%p536) target = $region12
    $region11: #{transformer_block_forward.4} parent=5 // pred_region
      %s540 = ssub.s32 %s28, 1
      // Predicated region
      $region13: #{transformer_block_forward.4} parent=11 // pred_check
        %p541 = pneg %p101
      $region14: #{transformer_block_forward.4} parent=11 // pred_check_branch
        %543 = sbr.rel (%p541) target = $region16
      $region15: #{transformer_block_forward.4} parent=11 // pred_region
        _
      $region16: #{transformer_block_forward.4} parent=11 // pred_fallthru
        _
      // Predicated region
      $region17: #{transformer_block_forward.4} parent=11 // pred_check
        %p544 = pneg %p122
      $region18: #{transformer_block_forward.4} parent=11 // pred_check_branch
        %546 = sbr.rel (%p544) target = $region20
      $region19: #{transformer_block_forward.4} parent=11 // pred_region
        _
      $region20: #{transformer_block_forward.4} parent=11 // pred_fallthru
        _
      // Predicated region
      $region21: #{transformer_block_forward.4} parent=11 // pred_check
        %p547 = pneg %p143
      $region22: #{transformer_block_forward.4} parent=11 // pred_check_branch
        %549 = sbr.rel (%p547) target = $region24
      $region23: #{transformer_block_forward.4} parent=11 // pred_region
        _
      $region24: #{transformer_block_forward.4} parent=11 // pred_fallthru
        _
      // Predicated region
      $region25: #{transformer_block_forward.4} parent=11 // pred_check
        %p550 = pneg %p164
      $region26: #{transformer_block_forward.4} parent=11 // pred_check_branch
        %552 = sbr.rel (%p550) target = $region28
      $region27: #{transformer_block_forward.4} parent=11 // pred_region
        _
      $region28: #{transformer_block_forward.4} parent=11 // pred_fallthru
        _
      // Predicated region
      $region29: #{transformer_block_forward.4} parent=11 // pred_check
        %p553 = pneg %p185
      $region30: #{transformer_block_forward.4} parent=11 // pred_check_branch
        %555 = sbr.rel (%p553) target = $region32
      $region31: #{transformer_block_forward.4} parent=11 // pred_region
        _
      $region32: #{transformer_block_forward.4} parent=11 // pred_fallthru
        _
      // Predicated region
      $region33: #{transformer_block_forward.4} parent=11 // pred_check
        %p556 = pneg %p206
      $region34: #{transformer_block_forward.4} parent=11 // pred_check_branch
        %558 = sbr.rel (%p556) target = $region36
      $region35: #{transformer_block_forward.4} parent=11 // pred_region
        _
      $region36: #{transformer_block_forward.4} parent=11 // pred_fallthru
        _
      // Predicated region
      $region37: #{transformer_block_forward.4} parent=11 // pred_check
        %p559 = pneg %p227
      $region38: #{transformer_block_forward.4} parent=11 // pred_check_branch
        %561 = sbr.rel (%p559) target = $region40
      $region39: #{transformer_block_forward.4} parent=11 // pred_region
        _
      $region40: #{transformer_block_forward.4} parent=11 // pred_fallthru
        _
      // Predicated region
      $region41: #{transformer_block_forward.4} parent=11 // pred_check
        %p562 = pneg %p248
      $region42: #{transformer_block_forward.4} parent=11 // pred_check_branch
        %564 = sbr.rel (%p562) target = $region44
      $region43: #{transformer_block_forward.4} parent=11 // pred_region
        _
      $region44: #{transformer_block_forward.4} parent=11 // pred_fallthru
        _
      // Predicated region
      $region45: #{transformer_block_forward.4} parent=11 // pred_check
        %p565 = pneg %p269
      $region46: #{transformer_block_forward.4} parent=11 // pred_check_branch
        %567 = sbr.rel (%p565) target = $region48
      $region47: #{transformer_block_forward.4} parent=11 // pred_region
        _
      $region48: #{transformer_block_forward.4} parent=11 // pred_fallthru
        _
      // Predicated region
      $region49: #{transformer_block_forward.4} parent=11 // pred_check
        %p568 = pneg %p290
      $region50: #{transformer_block_forward.4} parent=11 // pred_check_branch
        %570 = sbr.rel (%p568) target = $region52
      $region51: #{transformer_block_forward.4} parent=11 // pred_region
        _
      $region52: #{transformer_block_forward.4} parent=11 // pred_fallthru
        _
      // Predicated region
      $region53: #{transformer_block_forward.4} parent=11 // pred_check
        %p571 = pneg %p311
      $region54: #{transformer_block_forward.4} parent=11 // pred_check_branch
        %573 = sbr.rel (%p571) target = $region56
      $region55: #{transformer_block_forward.4} parent=11 // pred_region
        _
      $region56: #{transformer_block_forward.4} parent=11 // pred_fallthru
        _
      // Predicated region
      $region57: #{transformer_block_forward.4} parent=11 // pred_check
        %p574 = pneg %p332
      $region58: #{transformer_block_forward.4} parent=11 // pred_check_branch
        %576 = sbr.rel (%p574) target = $region60
      $region59: #{transformer_block_forward.4} parent=11 // pred_region
        _
      $region60: #{transformer_block_forward.4} parent=11 // pred_fallthru
        _
      // Predicated region
      $region61: #{transformer_block_forward.4} parent=11 // pred_check
        %p577 = pneg %p353
      $region62: #{transformer_block_forward.4} parent=11 // pred_check_branch
        %579 = sbr.rel (%p577) target = $region64
      $region63: #{transformer_block_forward.4} parent=11 // pred_region
        _
      $region64: #{transformer_block_forward.4} parent=11 // pred_fallthru
        _
      // Predicated region
      $region65: #{transformer_block_forward.4} parent=11 // pred_check
        %p580 = pneg %p374
      $region66: #{transformer_block_forward.4} parent=11 // pred_check_branch
        %582 = sbr.rel (%p580) target = $region68
      $region67: #{transformer_block_forward.4} parent=11 // pred_region
        _
      $region68: #{transformer_block_forward.4} parent=11 // pred_fallthru
        _
      // Predicated region
      $region69: #{transformer_block_forward.4} parent=11 // pred_check
        %p583 = pneg %p395
      $region70: #{transformer_block_forward.4} parent=11 // pred_check_branch
        %585 = sbr.rel (%p583) target = $region72
      $region71: #{transformer_block_forward.4} parent=11 // pred_region
        _
      $region72: #{transformer_block_forward.4} parent=11 // pred_fallthru
        _
      // Predicated region
      $region73: #{transformer_block_forward.4} parent=11 // pred_check
        %p586 = pneg %p416
      $region74: #{transformer_block_forward.4} parent=11 // pred_check_branch
        %588 = sbr.rel (%p586) target = $region76
      $region75: #{transformer_block_forward.4} parent=11 // pred_region
        _
      $region76: #{transformer_block_forward.4} parent=11 // pred_fallthru
        _
      // Predicated region
      $region77: #{transformer_block_forward.4} parent=11 // pred_check
        %p589 = pneg %p437
      $region78: #{transformer_block_forward.4} parent=11 // pred_check_branch
        %591 = sbr.rel (%p589) target = $region80
      $region79: #{transformer_block_forward.4} parent=11 // pred_region
        _
      $region80: #{transformer_block_forward.4} parent=11 // pred_fallthru
        _
      // Predicated region
      $region81: #{transformer_block_forward.4} parent=11 // pred_check
        %p592 = pneg %p458
      $region82: #{transformer_block_forward.4} parent=11 // pred_check_branch
        %594 = sbr.rel (%p592) target = $region84
      $region83: #{transformer_block_forward.4} parent=11 // pred_region
        _
      $region84: #{transformer_block_forward.4} parent=11 // pred_fallthru
        _
      // Predicated region
      $region85: #{transformer_block_forward.4} parent=11 // pred_check
        %p595 = pneg %p479
      $region86: #{transformer_block_forward.4} parent=11 // pred_check_branch
        %597 = sbr.rel (%p595) target = $region88
      $region87: #{transformer_block_forward.4} parent=11 // pred_region
        _
      $region88: #{transformer_block_forward.4} parent=11 // pred_fallthru
        _
      // Predicated region
      $region89: #{transformer_block_forward.4} parent=11 // pred_check
        %p598 = pneg %p500
      $region90: #{transformer_block_forward.4} parent=11 // pred_check_branch
        %600 = sbr.rel (%p598) target = $region92
      $region91: #{transformer_block_forward.4} parent=11 // pred_region
        _
      $region92: #{transformer_block_forward.4} parent=11 // pred_fallthru
        _
    $region12: #{transformer_block_forward.4} parent=5 // pred_fallthru
      _
    %p601 = scmp.lt.s32.totalorder %s28, 2
    // Predicated region
    $region93: #{transformer_block_forward.4} parent=5 // pred_check
      %p602 = pneg %p601
    $region94: #{transformer_block_forward.4} parent=5 // pred_check_branch
      %604 = sbr.rel (%p602) target = $region96
    $region95: #{transformer_block_forward.4} parent=5 // pred_region
      // Predicated region
      $region97: #{transformer_block_forward.4} parent=95 // pred_check
        %p605 = pneg %p48
      $region98: #{transformer_block_forward.4} parent=95 // pred_check_branch
        %607 = sbr.rel (%p605) target = $region100
      $region99: #{transformer_block_forward.4} parent=95 // pred_region
        %p608 = scmp.lt.s32.totalorder %s28, 1
        %s609 = scalar_select %p608, %s28, 1
        %s610 = smul.addr %s609, 8
        %s611 = scalar_lea.vmem %s0, %s610
      $region100: #{transformer_block_forward.4} parent=95 // pred_fallthru
        _
      // Predicated region
      $region101: #{transformer_block_forward.4} parent=95 // pred_check
        %p612 = pneg %p74
      $region102: #{transformer_block_forward.4} parent=95 // pred_check_branch
        %614 = sbr.rel (%p612) target = $region104
      $region103: #{transformer_block_forward.4} parent=95 // pred_region
        %p615 = scmp.lt.s32.totalorder %s28, 1
        %s616 = scalar_select %p615, %s28, 1
        %s617 = smul.addr %s616, 8
        %s618 = scalar_lea.vmem %s1, %s617
      $region104: #{transformer_block_forward.4} parent=95 // pred_fallthru
        _
    $region96: #{transformer_block_forward.4} parent=5 // pred_fallthru
      _
    %p619 = scmp.le.s32.totalorder 1, %s28
    %p620 = scmp.lt.s32.totalorder %s28, 3
    %p621 = pnand %p619, %p620
    %p622 = pneg %p621
    // Predicated region
    $region105: #{transformer_block_forward.4} parent=5 // pred_check
      _
    $region106: #{transformer_block_forward.4} parent=5 // pred_check_branch
      %624 = sbr.rel (%p621) target = $region108
    $region107: #{transformer_block_forward.4} parent=5 // pred_region
      %s625 = ssub.s32 %s28, 1
      %p626 = scmp.lt.s32.totalorder %s33, 1
      %s627 = scalar_select %p626, %s33, 1
      %s628 = smul.addr %s627, 8
      %s629 = scalar_lea.vmem %s0, %s628
      %p630 = pneg %p54
      %p631 = pneg %p51
      %p632 = scmp.lt.s32.totalorder %s33, 1
      %s633 = scalar_select %p632, %s33, 1
      %s634 = smul.addr %s633, 8
      %s635 = scalar_lea.vmem %s1, %s634
      %p636 = pneg %p80
      %p637 = pneg %p77
      %p638 = pneg %p101
      %p639 = pneg %p98
      %p640 = pneg %p122
      %p641 = pneg %p119
      %p642 = pneg %p143
      %p643 = pneg %p140
      %p644 = pneg %p164
      %p645 = pneg %p161
      %p646 = pneg %p185
      %p647 = pneg %p182
      %p648 = pneg %p206
      %p649 = pneg %p203
      %p650 = pneg %p227
      %p651 = pneg %p224
      %p652 = pneg %p248
      %p653 = pneg %p245
      %p654 = pneg %p269
      %p655 = pneg %p266
      %p656 = pneg %p290
      %p657 = pneg %p287
      %p658 = pneg %p311
      %p659 = pneg %p308
      %p660 = pneg %p332
      %p661 = pneg %p329
      %p662 = pneg %p353
      %p663 = pneg %p350
      %p664 = pneg %p374
      %p665 = pneg %p371
      %p666 = pneg %p395
      %p667 = pneg %p392
      %p668 = pneg %p416
      %p669 = pneg %p413
      %p670 = pneg %p437
      %p671 = pneg %p434
      %p672 = pneg %p458
      %p673 = pneg %p455
      %p674 = pneg %p479
      %p675 = pneg %p476
      %p676 = pneg %p500
      %p677 = pneg %p497
      %p678 = pneg %p526
      %p679 = pneg %p523
      %p680 = scmp.lt.s32.totalorder %s33, 1
      %s681 = scalar_select %p680, %s33, 1
      %s682 = smul.addr %s681, 8
      %s683 = scalar_lea.vmem %s22, %s682
      %p684 = scmp.lt.s32.totalorder %s33, 1
      %s685 = scalar_select %p684, %s33, 1
      %s686 = smul.addr %s685, 8
      %s687 = scalar_lea.vmem %s0, %s686
      %p688 = scmp.lt.s32.totalorder %s33, 1
      %s689 = scalar_select %p688, %s33, 1
      %s690 = smul.addr %s689, 8
      %s691 = scalar_lea.vmem %s1, %s690
      %p692 = scmp.lt.s32.totalorder %s33, 1
      %s693 = scalar_select %p692, %s33, 1
      %s694 = smul.addr %s693, 8
      %s695 = scalar_lea.vmem %s22, %s694
      %v697 = vld [vmem:[%s687] sm:$0xff]
      %v698 = vld [vmem:[%s691] sm:$0xff]
      %v699 = vpack.c.bf16 %v697, %v697
      %v700 = vld [vmem:[%s2] sm:$0xf]
      %v701 = vld [vmem:[%s2 + $0x4] sm:$0xf]
      %v702 = vld [vmem:[%s2 + $0x8] sm:$0xf]
      %v703 = vld [vmem:[%s2 + $0xc] sm:$0xf]
      %v704 = vld [vmem:[%s3] sm:$0x1]
      %v706 = vlaneseq
      %v707 = vshrl.u32 %v706, 7
      %v708 = vsub.s32 0, %v707
      %v709 = vrot.slane %v704, %v708
      %v715 = vunpack.c.l.b16 %v700
      %v716 = vunpack.c.l.b16 %v701
      %v717 = vunpack.c.l.b16 %v702
      %v718 = vunpack.c.l.b16 %v703
      %v719 = vpack.c.b16 %v716, %v715
      %v720 = vpack.c.b16 %v718, %v717
      %vm723 = vcmask 261120
      %v725 = vsel %vm723, %v699, 0
      %727 = vmatprep.subr.bf16.mxu0 0
      %728 = vmatpush1.bf16.msra.mxu0 0
      %729 = vmatprep.subr.bf16.mxu0 0
      %730 = vmatpush1.bf16.msra.mxu0 0
      %731 = vmatprep.subr.bf16.mxu0 0
      %732 = vmatpush1.bf16.msra.mxu0 0
      %733 = vmatprep.subr.bf16.mxu0 0
      %734 = vmatpush1.bf16.msra.mxu0 0
      %735 = vmatprep.subr.bf16.mxu0 0
      %736 = vmatpush1.bf16.msra.mxu0 0
      %737 = vmatprep.subr.bf16.mxu0 0
      %738 = vmatpush1.bf16.msra.mxu0 0
      %739 = vmatprep.subr.bf16.mxu0 0
      %740 = vmatpush1.bf16.msra.mxu0 %v720
      %741 = vmatprep.subr.bf16.mxu0 0
      %742 = vmatpush1.bf16.msra.mxu0 %v719
      %743 = vmatprep.subr.bf16.mxu0 0
      %744 = vmatpush2.bf16.msra.mxu0 0
      %745 = vmatprep.subr.bf16.mxu0 0
      %746 = vmatpush2.bf16.msra.mxu0 0
      %747 = vmatprep.subr.bf16.mxu0 0
      %748 = vmatpush2.bf16.msra.mxu0 0
      %749 = vmatprep.subr.bf16.mxu0 0
      %750 = vmatpush2.bf16.msra.mxu0 0
      %751 = vmatprep.subr.bf16.mxu0 0
      %752 = vmatpush2.bf16.msra.mxu0 0
      %753 = vmatprep.subr.bf16.mxu0 0
      %754 = vmatpush2.bf16.msra.mxu0 0
      %755 = vmatprep.subr.bf16.mxu0 0
      %756 = vmatpush2.bf16.msra.mxu0 0
      %757 = vmatprep.subr.bf16.mxu0 0
      %758 = vmatpush2.bf16.msra.mxu0 0
      %759 = vmatprep.mubr.bf16.mxu0 0
      %760 = vmatmul.mubr.bf16.gmra.mxu0 %v725
      %v761 = vpop.f32.mrf.mxu0
      %v762 = vadd.f32 %v709, %v761
      %v763 = vpop.f32.mrf.mxu0
      %v764 = vpop.f32.mrf.mxu0
      %v765 = vpop.f32.mrf.mxu0
      %766 = vdwg.mxu0
      %v767 = vmul.f32 %v762, 0.35355338
      %v768 = vlaneseq
      %v769 = vshrl.u32 %v768, 7
      %v770 = vlaneseq
      %v771 = vand.u32 %v770, 127
      %vm772 = vcmp.le.s32.totalorder %v771, %v769
      %v773 = vsel %vm772, 1.0, -1e+32
      %v774 = vpack.c.bf16 %v767, %v767
      %v775 = vpack.c.bf16 %v762, %v762
      %777 = vrot.lane.b32.xlu0 %v775, 96
      %v778 = vpop.permute.xlu0 %777
      %vm779 = vcmask 64512
      %v781 = vsel %vm779, %v774, 0
      %v784 = vsel %vm779, %v778, 0
      %786 = vmatprep.subr.bf16.mxu0 0
      %787 = vmatpush1.bf16.xpose.msra.mxu0 0
      %788 = vmatprep.subr.bf16.mxu0 0
      %789 = vmatpush1.bf16.xpose.msra.mxu0 0
      %790 = vmatprep.subr.bf16.mxu0 0
      %791 = vmatpush1.bf16.xpose.msra.mxu0 0
      %792 = vmatprep.subr.bf16.mxu0 0
      %793 = vmatpush1.bf16.xpose.msra.mxu0 0
      %794 = vmatprep.subr.bf16.mxu0 0
      %795 = vmatpush1.bf16.xpose.msra.mxu0 0
      %796 = vmatprep.subr.bf16.mxu0 0
      %797 = vmatpush1.bf16.xpose.msra.mxu0 0
      %798 = vmatprep.subr.bf16.mxu0 0
      %799 = vmatpush1.bf16.xpose.msra.mxu0 0
      %800 = vmatprep.subr.bf16.mxu0 0
      %801 = vmatpush1.bf16.xpose.msra.mxu0 %v784
      %802 = vmatprep.subr.bf16.mxu0 0
      %803 = vmatpush2.bf16.xpose.msra.mxu0 0
      %804 = vmatprep.subr.bf16.mxu0 0
      %805 = vmatpush2.bf16.xpose.msra.mxu0 0
      %806 = vmatprep.subr.bf16.mxu0 0
      %807 = vmatpush2.bf16.xpose.msra.mxu0 0
      %808 = vmatprep.subr.bf16.mxu0 0
      %809 = vmatpush2.bf16.xpose.msra.mxu0 0
      %810 = vmatprep.subr.bf16.mxu0 0
      %811 = vmatpush2.bf16.xpose.msra.mxu0 0
      %812 = vmatprep.subr.bf16.mxu0 0
      %813 = vmatpush2.bf16.xpose.msra.mxu0 0
      %814 = vmatprep.subr.bf16.mxu0 0
      %815 = vmatpush2.bf16.xpose.msra.mxu0 0
      %816 = vmatprep.subr.bf16.mxu0 0
      %817 = vmatpush2.bf16.xpose.msra.mxu0 0
      %818 = vmatprep.mubr.bf16.mxu0 0
      %819 = vmatmul.mubr.bf16.gmra.mxu0 %v781
      %v820 = vpop.f32.mrf.mxu0
      %v821 = vadd.f32 %v773, %v820
      %v822 = vpop.f32.mrf.mxu0
      %v823 = vpop.f32.mrf.mxu0
      %v824 = vpop.f32.mrf.mxu0
      %825 = vdwg.mxu0
      %v826 = vsel %vm779, %v821, -inf
      %827 = vmax.xlane.f32.xlu0 %v826
      %v828 = vpop.xlane.xlu0 %827
      %v829 = vsub.f32 %v821, %v828
      %v830 = vmul.f32 %v829, 1.442695
      %v831 = vpow.pop %v830
      %v832 = vsel %vm779, %v831, 0.0
      %833 = vadd.xlane.f32.xlu0 %v832
      %v834 = vpop.xlane.xlu0 %833
      %v835 = vrcp.pop %v834
      %v836 = vmul.f32 %v831, %v835
      %v837 = vpack.c.bf16 %v836, %v836
      %838 = vrot.lane.b32.xlu0 %v775, 64
      %v839 = vpop.permute.xlu0 %838
      %v841 = vsel %vm779, %v837, 0
      %vm843 = vcmask 1043456
      %v845 = vsel %vm843, %v839, 0
      %847 = vmatprep.subr.bf16.mxu0 0
      %848 = vmatpush1.bf16.msra.mxu0 0
      %849 = vmatprep.subr.bf16.mxu0 0
      %850 = vmatpush1.bf16.msra.mxu0 0
      %851 = vmatprep.subr.bf16.mxu0 0
      %852 = vmatpush1.bf16.msra.mxu0 0
      %853 = vmatprep.subr.bf16.mxu0 0
      %854 = vmatpush1.bf16.msra.mxu0 0
      %855 = vmatprep.subr.bf16.mxu0 0
      %856 = vmatpush1.bf16.msra.mxu0 0
      %857 = vmatprep.subr.bf16.mxu0 0
      %858 = vmatpush1.bf16.msra.mxu0 0
      %859 = vmatprep.subr.bf16.mxu0 0
      %860 = vmatpush1.bf16.msra.mxu0 0
      %861 = vmatprep.subr.bf16.mxu0 0
      %862 = vmatpush1.bf16.msra.mxu0 %v845
      %863 = vmatprep.subr.bf16.mxu0 0
      %864 = vmatpush2.bf16.msra.mxu0 0
      %865 = vmatprep.subr.bf16.mxu0 0
      %866 = vmatpush2.bf16.msra.mxu0 0
      %867 = vmatprep.subr.bf16.mxu0 0
      %868 = vmatpush2.bf16.msra.mxu0 0
      %869 = vmatprep.subr.bf16.mxu0 0
      %870 = vmatpush2.bf16.msra.mxu0 0
      %871 = vmatprep.subr.bf16.mxu0 0
      %872 = vmatpush2.bf16.msra.mxu0 0
      %873 = vmatprep.subr.bf16.mxu0 0
      %874 = vmatpush2.bf16.msra.mxu0 0
      %875 = vmatprep.subr.bf16.mxu0 0
      %876 = vmatpush2.bf16.msra.mxu0 0
      %877 = vmatprep.subr.bf16.mxu0 0
      %878 = vmatpush2.bf16.msra.mxu0 0
      %879 = vmatprep.mubr.bf16.mxu0 0
      %880 = vmatmul.mubr.bf16.gmra.mxu0 %v841
      %v881 = vpop.f32.mrf.mxu0
      %v882 = vadd.f32 0.0, %v881
      %v883 = vpop.f32.mrf.mxu0
      %v884 = vpop.f32.mrf.mxu0
      %v885 = vpop.f32.mrf.mxu0
      %886 = vdwg.mxu0
      %888 = vrot.lane.b32.xlu0 %v774, 120
      %v889 = vpop.permute.xlu0 %888
      %890 = vrot.lane.b32.xlu0 %v775, 88
      %v891 = vpop.permute.xlu0 %890
      %v893 = vsel %vm779, %v889, 0
      %v896 = vsel %vm779, %v891, 0
      %898 = vmatprep.subr.bf16.mxu0 0
      %899 = vmatpush1.bf16.xpose.msra.mxu0 0
      %900 = vmatprep.subr.bf16.mxu0 0
      %901 = vmatpush1.bf16.xpose.msra.mxu0 0
      %902 = vmatprep.subr.bf16.mxu0 0
      %903 = vmatpush1.bf16.xpose.msra.mxu0 0
      %904 = vmatprep.subr.bf16.mxu0 0
      %905 = vmatpush1.bf16.xpose.msra.mxu0 0
      %906 = vmatprep.subr.bf16.mxu0 0
      %907 = vmatpush1.bf16.xpose.msra.mxu0 0
      %908 = vmatprep.subr.bf16.mxu0 0
      %909 = vmatpush1.bf16.xpose.msra.mxu0 0
      %910 = vmatprep.subr.bf16.mxu0 0
      %911 = vmatpush1.bf16.xpose.msra.mxu0 0
      %912 = vmatprep.subr.bf16.mxu0 0
      %913 = vmatpush1.bf16.xpose.msra.mxu0 %v896
      %914 = vmatprep.subr.bf16.mxu0 0
      %915 = vmatpush2.bf16.xpose.msra.mxu0 0
      %916 = vmatprep.subr.bf16.mxu0 0
      %917 = vmatpush2.bf16.xpose.msra.mxu0 0
      %918 = vmatprep.subr.bf16.mxu0 0
      %919 = vmatpush2.bf16.xpose.msra.mxu0 0
      %920 = vmatprep.subr.bf16.mxu0 0
      %921 = vmatpush2.bf16.xpose.msra.mxu0 0
      %922 = vmatprep.subr.bf16.mxu0 0
      %923 = vmatpush2.bf16.xpose.msra.mxu0 0
      %924 = vmatprep.subr.bf16.mxu0 0
      %925 = vmatpush2.bf16.xpose.msra.mxu0 0
      %926 = vmatprep.subr.bf16.mxu0 0
      %927 = vmatpush2.bf16.xpose.msra.mxu0 0
      %928 = vmatprep.subr.bf16.mxu0 0
      %929 = vmatpush2.bf16.xpose.msra.mxu0 0
      %930 = vmatprep.mubr.bf16.mxu0 0
      %931 = vmatmul.mubr.bf16.gmra.mxu0 %v893
      %v932 = vpop.f32.mrf.mxu0
      %v933 = vadd.f32 %v773, %v932
      %v934 = vpop.f32.mrf.mxu0
      %v935 = vpop.f32.mrf.mxu0
      %v936 = vpop.f32.mrf.mxu0
      %937 = vdwg.mxu0
      %v938 = vsel %vm779, %v933, -inf
      %939 = vmax.xlane.f32.xlu0 %v938
      %v940 = vpop.xlane.xlu0 %939
      %v941 = vsub.f32 %v933, %v940
      %v942 = vmul.f32 %v941, 1.442695
      %v943 = vpow.pop %v942
      %v944 = vsel %vm779, %v943, 0.0
      %945 = vadd.xlane.f32.xlu0 %v944
      %v946 = vpop.xlane.xlu0 %945
      %v947 = vrcp.pop %v946
      %v948 = vmul.f32 %v943, %v947
      %v949 = vpack.c.bf16 %v948, %v948
      %950 = vrot.lane.b32.xlu0 %v775, 56
      %v951 = vpop.permute.xlu0 %950
      %v953 = vsel %vm779, %v949, 0
      %v956 = vsel %vm843, %v951, 0
      %958 = vmatprep.subr.bf16.mxu0 0
      %959 = vmatpush1.bf16.msra.mxu0 0
      %960 = vmatprep.subr.bf16.mxu0 0
      %961 = vmatpush1.bf16.msra.mxu0 0
      %962 = vmatprep.subr.bf16.mxu0 0
      %963 = vmatpush1.bf16.msra.mxu0 0
      %964 = vmatprep.subr.bf16.mxu0 0
      %965 = vmatpush1.bf16.msra.mxu0 0
      %966 = vmatprep.subr.bf16.mxu0 0
      %967 = vmatpush1.bf16.msra.mxu0 0
      %968 = vmatprep.subr.bf16.mxu0 0
      %969 = vmatpush1.bf16.msra.mxu0 0
      %970 = vmatprep.subr.bf16.mxu0 0
      %971 = vmatpush1.bf16.msra.mxu0 0
      %972 = vmatprep.subr.bf16.mxu0 0
      %973 = vmatpush1.bf16.msra.mxu0 %v956
      %974 = vmatprep.subr.bf16.mxu0 0
      %975 = vmatpush2.bf16.msra.mxu0 0
      %976 = vmatprep.subr.bf16.mxu0 0
      %977 = vmatpush2.bf16.msra.mxu0 0
      %978 = vmatprep.subr.bf16.mxu0 0
      %979 = vmatpush2.bf16.msra.mxu0 0
      %980 = vmatprep.subr.bf16.mxu0 0
      %981 = vmatpush2.bf16.msra.mxu0 0
      %982 = vmatprep.subr.bf16.mxu0 0
      %983 = vmatpush2.bf16.msra.mxu0 0
      %984 = vmatprep.subr.bf16.mxu0 0
      %985 = vmatpush2.bf16.msra.mxu0 0
      %986 = vmatprep.subr.bf16.mxu0 0
      %987 = vmatpush2.bf16.msra.mxu0 0
      %988 = vmatprep.subr.bf16.mxu0 0
      %989 = vmatpush2.bf16.msra.mxu0 0
      %990 = vmatprep.mubr.bf16.mxu0 0
      %991 = vmatmul.mubr.bf16.gmra.mxu0 %v953
      %v992 = vpop.f32.mrf.mxu0
      %v993 = vadd.f32 0.0, %v992
      %v994 = vpop.f32.mrf.mxu0
      %v995 = vpop.f32.mrf.mxu0
      %v996 = vpop.f32.mrf.mxu0
      %997 = vdwg.mxu0
      %998 = vrot.lane.b32.xlu0 %v774, 112
      %v999 = vpop.permute.xlu0 %998
      %1000 = vrot.lane.b32.xlu0 %v775, 80
      %v1001 = vpop.permute.xlu0 %1000
      %v1003 = vsel %vm779, %v999, 0
      %v1006 = vsel %vm779, %v1001, 0
      %1008 = vmatprep.subr.bf16.mxu0 0
      %1009 = vmatpush1.bf16.xpose.msra.mxu0 0
      %1010 = vmatprep.subr.bf16.mxu0 0
      %1011 = vmatpush1.bf16.xpose.msra.mxu0 0
      %1012 = vmatprep.subr.bf16.mxu0 0
      %1013 = vmatpush1.bf16.xpose.msra.mxu0 0
      %1014 = vmatprep.subr.bf16.mxu0 0
      %1015 = vmatpush1.bf16.xpose.msra.mxu0 0
      %1016 = vmatprep.subr.bf16.mxu0 0
      %1017 = vmatpush1.bf16.xpose.msra.mxu0 0
      %1018 = vmatprep.subr.bf16.mxu0 0
      %1019 = vmatpush1.bf16.xpose.msra.mxu0 0
      %1020 = vmatprep.subr.bf16.mxu0 0
      %1021 = vmatpush1.bf16.xpose.msra.mxu0 0
      %1022 = vmatprep.subr.bf16.mxu0 0
      %1023 = vmatpush1.bf16.xpose.msra.mxu0 %v1006
      %1024 = vmatprep.subr.bf16.mxu0 0
      %1025 = vmatpush2.bf16.xpose.msra.mxu0 0
      %1026 = vmatprep.subr.bf16.mxu0 0
      %1027 = vmatpush2.bf16.xpose.msra.mxu0 0
      %1028 = vmatprep.subr.bf16.mxu0 0
      %1029 = vmatpush2.bf16.xpose.msra.mxu0 0
      %1030 = vmatprep.subr.bf16.mxu0 0
      %1031 = vmatpush2.bf16.xpose.msra.mxu0 0
      %1032 = vmatprep.subr.bf16.mxu0 0
      %1033 = vmatpush2.bf16.xpose.msra.mxu0 0
      %1034 = vmatprep.subr.bf16.mxu0 0
      %1035 = vmatpush2.bf16.xpose.msra.mxu0 0
      %1036 = vmatprep.subr.bf16.mxu0 0
      %1037 = vmatpush2.bf16.xpose.msra.mxu0 0
      %1038 = vmatprep.subr.bf16.mxu0 0
      %1039 = vmatpush2.bf16.xpose.msra.mxu0 0
      %1040 = vmatprep.mubr.bf16.mxu0 0
      %1041 = vmatmul.mubr.bf16.gmra.mxu0 %v1003
      %v1042 = vpop.f32.mrf.mxu0
      %v1043 = vadd.f32 %v773, %v1042
      %v1044 = vpop.f32.mrf.mxu0
      %v1045 = vpop.f32.mrf.mxu0
      %v1046 = vpop.f32.mrf.mxu0
      %1047 = vdwg.mxu0
      %v1048 = vsel %vm779, %v1043, -inf
      %1049 = vmax.xlane.f32.xlu0 %v1048
      %v1050 = vpop.xlane.xlu0 %1049
      %v1051 = vsub.f32 %v1043, %v1050
      %v1052 = vmul.f32 %v1051, 1.442695
      %v1053 = vpow.pop %v1052
      %v1054 = vsel %vm779, %v1053, 0.0
      %1055 = vadd.xlane.f32.xlu0 %v1054
      %v1056 = vpop.xlane.xlu0 %1055
      %v1057 = vrcp.pop %v1056
      %v1058 = vmul.f32 %v1053, %v1057
      %v1059 = vpack.c.bf16 %v1058, %v1058
      %1060 = vrot.lane.b32.xlu0 %v775, 48
      %v1061 = vpop.permute.xlu0 %1060
      %v1063 = vsel %vm779, %v1059, 0
      %v1066 = vsel %vm843, %v1061, 0
      %1068 = vmatprep.subr.bf16.mxu0 0
      %1069 = vmatpush1.bf16.msra.mxu0 0
      %1070 = vmatprep.subr.bf16.mxu0 0
      %1071 = vmatpush1.bf16.msra.mxu0 0
      %1072 = vmatprep.subr.bf16.mxu0 0
      %1073 = vmatpush1.bf16.msra.mxu0 0
      %1074 = vmatprep.subr.bf16.mxu0 0
      %1075 = vmatpush1.bf16.msra.mxu0 0
      %1076 = vmatprep.subr.bf16.mxu0 0
      %1077 = vmatpush1.bf16.msra.mxu0 0
      %1078 = vmatprep.subr.bf16.mxu0 0
      %1079 = vmatpush1.bf16.msra.mxu0 0
      %1080 = vmatprep.subr.bf16.mxu0 0
      %1081 = vmatpush1.bf16.msra.mxu0 0
      %1082 = vmatprep.subr.bf16.mxu0 0
      %1083 = vmatpush1.bf16.msra.mxu0 %v1066
      %1084 = vmatprep.subr.bf16.mxu0 0
      %1085 = vmatpush2.bf16.msra.mxu0 0
      %1086 = vmatprep.subr.bf16.mxu0 0
      %1087 = vmatpush2.bf16.msra.mxu0 0
      %1088 = vmatprep.subr.bf16.mxu0 0
      %1089 = vmatpush2.bf16.msra.mxu0 0
      %1090 = vmatprep.subr.bf16.mxu0 0
      %1091 = vmatpush2.bf16.msra.mxu0 0
      %1092 = vmatprep.subr.bf16.mxu0 0
      %1093 = vmatpush2.bf16.msra.mxu0 0
      %1094 = vmatprep.subr.bf16.mxu0 0
      %1095 = vmatpush2.bf16.msra.mxu0 0
      %1096 = vmatprep.subr.bf16.mxu0 0
      %1097 = vmatpush2.bf16.msra.mxu0 0
      %1098 = vmatprep.subr.bf16.mxu0 0
      %1099 = vmatpush2.bf16.msra.mxu0 0
      %1100 = vmatprep.mubr.bf16.mxu0 0
      %1101 = vmatmul.mubr.bf16.gmra.mxu0 %v1063
      %v1102 = vpop.f32.mrf.mxu0
      %v1103 = vadd.f32 0.0, %v1102
      %v1104 = vpop.f32.mrf.mxu0
      %v1105 = vpop.f32.mrf.mxu0
      %v1106 = vpop.f32.mrf.mxu0
      %1107 = vdwg.mxu0
      %1108 = vrot.lane.b32.xlu0 %v774, 104
      %v1109 = vpop.permute.xlu0 %1108
      %1110 = vrot.lane.b32.xlu0 %v775, 72
      %v1111 = vpop.permute.xlu0 %1110
      %v1113 = vsel %vm779, %v1109, 0
      %v1116 = vsel %vm779, %v1111, 0
      %1118 = vmatprep.subr.bf16.mxu0 0
      %1119 = vmatpush1.bf16.xpose.msra.mxu0 0
      %1120 = vmatprep.subr.bf16.mxu0 0
      %1121 = vmatpush1.bf16.xpose.msra.mxu0 0
      %1122 = vmatprep.subr.bf16.mxu0 0
      %1123 = vmatpush1.bf16.xpose.msra.mxu0 0
      %1124 = vmatprep.subr.bf16.mxu0 0
      %1125 = vmatpush1.bf16.xpose.msra.mxu0 0
      %1126 = vmatprep.subr.bf16.mxu0 0
      %1127 = vmatpush1.bf16.xpose.msra.mxu0 0
      %1128 = vmatprep.subr.bf16.mxu0 0
      %1129 = vmatpush1.bf16.xpose.msra.mxu0 0
      %1130 = vmatprep.subr.bf16.mxu0 0
      %1131 = vmatpush1.bf16.xpose.msra.mxu0 0
      %1132 = vmatprep.subr.bf16.mxu0 0
      %1133 = vmatpush1.bf16.xpose.msra.mxu0 %v1116
      %1134 = vmatprep.subr.bf16.mxu0 0
      %1135 = vmatpush2.bf16.xpose.msra.mxu0 0
      %1136 = vmatprep.subr.bf16.mxu0 0
      %1137 = vmatpush2.bf16.xpose.msra.mxu0 0
      %1138 = vmatprep.subr.bf16.mxu0 0
      %1139 = vmatpush2.bf16.xpose.msra.mxu0 0
      %1140 = vmatprep.subr.bf16.mxu0 0
      %1141 = vmatpush2.bf16.xpose.msra.mxu0 0
      %1142 = vmatprep.subr.bf16.mxu0 0
      %1143 = vmatpush2.bf16.xpose.msra.mxu0 0
      %1144 = vmatprep.subr.bf16.mxu0 0
      %1145 = vmatpush2.bf16.xpose.msra.mxu0 0
      %1146 = vmatprep.subr.bf16.mxu0 0
      %1147 = vmatpush2.bf16.xpose.msra.mxu0 0
      %1148 = vmatprep.subr.bf16.mxu0 0
      %1149 = vmatpush2.bf16.xpose.msra.mxu0 0
      %1150 = vmatprep.mubr.bf16.mxu0 0
      %1151 = vmatmul.mubr.bf16.gmra.mxu0 %v1113
      %v1152 = vpop.f32.mrf.mxu0
      %v1153 = vadd.f32 %v773, %v1152
      %v1154 = vpop.f32.mrf.mxu0
      %v1155 = vpop.f32.mrf.mxu0
      %v1156 = vpop.f32.mrf.mxu0
      %1157 = vdwg.mxu0
      %v1158 = vsel %vm779, %v1153, -inf
      %1159 = vmax.xlane.f32.xlu0 %v1158
      %v1160 = vpop.xlane.xlu0 %1159
      %v1161 = vsub.f32 %v1153, %v1160
      %v1162 = vmul.f32 %v1161, 1.442695
      %v1163 = vpow.pop %v1162
      %v1164 = vsel %vm779, %v1163, 0.0
      %1165 = vadd.xlane.f32.xlu0 %v1164
      %v1166 = vpop.xlane.xlu0 %1165
      %v1167 = vrcp.pop %v1166
      %v1168 = vmul.f32 %v1163, %v1167
      %v1169 = vpack.c.bf16 %v1168, %v1168
      %1170 = vrot.lane.b32.xlu0 %v775, 40
      %v1171 = vpop.permute.xlu0 %1170
      %v1173 = vsel %vm779, %v1169, 0
      %v1176 = vsel %vm843, %v1171, 0
      %1178 = vmatprep.subr.bf16.mxu0 0
      %1179 = vmatpush1.bf16.msra.mxu0 0
      %1180 = vmatprep.subr.bf16.mxu0 0
      %1181 = vmatpush1.bf16.msra.mxu0 0
      %1182 = vmatprep.subr.bf16.mxu0 0
      %1183 = vmatpush1.bf16.msra.mxu0 0
      %1184 = vmatprep.subr.bf16.mxu0 0
      %1185 = vmatpush1.bf16.msra.mxu0 0
      %1186 = vmatprep.subr.bf16.mxu0 0
      %1187 = vmatpush1.bf16.msra.mxu0 0
      %1188 = vmatprep.subr.bf16.mxu0 0
      %1189 = vmatpush1.bf16.msra.mxu0 0
      %1190 = vmatprep.subr.bf16.mxu0 0
      %1191 = vmatpush1.bf16.msra.mxu0 0
      %1192 = vmatprep.subr.bf16.mxu0 0
      %1193 = vmatpush1.bf16.msra.mxu0 %v1176
      %1194 = vmatprep.subr.bf16.mxu0 0
      %1195 = vmatpush2.bf16.msra.mxu0 0
      %1196 = vmatprep.subr.bf16.mxu0 0
      %1197 = vmatpush2.bf16.msra.mxu0 0
      %1198 = vmatprep.subr.bf16.mxu0 0
      %1199 = vmatpush2.bf16.msra.mxu0 0
      %1200 = vmatprep.subr.bf16.mxu0 0
      %1201 = vmatpush2.bf16.msra.mxu0 0
      %1202 = vmatprep.subr.bf16.mxu0 0
      %1203 = vmatpush2.bf16.msra.mxu0 0
      %1204 = vmatprep.subr.bf16.mxu0 0
      %1205 = vmatpush2.bf16.msra.mxu0 0
      %1206 = vmatprep.subr.bf16.mxu0 0
      %1207 = vmatpush2.bf16.msra.mxu0 0
      %1208 = vmatprep.subr.bf16.mxu0 0
      %1209 = vmatpush2.bf16.msra.mxu0 0
      %1210 = vmatprep.mubr.bf16.mxu0 0
      %1211 = vmatmul.mubr.bf16.gmra.mxu0 %v1173
      %v1212 = vpop.f32.mrf.mxu0
      %v1213 = vadd.f32 0.0, %v1212
      %v1214 = vpop.f32.mrf.mxu0
      %v1215 = vpop.f32.mrf.mxu0
      %v1216 = vpop.f32.mrf.mxu0
      %1217 = vdwg.mxu0
      %1219 = vrot.lane.b32.xlu0 %v993, 8
      %v1220 = vpop.permute.xlu0 %1219
      %1223 = vrot.lane.b32.xlu0 %v1103, 16
      %v1224 = vpop.permute.xlu0 %1223
      %1227 = vrot.lane.b32.xlu0 %v1213, 24
      %v1228 = vpop.permute.xlu0 %1227
      %v1230 = vsel %vm779, %v882, %v1220
      %vm1231 = vcmask 130048
      %v1232 = vsel %vm1231, %v1230, %v1224
      %vm1233 = vcmask 195584
      %v1234 = vsel %vm1233, %v1232, %v1228
      %v1235 = vpack.c.bf16 %v1234, %v1234
      %v1236 = vld [vmem:[%s4] sm:$0xf]
      %v1237 = vld [vmem:[%s4 + $0x4] sm:$0xf]
      %v1238 = vld [vmem:[%s4 + $0x8] sm:$0xf]
      %v1239 = vld [vmem:[%s4 + $0xc] sm:$0xf]
      %v1240 = vld [vmem:[%s5] sm:$0x1]
      %v1242 = vlaneseq
      %v1243 = vshrl.u32 %v1242, 7
      %v1244 = vsub.s32 0, %v1243
      %v1245 = vrot.slane %v1240, %v1244
      %v1251 = vunpack.c.l.b16 %v1236
      %v1252 = vunpack.c.l.b16 %v1237
      %v1253 = vunpack.c.l.b16 %v1238
      %v1254 = vunpack.c.l.b16 %v1239
      %v1255 = vpack.c.b16 %v1252, %v1251
      %v1256 = vpack.c.b16 %v1254, %v1253
      %v1260 = vsel %vm723, %v1235, 0
      %1262 = vmatprep.subr.bf16.mxu0 0
      %1263 = vmatpush1.bf16.msra.mxu0 0
      %1264 = vmatprep.subr.bf16.mxu0 0
      %1265 = vmatpush1.bf16.msra.mxu0 0
      %1266 = vmatprep.subr.bf16.mxu0 0
      %1267 = vmatpush1.bf16.msra.mxu0 0
      %1268 = vmatprep.subr.bf16.mxu0 0
      %1269 = vmatpush1.bf16.msra.mxu0 0
      %1270 = vmatprep.subr.bf16.mxu0 0
      %1271 = vmatpush1.bf16.msra.mxu0 0
      %1272 = vmatprep.subr.bf16.mxu0 0
      %1273 = vmatpush1.bf16.msra.mxu0 0
      %1274 = vmatprep.subr.bf16.mxu0 0
      %1275 = vmatpush1.bf16.msra.mxu0 %v1256
      %1276 = vmatprep.subr.bf16.mxu0 0
      %1277 = vmatpush1.bf16.msra.mxu0 %v1255
      %1278 = vmatprep.subr.bf16.mxu0 0
      %1279 = vmatpush2.bf16.msra.mxu0 0
      %1280 = vmatprep.subr.bf16.mxu0 0
      %1281 = vmatpush2.bf16.msra.mxu0 0
      %1282 = vmatprep.subr.bf16.mxu0 0
      %1283 = vmatpush2.bf16.msra.mxu0 0
      %1284 = vmatprep.subr.bf16.mxu0 0
      %1285 = vmatpush2.bf16.msra.mxu0 0
      %1286 = vmatprep.subr.bf16.mxu0 0
      %1287 = vmatpush2.bf16.msra.mxu0 0
      %1288 = vmatprep.subr.bf16.mxu0 0
      %1289 = vmatpush2.bf16.msra.mxu0 0
      %1290 = vmatprep.subr.bf16.mxu0 0
      %1291 = vmatpush2.bf16.msra.mxu0 0
      %1292 = vmatprep.subr.bf16.mxu0 0
      %1293 = vmatpush2.bf16.msra.mxu0 0
      %1294 = vmatprep.mubr.bf16.mxu0 0
      %1295 = vmatmul.mubr.bf16.gmra.mxu0 %v1260
      %v1296 = vpop.f32.mrf.mxu0
      %v1297 = vadd.f32 %v1245, %v1296
      %v1298 = vpop.f32.mrf.mxu0
      %v1299 = vpop.f32.mrf.mxu0
      %v1300 = vpop.f32.mrf.mxu0
      %1301 = vdwg.mxu0
      %v1302 = vadd.f32 %v697, %v1297
      %v1303 = vld [vmem:[%s6] sm:$0x1]
      %v1304 = vld [vmem:[%s7] sm:$0x1]
      %v1305 = vsel %vm723, %v1302, 0.0
      %1306 = vadd.xlane.f32.xlu0 %v1305
      %v1307 = vpop.xlane.xlu0 %1306
      %v1308 = vrcp.pop 32.0
      %v1309 = vmul.f32 %v1307, %v1308
      %v1310 = vsub.f32 %v1302, %v1309
      %v1311 = vmul.f32 %v1310, %v1310
      %v1312 = vsel %vm723, %v1311, 0.0
      %1313 = vadd.xlane.f32.xlu0 %v1312
      %v1314 = vpop.xlane.xlu0 %1313
      %v1315 = vmul.f32 %v1314, %v1308
      %v1316 = vadd.f32 %v1315, 1e-05
      %v1317 = vrsqrt.pop %v1316
      %v1318 = vmul.f32 %v1310, %v1317
      %v1320 = vlaneseq
      %v1321 = vshrl.u32 %v1320, 7
      %v1322 = vsub.s32 0, %v1321
      %v1323 = vrot.slane %v1303, %v1322
      %v1325 = vmul.f32 %v1318, %v1323
      %v1327 = vlaneseq
      %v1328 = vshrl.u32 %v1327, 7
      %v1329 = vsub.s32 0, %v1328
      %v1330 = vrot.slane %v1304, %v1329
      %v1332 = vadd.f32 %v1325, %v1330
      %v1333 = vpack.c.bf16 %v1332, %v1332
      %v1334 = vld [vmem:[%s8] sm:$0xf]
      %v1335 = vld [vmem:[%s8 + $0x4] sm:$0xf]
      %v1336 = vld [vmem:[%s8 + $0x8] sm:$0xf]
      %v1337 = vld [vmem:[%s8 + $0xc] sm:$0xf]
      %v1338 = vld [vmem:[%s9] sm:$0x1]
      %v1340 = vlaneseq
      %v1341 = vshrl.u32 %v1340, 7
      %v1342 = vsub.s32 0, %v1341
      %v1343 = vrot.slane %v1338, %v1342
      %v1349 = vunpack.c.l.b16 %v1334
      %v1350 = vunpack.c.l.b16 %v1335
      %v1351 = vunpack.c.l.b16 %v1336
      %v1352 = vunpack.c.l.b16 %v1337
      %v1353 = vpack.c.b16 %v1350, %v1349
      %v1354 = vpack.c.b16 %v1352, %v1351
      %v1358 = vsel %vm723, %v1333, 0
      %1360 = vmatprep.subr.bf16.mxu0 0
      %1361 = vmatpush1.bf16.msra.mxu0 0
      %1362 = vmatprep.subr.bf16.mxu0 0
      %1363 = vmatpush1.bf16.msra.mxu0 0
      %1364 = vmatprep.subr.bf16.mxu0 0
      %1365 = vmatpush1.bf16.msra.mxu0 0
      %1366 = vmatprep.subr.bf16.mxu0 0
      %1367 = vmatpush1.bf16.msra.mxu0 0
      %1368 = vmatprep.subr.bf16.mxu0 0
      %1369 = vmatpush1.bf16.msra.mxu0 0
      %1370 = vmatprep.subr.bf16.mxu0 0
      %1371 = vmatpush1.bf16.msra.mxu0 0
      %1372 = vmatprep.subr.bf16.mxu0 0
      %1373 = vmatpush1.bf16.msra.mxu0 %v1354
      %1374 = vmatprep.subr.bf16.mxu0 0
      %1375 = vmatpush1.bf16.msra.mxu0 %v1353
      %1376 = vmatprep.subr.bf16.mxu0 0
      %1377 = vmatpush2.bf16.msra.mxu0 0
      %1378 = vmatprep.subr.bf16.mxu0 0
      %1379 = vmatpush2.bf16.msra.mxu0 0
      %1380 = vmatprep.subr.bf16.mxu0 0
      %1381 = vmatpush2.bf16.msra.mxu0 0
      %1382 = vmatprep.subr.bf16.mxu0 0
      %1383 = vmatpush2.bf16.msra.mxu0 0
      %1384 = vmatprep.subr.bf16.mxu0 0
      %1385 = vmatpush2.bf16.msra.mxu0 0
      %1386 = vmatprep.subr.bf16.mxu0 0
      %1387 = vmatpush2.bf16.msra.mxu0 0
      %1388 = vmatprep.subr.bf16.mxu0 0
      %1389 = vmatpush2.bf16.msra.mxu0 0
      %1390 = vmatprep.subr.bf16.mxu0 0
      %1391 = vmatpush2.bf16.msra.mxu0 0
      %1392 = vmatprep.mubr.bf16.mxu0 0
      %1393 = vmatmul.mubr.bf16.gmra.mxu0 %v1358
      %v1394 = vpop.f32.mrf.mxu0
      %v1395 = vadd.f32 %v1343, %v1394
      %v1396 = vpop.f32.mrf.mxu0
      %v1397 = vpop.f32.mrf.mxu0
      %v1398 = vpop.f32.mrf.mxu0
      %1399 = vdwg.mxu0
      %v1400 = vmul.f32 %v1395, 0.35355338
      %v1401 = vpack.c.bf16 %v698, %v698
      %v1402 = vld [vmem:[%s10] sm:$0xf]
      %v1403 = vld [vmem:[%s10 + $0x4] sm:$0xf]
      %v1404 = vld [vmem:[%s10 + $0x8] sm:$0xf]
      %v1405 = vld [vmem:[%s10 + $0xc] sm:$0xf]
      %v1406 = vld [vmem:[%s11] sm:$0x1]
      %v1408 = vlaneseq
      %v1409 = vshrl.u32 %v1408, 7
      %v1410 = vsub.s32 0, %v1409
      %v1411 = vrot.slane %v1406, %v1410
      %v1417 = vunpack.c.l.b16 %v1402
      %v1418 = vunpack.c.l.b16 %v1403
      %v1419 = vunpack.c.l.b16 %v1404
      %v1420 = vunpack.c.l.b16 %v1405
      %v1421 = vpack.c.b16 %v1418, %v1417
      %v1422 = vpack.c.b16 %v1420, %v1419
      %v1426 = vsel %vm723, %v1401, 0
      %1428 = vmatprep.subr.bf16.mxu0 0
      %1429 = vmatpush1.bf16.msra.mxu0 0
      %1430 = vmatprep.subr.bf16.mxu0 0
      %1431 = vmatpush1.bf16.msra.mxu0 0
      %1432 = vmatprep.subr.bf16.mxu0 0
      %1433 = vmatpush1.bf16.msra.mxu0 0
      %1434 = vmatprep.subr.bf16.mxu0 0
      %1435 = vmatpush1.bf16.msra.mxu0 0
      %1436 = vmatprep.subr.bf16.mxu0 0
      %1437 = vmatpush1.bf16.msra.mxu0 0
      %1438 = vmatprep.subr.bf16.mxu0 0
      %1439 = vmatpush1.bf16.msra.mxu0 0
      %1440 = vmatprep.subr.bf16.mxu0 0
      %1441 = vmatpush1.bf16.msra.mxu0 %v1422
      %1442 = vmatprep.subr.bf16.mxu0 0
      %1443 = vmatpush1.bf16.msra.mxu0 %v1421
      %1444 = vmatprep.subr.bf16.mxu0 0
      %1445 = vmatpush2.bf16.msra.mxu0 0
      %1446 = vmatprep.subr.bf16.mxu0 0
      %1447 = vmatpush2.bf16.msra.mxu0 0
      %1448 = vmatprep.subr.bf16.mxu0 0
      %1449 = vmatpush2.bf16.msra.mxu0 0
      %1450 = vmatprep.subr.bf16.mxu0 0
      %1451 = vmatpush2.bf16.msra.mxu0 0
      %1452 = vmatprep.subr.bf16.mxu0 0
      %1453 = vmatpush2.bf16.msra.mxu0 0
      %1454 = vmatprep.subr.bf16.mxu0 0
      %1455 = vmatpush2.bf16.msra.mxu0 0
      %1456 = vmatprep.subr.bf16.mxu0 0
      %1457 = vmatpush2.bf16.msra.mxu0 0
      %1458 = vmatprep.subr.bf16.mxu0 0
      %1459 = vmatpush2.bf16.msra.mxu0 0
      %1460 = vmatprep.mubr.bf16.mxu0 0
      %1461 = vmatmul.mubr.bf16.gmra.mxu0 %v1426
      %v1462 = vpop.f32.mrf.mxu0
      %v1463 = vadd.f32 %v1411, %v1462
      %v1464 = vpop.f32.mrf.mxu0
      %v1465 = vpop.f32.mrf.mxu0
      %v1466 = vpop.f32.mrf.mxu0
      %1467 = vdwg.mxu0
      %v1468 = vpack.c.bf16 %v1400, %v1400
      %v1469 = vpack.c.bf16 %v1463, %v1463
      %v1471 = vsel %vm779, %v1468, 0
      %v1474 = vsel %vm779, %v1469, 0
      %1476 = vmatprep.subr.bf16.mxu0 0
      %1477 = vmatpush1.bf16.xpose.msra.mxu0 0
      %1478 = vmatprep.subr.bf16.mxu0 0
      %1479 = vmatpush1.bf16.xpose.msra.mxu0 0
      %1480 = vmatprep.subr.bf16.mxu0 0
      %1481 = vmatpush1.bf16.xpose.msra.mxu0 0
      %1482 = vmatprep.subr.bf16.mxu0 0
      %1483 = vmatpush1.bf16.xpose.msra.mxu0 0
      %1484 = vmatprep.subr.bf16.mxu0 0
      %1485 = vmatpush1.bf16.xpose.msra.mxu0 0
      %1486 = vmatprep.subr.bf16.mxu0 0
      %1487 = vmatpush1.bf16.xpose.msra.mxu0 0
      %1488 = vmatprep.subr.bf16.mxu0 0
      %1489 = vmatpush1.bf16.xpose.msra.mxu0 0
      %1490 = vmatprep.subr.bf16.mxu0 0
      %1491 = vmatpush1.bf16.xpose.msra.mxu0 %v1474
      %1492 = vmatprep.subr.bf16.mxu0 0
      %1493 = vmatpush2.bf16.xpose.msra.mxu0 0
      %1494 = vmatprep.subr.bf16.mxu0 0
      %1495 = vmatpush2.bf16.xpose.msra.mxu0 0
      %1496 = vmatprep.subr.bf16.mxu0 0
      %1497 = vmatpush2.bf16.xpose.msra.mxu0 0
      %1498 = vmatprep.subr.bf16.mxu0 0
      %1499 = vmatpush2.bf16.xpose.msra.mxu0 0
      %1500 = vmatprep.subr.bf16.mxu0 0
      %1501 = vmatpush2.bf16.xpose.msra.mxu0 0
      %1502 = vmatprep.subr.bf16.mxu0 0
      %1503 = vmatpush2.bf16.xpose.msra.mxu0 0
      %1504 = vmatprep.subr.bf16.mxu0 0
      %1505 = vmatpush2.bf16.xpose.msra.mxu0 0
      %1506 = vmatprep.subr.bf16.mxu0 0
      %1507 = vmatpush2.bf16.xpose.msra.mxu0 0
      %1508 = vmatprep.mubr.bf16.mxu0 0
      %1509 = vmatmul.mubr.bf16.gmra.mxu0 %v1471
      %v1510 = vpop.f32.mrf.mxu0
      %v1511 = vadd.f32 0.0, %v1510
      %v1512 = vpop.f32.mrf.mxu0
      %v1513 = vpop.f32.mrf.mxu0
      %v1514 = vpop.f32.mrf.mxu0
      %1515 = vdwg.mxu0
      %v1516 = vsel %vm779, %v1511, -inf
      %1517 = vmax.xlane.f32.xlu0 %v1516
      %v1518 = vpop.xlane.xlu0 %1517
      %v1519 = vsub.f32 %v1511, %v1518
      %v1520 = vmul.f32 %v1519, 1.442695
      %v1521 = vpow.pop %v1520
      %v1522 = vsel %vm779, %v1521, 0.0
      %1523 = vadd.xlane.f32.xlu0 %v1522
      %v1524 = vpop.xlane.xlu0 %1523
      %v1525 = vrcp.pop %v1524
      %v1526 = vmul.f32 %v1521, %v1525
      %v1527 = vpack.c.bf16 %v1526, %v1526
      %1529 = vrot.lane.b32.xlu0 %v1469, 96
      %v1530 = vpop.permute.xlu0 %1529
      %v1532 = vsel %vm779, %v1527, 0
      %v1535 = vsel %vm843, %v1530, 0
      %1537 = vmatprep.subr.bf16.mxu0 0
      %1538 = vmatpush1.bf16.msra.mxu0 0
      %1539 = vmatprep.subr.bf16.mxu0 0
      %1540 = vmatpush1.bf16.msra.mxu0 0
      %1541 = vmatprep.subr.bf16.mxu0 0
      %1542 = vmatpush1.bf16.msra.mxu0 0
      %1543 = vmatprep.subr.bf16.mxu0 0
      %1544 = vmatpush1.bf16.msra.mxu0 0
      %1545 = vmatprep.subr.bf16.mxu0 0
      %1546 = vmatpush1.bf16.msra.mxu0 0
      %1547 = vmatprep.subr.bf16.mxu0 0
      %1548 = vmatpush1.bf16.msra.mxu0 0
      %1549 = vmatprep.subr.bf16.mxu0 0
      %1550 = vmatpush1.bf16.msra.mxu0 0
      %1551 = vmatprep.subr.bf16.mxu0 0
      %1552 = vmatpush1.bf16.msra.mxu0 %v1535
      %1553 = vmatprep.subr.bf16.mxu0 0
      %1554 = vmatpush2.bf16.msra.mxu0 0
      %1555 = vmatprep.subr.bf16.mxu0 0
      %1556 = vmatpush2.bf16.msra.mxu0 0
      %1557 = vmatprep.subr.bf16.mxu0 0
      %1558 = vmatpush2.bf16.msra.mxu0 0
      %1559 = vmatprep.subr.bf16.mxu0 0
      %1560 = vmatpush2.bf16.msra.mxu0 0
      %1561 = vmatprep.subr.bf16.mxu0 0
      %1562 = vmatpush2.bf16.msra.mxu0 0
      %1563 = vmatprep.subr.bf16.mxu0 0
      %1564 = vmatpush2.bf16.msra.mxu0 0
      %1565 = vmatprep.subr.bf16.mxu0 0
      %1566 = vmatpush2.bf16.msra.mxu0 0
      %1567 = vmatprep.subr.bf16.mxu0 0
      %1568 = vmatpush2.bf16.msra.mxu0 0
      %1569 = vmatprep.mubr.bf16.mxu0 0
      %1570 = vmatmul.mubr.bf16.gmra.mxu0 %v1532
      %v1571 = vpop.f32.mrf.mxu0
      %v1572 = vadd.f32 0.0, %v1571
      %v1573 = vpop.f32.mrf.mxu0
      %v1574 = vpop.f32.mrf.mxu0
      %v1575 = vpop.f32.mrf.mxu0
      %1576 = vdwg.mxu0
      %1578 = vrot.lane.b32.xlu0 %v1468, 120
      %v1579 = vpop.permute.xlu0 %1578
      %1580 = vrot.lane.b32.xlu0 %v1469, 120
      %v1581 = vpop.permute.xlu0 %1580
      %v1583 = vsel %vm779, %v1579, 0
      %v1586 = vsel %vm779, %v1581, 0
      %1588 = vmatprep.subr.bf16.mxu0 0
      %1589 = vmatpush1.bf16.xpose.msra.mxu0 0
      %1590 = vmatprep.subr.bf16.mxu0 0
      %1591 = vmatpush1.bf16.xpose.msra.mxu0 0
      %1592 = vmatprep.subr.bf16.mxu0 0
      %1593 = vmatpush1.bf16.xpose.msra.mxu0 0
      %1594 = vmatprep.subr.bf16.mxu0 0
      %1595 = vmatpush1.bf16.xpose.msra.mxu0 0
      %1596 = vmatprep.subr.bf16.mxu0 0
      %1597 = vmatpush1.bf16.xpose.msra.mxu0 0
      %1598 = vmatprep.subr.bf16.mxu0 0
      %1599 = vmatpush1.bf16.xpose.msra.mxu0 0
      %1600 = vmatprep.subr.bf16.mxu0 0
      %1601 = vmatpush1.bf16.xpose.msra.mxu0 0
      %1602 = vmatprep.subr.bf16.mxu0 0
      %1603 = vmatpush1.bf16.xpose.msra.mxu0 %v1586
      %1604 = vmatprep.subr.bf16.mxu0 0
      %1605 = vmatpush2.bf16.xpose.msra.mxu0 0
      %1606 = vmatprep.subr.bf16.mxu0 0
      %1607 = vmatpush2.bf16.xpose.msra.mxu0 0
      %1608 = vmatprep.subr.bf16.mxu0 0
      %1609 = vmatpush2.bf16.xpose.msra.mxu0 0
      %1610 = vmatprep.subr.bf16.mxu0 0
      %1611 = vmatpush2.bf16.xpose.msra.mxu0 0
      %1612 = vmatprep.subr.bf16.mxu0 0
      %1613 = vmatpush2.bf16.xpose.msra.mxu0 0
      %1614 = vmatprep.subr.bf16.mxu0 0
      %1615 = vmatpush2.bf16.xpose.msra.mxu0 0
      %1616 = vmatprep.subr.bf16.mxu0 0
      %1617 = vmatpush2.bf16.xpose.msra.mxu0 0
      %1618 = vmatprep.subr.bf16.mxu0 0
      %1619 = vmatpush2.bf16.xpose.msra.mxu0 0
      %1620 = vmatprep.mubr.bf16.mxu0 0
      %1621 = vmatmul.mubr.bf16.gmra.mxu0 %v1583
      %v1622 = vpop.f32.mrf.mxu0
      %v1623 = vadd.f32 0.0, %v1622
      %v1624 = vpop.f32.mrf.mxu0
      %v1625 = vpop.f32.mrf.mxu0
      %v1626 = vpop.f32.mrf.mxu0
      %1627 = vdwg.mxu0
      %v1628 = vsel %vm779, %v1623, -inf
      %1629 = vmax.xlane.f32.xlu0 %v1628
      %v1630 = vpop.xlane.xlu0 %1629
      %v1631 = vsub.f32 %v1623, %v1630
      %v1632 = vmul.f32 %v1631, 1.442695
      %v1633 = vpow.pop %v1632
      %v1634 = vsel %vm779, %v1633, 0.0
      %1635 = vadd.xlane.f32.xlu0 %v1634
      %v1636 = vpop.xlane.xlu0 %1635
      %v1637 = vrcp.pop %v1636
      %v1638 = vmul.f32 %v1633, %v1637
      %v1639 = vpack.c.bf16 %v1638, %v1638
      %1640 = vrot.lane.b32.xlu0 %v1469, 88
      %v1641 = vpop.permute.xlu0 %1640
      %v1643 = vsel %vm779, %v1639, 0
      %v1646 = vsel %vm843, %v1641, 0
      %1648 = vmatprep.subr.bf16.mxu0 0
      %1649 = vmatpush1.bf16.msra.mxu0 0
      %1650 = vmatprep.subr.bf16.mxu0 0
      %1651 = vmatpush1.bf16.msra.mxu0 0
      %1652 = vmatprep.subr.bf16.mxu0 0
      %1653 = vmatpush1.bf16.msra.mxu0 0
      %1654 = vmatprep.subr.bf16.mxu0 0
      %1655 = vmatpush1.bf16.msra.mxu0 0
      %1656 = vmatprep.subr.bf16.mxu0 0
      %1657 = vmatpush1.bf16.msra.mxu0 0
      %1658 = vmatprep.subr.bf16.mxu0 0
      %1659 = vmatpush1.bf16.msra.mxu0 0
      %1660 = vmatprep.subr.bf16.mxu0 0
      %1661 = vmatpush1.bf16.msra.mxu0 0
      %1662 = vmatprep.subr.bf16.mxu0 0
      %1663 = vmatpush1.bf16.msra.mxu0 %v1646
      %1664 = vmatprep.subr.bf16.mxu0 0
      %1665 = vmatpush2.bf16.msra.mxu0 0
      %1666 = vmatprep.subr.bf16.mxu0 0
      %1667 = vmatpush2.bf16.msra.mxu0 0
      %1668 = vmatprep.subr.bf16.mxu0 0
      %1669 = vmatpush2.bf16.msra.mxu0 0
      %1670 = vmatprep.subr.bf16.mxu0 0
      %1671 = vmatpush2.bf16.msra.mxu0 0
      %1672 = vmatprep.subr.bf16.mxu0 0
      %1673 = vmatpush2.bf16.msra.mxu0 0
      %1674 = vmatprep.subr.bf16.mxu0 0
      %1675 = vmatpush2.bf16.msra.mxu0 0
      %1676 = vmatprep.subr.bf16.mxu0 0
      %1677 = vmatpush2.bf16.msra.mxu0 0
      %1678 = vmatprep.subr.bf16.mxu0 0
      %1679 = vmatpush2.bf16.msra.mxu0 0
      %1680 = vmatprep.mubr.bf16.mxu0 0
      %1681 = vmatmul.mubr.bf16.gmra.mxu0 %v1643
      %v1682 = vpop.f32.mrf.mxu0
      %v1683 = vadd.f32 0.0, %v1682
      %v1684 = vpop.f32.mrf.mxu0
      %v1685 = vpop.f32.mrf.mxu0
      %v1686 = vpop.f32.mrf.mxu0
      %1687 = vdwg.mxu0
      %1688 = vrot.lane.b32.xlu0 %v1468, 112
      %v1689 = vpop.permute.xlu0 %1688
      %1690 = vrot.lane.b32.xlu0 %v1469, 112
      %v1691 = vpop.permute.xlu0 %1690
      %v1693 = vsel %vm779, %v1689, 0
      %v1696 = vsel %vm779, %v1691, 0
      %1698 = vmatprep.subr.bf16.mxu0 0
      %1699 = vmatpush1.bf16.xpose.msra.mxu0 0
      %1700 = vmatprep.subr.bf16.mxu0 0
      %1701 = vmatpush1.bf16.xpose.msra.mxu0 0
      %1702 = vmatprep.subr.bf16.mxu0 0
      %1703 = vmatpush1.bf16.xpose.msra.mxu0 0
      %1704 = vmatprep.subr.bf16.mxu0 0
      %1705 = vmatpush1.bf16.xpose.msra.mxu0 0
      %1706 = vmatprep.subr.bf16.mxu0 0
      %1707 = vmatpush1.bf16.xpose.msra.mxu0 0
      %1708 = vmatprep.subr.bf16.mxu0 0
      %1709 = vmatpush1.bf16.xpose.msra.mxu0 0
      %1710 = vmatprep.subr.bf16.mxu0 0
      %1711 = vmatpush1.bf16.xpose.msra.mxu0 0
      %1712 = vmatprep.subr.bf16.mxu0 0
      %1713 = vmatpush1.bf16.xpose.msra.mxu0 %v1696
      %1714 = vmatprep.subr.bf16.mxu0 0
      %1715 = vmatpush2.bf16.xpose.msra.mxu0 0
      %1716 = vmatprep.subr.bf16.mxu0 0
      %1717 = vmatpush2.bf16.xpose.msra.mxu0 0
      %1718 = vmatprep.subr.bf16.mxu0 0
      %1719 = vmatpush2.bf16.xpose.msra.mxu0 0
      %1720 = vmatprep.subr.bf16.mxu0 0
      %1721 = vmatpush2.bf16.xpose.msra.mxu0 0
      %1722 = vmatprep.subr.bf16.mxu0 0
      %1723 = vmatpush2.bf16.xpose.msra.mxu0 0
      %1724 = vmatprep.subr.bf16.mxu0 0
      %1725 = vmatpush2.bf16.xpose.msra.mxu0 0
      %1726 = vmatprep.subr.bf16.mxu0 0
      %1727 = vmatpush2.bf16.xpose.msra.mxu0 0
      %1728 = vmatprep.subr.bf16.mxu0 0
      %1729 = vmatpush2.bf16.xpose.msra.mxu0 0
      %1730 = vmatprep.mubr.bf16.mxu0 0
      %1731 = vmatmul.mubr.bf16.gmra.mxu0 %v1693
      %v1732 = vpop.f32.mrf.mxu0
      %v1733 = vadd.f32 0.0, %v1732
      %v1734 = vpop.f32.mrf.mxu0
      %v1735 = vpop.f32.mrf.mxu0
      %v1736 = vpop.f32.mrf.mxu0
      %1737 = vdwg.mxu0
      %v1738 = vsel %vm779, %v1733, -inf
      %1739 = vmax.xlane.f32.xlu0 %v1738
      %v1740 = vpop.xlane.xlu0 %1739
      %v1741 = vsub.f32 %v1733, %v1740
      %v1742 = vmul.f32 %v1741, 1.442695
      %v1743 = vpow.pop %v1742
      %v1744 = vsel %vm779, %v1743, 0.0
      %1745 = vadd.xlane.f32.xlu0 %v1744
      %v1746 = vpop.xlane.xlu0 %1745
      %v1747 = vrcp.pop %v1746
      %v1748 = vmul.f32 %v1743, %v1747
      %v1749 = vpack.c.bf16 %v1748, %v1748
      %1750 = vrot.lane.b32.xlu0 %v1469, 80
      %v1751 = vpop.permute.xlu0 %1750
      %v1753 = vsel %vm779, %v1749, 0
      %v1756 = vsel %vm843, %v1751, 0
      %1758 = vmatprep.subr.bf16.mxu0 0
      %1759 = vmatpush1.bf16.msra.mxu0 0
      %1760 = vmatprep.subr.bf16.mxu0 0
      %1761 = vmatpush1.bf16.msra.mxu0 0
      %1762 = vmatprep.subr.bf16.mxu0 0
      %1763 = vmatpush1.bf16.msra.mxu0 0
      %1764 = vmatprep.subr.bf16.mxu0 0
      %1765 = vmatpush1.bf16.msra.mxu0 0
      %1766 = vmatprep.subr.bf16.mxu0 0
      %1767 = vmatpush1.bf16.msra.mxu0 0
      %1768 = vmatprep.subr.bf16.mxu0 0
      %1769 = vmatpush1.bf16.msra.mxu0 0
      %1770 = vmatprep.subr.bf16.mxu0 0
      %1771 = vmatpush1.bf16.msra.mxu0 0
      %1772 = vmatprep.subr.bf16.mxu0 0
      %1773 = vmatpush1.bf16.msra.mxu0 %v1756
      %1774 = vmatprep.subr.bf16.mxu0 0
      %1775 = vmatpush2.bf16.msra.mxu0 0
      %1776 = vmatprep.subr.bf16.mxu0 0
      %1777 = vmatpush2.bf16.msra.mxu0 0
      %1778 = vmatprep.subr.bf16.mxu0 0
      %1779 = vmatpush2.bf16.msra.mxu0 0
      %1780 = vmatprep.subr.bf16.mxu0 0
      %1781 = vmatpush2.bf16.msra.mxu0 0
      %1782 = vmatprep.subr.bf16.mxu0 0
      %1783 = vmatpush2.bf16.msra.mxu0 0
      %1784 = vmatprep.subr.bf16.mxu0 0
      %1785 = vmatpush2.bf16.msra.mxu0 0
      %1786 = vmatprep.subr.bf16.mxu0 0
      %1787 = vmatpush2.bf16.msra.mxu0 0
      %1788 = vmatprep.subr.bf16.mxu0 0
      %1789 = vmatpush2.bf16.msra.mxu0 0
      %1790 = vmatprep.mubr.bf16.mxu0 0
      %1791 = vmatmul.mubr.bf16.gmra.mxu0 %v1753
      %v1792 = vpop.f32.mrf.mxu0
      %v1793 = vadd.f32 0.0, %v1792
      %v1794 = vpop.f32.mrf.mxu0
      %v1795 = vpop.f32.mrf.mxu0
      %v1796 = vpop.f32.mrf.mxu0
      %1797 = vdwg.mxu0
      %1798 = vrot.lane.b32.xlu0 %v1468, 104
      %v1799 = vpop.permute.xlu0 %1798
      %1800 = vrot.lane.b32.xlu0 %v1469, 104
      %v1801 = vpop.permute.xlu0 %1800
      %v1803 = vsel %vm779, %v1799, 0
      %v1806 = vsel %vm779, %v1801, 0
      %1808 = vmatprep.subr.bf16.mxu0 0
      %1809 = vmatpush1.bf16.xpose.msra.mxu0 0
      %1810 = vmatprep.subr.bf16.mxu0 0
      %1811 = vmatpush1.bf16.xpose.msra.mxu0 0
      %1812 = vmatprep.subr.bf16.mxu0 0
      %1813 = vmatpush1.bf16.xpose.msra.mxu0 0
      %1814 = vmatprep.subr.bf16.mxu0 0
      %1815 = vmatpush1.bf16.xpose.msra.mxu0 0
      %1816 = vmatprep.subr.bf16.mxu0 0
      %1817 = vmatpush1.bf16.xpose.msra.mxu0 0
      %1818 = vmatprep.subr.bf16.mxu0 0
      %1819 = vmatpush1.bf16.xpose.msra.mxu0 0
      %1820 = vmatprep.subr.bf16.mxu0 0
      %1821 = vmatpush1.bf16.xpose.msra.mxu0 0
      %1822 = vmatprep.subr.bf16.mxu0 0
      %1823 = vmatpush1.bf16.xpose.msra.mxu0 %v1806
      %1824 = vmatprep.subr.bf16.mxu0 0
      %1825 = vmatpush2.bf16.xpose.msra.mxu0 0
      %1826 = vmatprep.subr.bf16.mxu0 0
      %1827 = vmatpush2.bf16.xpose.msra.mxu0 0
      %1828 = vmatprep.subr.bf16.mxu0 0
      %1829 = vmatpush2.bf16.xpose.msra.mxu0 0
      %1830 = vmatprep.subr.bf16.mxu0 0
      %1831 = vmatpush2.bf16.xpose.msra.mxu0 0
      %1832 = vmatprep.subr.bf16.mxu0 0
      %1833 = vmatpush2.bf16.xpose.msra.mxu0 0
      %1834 = vmatprep.subr.bf16.mxu0 0
      %1835 = vmatpush2.bf16.xpose.msra.mxu0 0
      %1836 = vmatprep.subr.bf16.mxu0 0
      %1837 = vmatpush2.bf16.xpose.msra.mxu0 0
      %1838 = vmatprep.subr.bf16.mxu0 0
      %1839 = vmatpush2.bf16.xpose.msra.mxu0 0
      %1840 = vmatprep.mubr.bf16.mxu0 0
      %1841 = vmatmul.mubr.bf16.gmra.mxu0 %v1803
      %v1842 = vpop.f32.mrf.mxu0
      %v1843 = vadd.f32 0.0, %v1842
      %v1844 = vpop.f32.mrf.mxu0
      %v1845 = vpop.f32.mrf.mxu0
      %v1846 = vpop.f32.mrf.mxu0
      %1847 = vdwg.mxu0
      %v1848 = vsel %vm779, %v1843, -inf
      %1849 = vmax.xlane.f32.xlu0 %v1848
      %v1850 = vpop.xlane.xlu0 %1849
      %v1851 = vsub.f32 %v1843, %v1850
      %v1852 = vmul.f32 %v1851, 1.442695
      %v1853 = vpow.pop %v1852
      %v1854 = vsel %vm779, %v1853, 0.0
      %1855 = vadd.xlane.f32.xlu0 %v1854
      %v1856 = vpop.xlane.xlu0 %1855
      %v1857 = vrcp.pop %v1856
      %v1858 = vmul.f32 %v1853, %v1857
      %v1859 = vpack.c.bf16 %v1858, %v1858
      %1860 = vrot.lane.b32.xlu0 %v1469, 72
      %v1861 = vpop.permute.xlu0 %1860
      %v1863 = vsel %vm779, %v1859, 0
      %v1866 = vsel %vm843, %v1861, 0
      %1868 = vmatprep.subr.bf16.mxu0 0
      %1869 = vmatpush1.bf16.msra.mxu0 0
      %1870 = vmatprep.subr.bf16.mxu0 0
      %1871 = vmatpush1.bf16.msra.mxu0 0
      %1872 = vmatprep.subr.bf16.mxu0 0
      %1873 = vmatpush1.bf16.msra.mxu0 0
      %1874 = vmatprep.subr.bf16.mxu0 0
      %1875 = vmatpush1.bf16.msra.mxu0 0
      %1876 = vmatprep.subr.bf16.mxu0 0
      %1877 = vmatpush1.bf16.msra.mxu0 0
      %1878 = vmatprep.subr.bf16.mxu0 0
      %1879 = vmatpush1.bf16.msra.mxu0 0
      %1880 = vmatprep.subr.bf16.mxu0 0
      %1881 = vmatpush1.bf16.msra.mxu0 0
      %1882 = vmatprep.subr.bf16.mxu0 0
      %1883 = vmatpush1.bf16.msra.mxu0 %v1866
      %1884 = vmatprep.subr.bf16.mxu0 0
      %1885 = vmatpush2.bf16.msra.mxu0 0
      %1886 = vmatprep.subr.bf16.mxu0 0
      %1887 = vmatpush2.bf16.msra.mxu0 0
      %1888 = vmatprep.subr.bf16.mxu0 0
      %1889 = vmatpush2.bf16.msra.mxu0 0
      %1890 = vmatprep.subr.bf16.mxu0 0
      %1891 = vmatpush2.bf16.msra.mxu0 0
      %1892 = vmatprep.subr.bf16.mxu0 0
      %1893 = vmatpush2.bf16.msra.mxu0 0
      %1894 = vmatprep.subr.bf16.mxu0 0
      %1895 = vmatpush2.bf16.msra.mxu0 0
      %1896 = vmatprep.subr.bf16.mxu0 0
      %1897 = vmatpush2.bf16.msra.mxu0 0
      %1898 = vmatprep.subr.bf16.mxu0 0
      %1899 = vmatpush2.bf16.msra.mxu0 0
      %1900 = vmatprep.mubr.bf16.mxu0 0
      %1901 = vmatmul.mubr.bf16.gmra.mxu0 %v1863
      %v1902 = vpop.f32.mrf.mxu0
      %v1903 = vadd.f32 0.0, %v1902
      %v1904 = vpop.f32.mrf.mxu0
      %v1905 = vpop.f32.mrf.mxu0
      %v1906 = vpop.f32.mrf.mxu0
      %1907 = vdwg.mxu0
      %1909 = vrot.lane.b32.xlu0 %v1683, 8
      %v1910 = vpop.permute.xlu0 %1909
      %1913 = vrot.lane.b32.xlu0 %v1793, 16
      %v1914 = vpop.permute.xlu0 %1913
      %1917 = vrot.lane.b32.xlu0 %v1903, 24
      %v1918 = vpop.permute.xlu0 %1917
      %v1920 = vsel %vm779, %v1572, %v1910
      %v1921 = vsel %vm1231, %v1920, %v1914
      %v1922 = vsel %vm1233, %v1921, %v1918
      %v1923 = vpack.c.bf16 %v1922, %v1922
      %v1924 = vld [vmem:[%s12] sm:$0xf]
      %v1925 = vld [vmem:[%s12 + $0x4] sm:$0xf]
      %v1926 = vld [vmem:[%s12 + $0x8] sm:$0xf]
      %v1927 = vld [vmem:[%s12 + $0xc] sm:$0xf]
      %v1928 = vld [vmem:[%s13] sm:$0x1]
      %v1930 = vlaneseq
      %v1931 = vshrl.u32 %v1930, 7
      %v1932 = vsub.s32 0, %v1931
      %v1933 = vrot.slane %v1928, %v1932
      %v1939 = vunpack.c.l.b16 %v1924
      %v1940 = vunpack.c.l.b16 %v1925
      %v1941 = vunpack.c.l.b16 %v1926
      %v1942 = vunpack.c.l.b16 %v1927
      %v1943 = vpack.c.b16 %v1940, %v1939
      %v1944 = vpack.c.b16 %v1942, %v1941
      %v1948 = vsel %vm723, %v1923, 0
      %1950 = vmatprep.subr.bf16.mxu0 0
      %1951 = vmatpush1.bf16.msra.mxu0 0
      %1952 = vmatprep.subr.bf16.mxu0 0
      %1953 = vmatpush1.bf16.msra.mxu0 0
      %1954 = vmatprep.subr.bf16.mxu0 0
      %1955 = vmatpush1.bf16.msra.mxu0 0
      %1956 = vmatprep.subr.bf16.mxu0 0
      %1957 = vmatpush1.bf16.msra.mxu0 0
      %1958 = vmatprep.subr.bf16.mxu0 0
      %1959 = vmatpush1.bf16.msra.mxu0 0
      %1960 = vmatprep.subr.bf16.mxu0 0
      %1961 = vmatpush1.bf16.msra.mxu0 0
      %1962 = vmatprep.subr.bf16.mxu0 0
      %1963 = vmatpush1.bf16.msra.mxu0 %v1944
      %1964 = vmatprep.subr.bf16.mxu0 0
      %1965 = vmatpush1.bf16.msra.mxu0 %v1943
      %1966 = vmatprep.subr.bf16.mxu0 0
      %1967 = vmatpush2.bf16.msra.mxu0 0
      %1968 = vmatprep.subr.bf16.mxu0 0
      %1969 = vmatpush2.bf16.msra.mxu0 0
      %1970 = vmatprep.subr.bf16.mxu0 0
      %1971 = vmatpush2.bf16.msra.mxu0 0
      %1972 = vmatprep.subr.bf16.mxu0 0
      %1973 = vmatpush2.bf16.msra.mxu0 0
      %1974 = vmatprep.subr.bf16.mxu0 0
      %1975 = vmatpush2.bf16.msra.mxu0 0
      %1976 = vmatprep.subr.bf16.mxu0 0
      %1977 = vmatpush2.bf16.msra.mxu0 0
      %1978 = vmatprep.subr.bf16.mxu0 0
      %1979 = vmatpush2.bf16.msra.mxu0 0
      %1980 = vmatprep.subr.bf16.mxu0 0
      %1981 = vmatpush2.bf16.msra.mxu0 0
      %1982 = vmatprep.mubr.bf16.mxu0 0
      %1983 = vmatmul.mubr.bf16.gmra.mxu0 %v1948
      %v1984 = vpop.f32.mrf.mxu0
      %v1985 = vadd.f32 %v1933, %v1984
      %v1986 = vpop.f32.mrf.mxu0
      %v1987 = vpop.f32.mrf.mxu0
      %v1988 = vpop.f32.mrf.mxu0
      %1989 = vdwg.mxu0
      %v1990 = vadd.f32 %v1332, %v1985
      %v1991 = vld [vmem:[%s14] sm:$0x1]
      %v1992 = vld [vmem:[%s15] sm:$0x1]
      %v1993 = vsel %vm723, %v1990, 0.0
      %1994 = vadd.xlane.f32.xlu0 %v1993
      %v1995 = vpop.xlane.xlu0 %1994
      %v1996 = vmul.f32 %v1995, %v1308
      %v1997 = vsub.f32 %v1990, %v1996
      %v1998 = vmul.f32 %v1997, %v1997
      %v1999 = vsel %vm723, %v1998, 0.0
      %2000 = vadd.xlane.f32.xlu0 %v1999
      %v2001 = vpop.xlane.xlu0 %2000
      %v2002 = vmul.f32 %v2001, %v1308
      %v2003 = vadd.f32 %v2002, 1e-05
      %v2004 = vrsqrt.pop %v2003
      %v2005 = vmul.f32 %v1997, %v2004
      %v2007 = vlaneseq
      %v2008 = vshrl.u32 %v2007, 7
      %v2009 = vsub.s32 0, %v2008
      %v2010 = vrot.slane %v1991, %v2009
      %v2012 = vmul.f32 %v2005, %v2010
      %v2014 = vlaneseq
      %v2015 = vshrl.u32 %v2014, 7
      %v2016 = vsub.s32 0, %v2015
      %v2017 = vrot.slane %v1992, %v2016
      %v2019 = vadd.f32 %v2012, %v2017
      %v2020 = vpack.c.bf16 %v2019, %v2019
      %v2021 = vld [vmem:[%s16] sm:$0xf]
      %v2022 = vld [vmem:[%s16 + $0x4] sm:$0xf]
      %v2023 = vld [vmem:[%s16 + $0x8] sm:$0xf]
      %v2024 = vld [vmem:[%s16 + $0xc] sm:$0xf]
      %v2025 = vld [vmem:[%s17] sm:$0x1]
      %v2027 = vlaneseq
      %v2028 = vshrl.u32 %v2027, 7
      %v2029 = vsub.s32 0, %v2028
      %v2030 = vrot.slane %v2025, %v2029
      %v2036 = vunpack.c.l.b16 %v2021
      %v2037 = vunpack.c.l.b16 %v2022
      %v2038 = vunpack.c.l.b16 %v2023
      %v2039 = vunpack.c.l.b16 %v2024
      %v2040 = vpack.c.b16 %v2037, %v2036
      %v2041 = vpack.c.b16 %v2039, %v2038
      %v2045 = vsel %vm723, %v2020, 0
      %2047 = vmatprep.subr.bf16.mxu0 0
      %2048 = vmatpush1.bf16.msra.mxu0 0
      %2049 = vmatprep.subr.bf16.mxu0 0
      %2050 = vmatpush1.bf16.msra.mxu0 0
      %2051 = vmatprep.subr.bf16.mxu0 0
      %2052 = vmatpush1.bf16.msra.mxu0 0
      %2053 = vmatprep.subr.bf16.mxu0 0
      %2054 = vmatpush1.bf16.msra.mxu0 0
      %2055 = vmatprep.subr.bf16.mxu0 0
      %2056 = vmatpush1.bf16.msra.mxu0 0
      %2057 = vmatprep.subr.bf16.mxu0 0
      %2058 = vmatpush1.bf16.msra.mxu0 0
      %2059 = vmatprep.subr.bf16.mxu0 0
      %2060 = vmatpush1.bf16.msra.mxu0 %v2041
      %2061 = vmatprep.subr.bf16.mxu0 0
      %2062 = vmatpush1.bf16.msra.mxu0 %v2040
      %2063 = vmatprep.subr.bf16.mxu0 0
      %2064 = vmatpush2.bf16.msra.mxu0 0
      %2065 = vmatprep.subr.bf16.mxu0 0
      %2066 = vmatpush2.bf16.msra.mxu0 0
      %2067 = vmatprep.subr.bf16.mxu0 0
      %2068 = vmatpush2.bf16.msra.mxu0 0
      %2069 = vmatprep.subr.bf16.mxu0 0
      %2070 = vmatpush2.bf16.msra.mxu0 0
      %2071 = vmatprep.subr.bf16.mxu0 0
      %2072 = vmatpush2.bf16.msra.mxu0 0
      %2073 = vmatprep.subr.bf16.mxu0 0
      %2074 = vmatpush2.bf16.msra.mxu0 0
      %2075 = vmatprep.subr.bf16.mxu0 0
      %2076 = vmatpush2.bf16.msra.mxu0 0
      %2077 = vmatprep.subr.bf16.mxu0 0
      %2078 = vmatpush2.bf16.msra.mxu0 0
      %2079 = vmatprep.mubr.bf16.mxu0 0
      %2080 = vmatmul.mubr.bf16.gmra.mxu0 %v2045
      %v2081 = vpop.f32.mrf.mxu0
      %v2082 = vadd.f32 %v2030, %v2081
      %v2083 = vpop.f32.mrf.mxu0
      %v2084 = vpop.f32.mrf.mxu0
      %v2085 = vpop.f32.mrf.mxu0
      %2086 = vdwg.mxu0
      %v2087 = vmax.f32 %v2082, 0.0
      %v2088 = vpack.c.bf16 %v2087, %v2087
      %v2089 = vld [vmem:[%s18] sm:$0xf]
      %v2090 = vld [vmem:[%s18 + $0x4] sm:$0xf]
      %v2091 = vld [vmem:[%s18 + $0x8] sm:$0xf]
      %v2092 = vld [vmem:[%s18 + $0xc] sm:$0xf]
      %v2093 = vld [vmem:[%s18 + $0x10] sm:$0xf]
      %v2094 = vld [vmem:[%s18 + $0x14] sm:$0xf]
      %v2095 = vld [vmem:[%s18 + $0x18] sm:$0xf]
      %v2096 = vld [vmem:[%s18 + $0x1c] sm:$0xf]
      %v2097 = vld [vmem:[%s19] sm:$0x1]
      %v2099 = vlaneseq
      %v2100 = vshrl.u32 %v2099, 7
      %v2101 = vsub.s32 0, %v2100
      %v2102 = vrot.slane %v2097, %v2101
      %v2112 = vunpack.c.l.b16 %v2089
      %v2113 = vunpack.c.l.b16 %v2090
      %v2114 = vunpack.c.l.b16 %v2091
      %v2115 = vunpack.c.l.b16 %v2092
      %v2116 = vunpack.c.l.b16 %v2093
      %v2117 = vunpack.c.l.b16 %v2094
      %v2118 = vunpack.c.l.b16 %v2095
      %v2119 = vunpack.c.l.b16 %v2096
      %v2120 = vpack.c.b16 %v2113, %v2112
      %v2121 = vpack.c.b16 %v2115, %v2114
      %v2122 = vpack.c.b16 %v2117, %v2116
      %v2123 = vpack.c.b16 %v2119, %v2118
      %vm2128 = vcmask 523264
      %v2130 = vsel %vm2128, %v2088, 0
      %2132 = vmatprep.subr.bf16.mxu0 0
      %2133 = vmatpush1.bf16.msra.mxu0 0
      %2134 = vmatprep.subr.bf16.mxu0 0
      %2135 = vmatpush1.bf16.msra.mxu0 0
      %2136 = vmatprep.subr.bf16.mxu0 0
      %2137 = vmatpush1.bf16.msra.mxu0 0
      %2138 = vmatprep.subr.bf16.mxu0 0
      %2139 = vmatpush1.bf16.msra.mxu0 0
      %2140 = vmatprep.subr.bf16.mxu0 0
      %2141 = vmatpush1.bf16.msra.mxu0 %v2123
      %2142 = vmatprep.subr.bf16.mxu0 0
      %2143 = vmatpush1.bf16.msra.mxu0 %v2122
      %2144 = vmatprep.subr.bf16.mxu0 0
      %2145 = vmatpush1.bf16.msra.mxu0 %v2121
      %2146 = vmatprep.subr.bf16.mxu0 0
      %2147 = vmatpush1.bf16.msra.mxu0 %v2120
      %2148 = vmatprep.subr.bf16.mxu0 0
      %2149 = vmatpush2.bf16.msra.mxu0 0
      %2150 = vmatprep.subr.bf16.mxu0 0
      %2151 = vmatpush2.bf16.msra.mxu0 0
      %2152 = vmatprep.subr.bf16.mxu0 0
      %2153 = vmatpush2.bf16.msra.mxu0 0
      %2154 = vmatprep.subr.bf16.mxu0 0
      %2155 = vmatpush2.bf16.msra.mxu0 0
      %2156 = vmatprep.subr.bf16.mxu0 0
      %2157 = vmatpush2.bf16.msra.mxu0 0
      %2158 = vmatprep.subr.bf16.mxu0 0
      %2159 = vmatpush2.bf16.msra.mxu0 0
      %2160 = vmatprep.subr.bf16.mxu0 0
      %2161 = vmatpush2.bf16.msra.mxu0 0
      %2162 = vmatprep.subr.bf16.mxu0 0
      %2163 = vmatpush2.bf16.msra.mxu0 0
      %2164 = vmatprep.mubr.bf16.mxu0 0
      %2165 = vmatmul.mubr.bf16.gmra.mxu0 %v2130
      %v2166 = vpop.f32.mrf.mxu0
      %v2167 = vadd.f32 %v2102, %v2166
      %v2168 = vpop.f32.mrf.mxu0
      %v2169 = vpop.f32.mrf.mxu0
      %v2170 = vpop.f32.mrf.mxu0
      %2171 = vdwg.mxu0
      %v2172 = vadd.f32 %v2019, %v2167
      %v2173 = vld [vmem:[%s20] sm:$0x1]
      %v2174 = vld [vmem:[%s21] sm:$0x1]
      %v2175 = vsel %vm723, %v2172, 0.0
      %2176 = vadd.xlane.f32.xlu0 %v2175
      %v2177 = vpop.xlane.xlu0 %2176
      %v2178 = vmul.f32 %v2177, %v1308
      %v2179 = vsub.f32 %v2172, %v2178
      %v2180 = vmul.f32 %v2179, %v2179
      %v2181 = vsel %vm723, %v2180, 0.0
      %2182 = vadd.xlane.f32.xlu0 %v2181
      %v2183 = vpop.xlane.xlu0 %2182
      %v2184 = vmul.f32 %v2183, %v1308
      %v2185 = vadd.f32 %v2184, 1e-05
      %v2186 = vrsqrt.pop %v2185
      %v2187 = vmul.f32 %v2179, %v2186
      %v2189 = vlaneseq
      %v2190 = vshrl.u32 %v2189, 7
      %v2191 = vsub.s32 0, %v2190
      %v2192 = vrot.slane %v2173, %v2191
      %v2194 = vmul.f32 %v2187, %v2192
      %v2196 = vlaneseq
      %v2197 = vshrl.u32 %v2196, 7
      %v2198 = vsub.s32 0, %v2197
      %v2199 = vrot.slane %v2174, %v2198
      %v2201 = vadd.f32 %v2194, %v2199
      %2202 = vst.msk [vmem:[%s695] sm:$0xff] %vm723, %v2201
      %p2203 = scmp.lt.s32.totalorder %s33, 1
      %s2204 = scalar_select %p2203, %s33, 1
      %s2205 = smul.addr %s2204, 8
      %s2206 = scalar_lea.vmem %s22, %s2205
      // Predicated region
      $region109: #{transformer_block_forward.4} parent=107 // pred_check
        %p2207 = pneg %p523
      $region110: #{transformer_block_forward.4} parent=107 // pred_check_branch
        %2209 = sbr.rel (%p2207) target = $region112
      $region111: #{transformer_block_forward.4} parent=107 // pred_region
        _
      $region112: #{transformer_block_forward.4} parent=107 // pred_fallthru
        _
    $region108: #{transformer_block_forward.4} parent=5 // pred_fallthru
      _
    %p2210 = scmp.le.s32.totalorder 2, %s28
    // Predicated region
    $region113: #{transformer_block_forward.4} parent=5 // pred_check
      %p2211 = pneg %p2210
    $region114: #{transformer_block_forward.4} parent=5 // pred_check_branch
      %2213 = sbr.rel (%p2211) target = $region116
    $region115: #{transformer_block_forward.4} parent=5 // pred_region
      %s2214 = ssub.s32 %s28, 2
      // Predicated region
      $region117: #{transformer_block_forward.4} parent=115 // pred_check
        %p2215 = pneg %p529
      $region118: #{transformer_block_forward.4} parent=115 // pred_check_branch
        %2217 = sbr.rel (%p2215) target = $region120
      $region119: #{transformer_block_forward.4} parent=115 // pred_region
        %p2218 = scmp.lt.s32.totalorder %s34, 1
        %s2219 = scalar_select %p2218, %s34, 1
        %s2220 = smul.addr %s2219, 8
        %s2221 = scalar_lea.vmem %s22, %s2220
      $region120: #{transformer_block_forward.4} parent=115 // pred_fallthru
        _
    $region116: #{transformer_block_forward.4} parent=5 // pred_fallthru
      _
  $region6: #{transformer_block_forward.4} parent=0 // loop_footer
    %s32 = sadd.s32 1, %s28
  $region7: #{transformer_block_forward.4} parent=0 // loop_footer_branch
    %27 = sbr.rel target = $region3
  $region8: #{transformer_block_forward.4} parent=0 // loop_exit
    _

</llo_original>
